<compile_context>
chip_gen: v7x
topology: tpu7x:2x2x1
jax: 0.10.0
libtpu: 0.0.40
codegen_flags: <defaults>
</compile_context>

<pallas_src>
import math
from functools import partial

import jax
import jax.numpy as jnp
from jax.experimental import pallas as pl
from jax.experimental.pallas import tpu as pltpu


# ----------------------------- hardware-aware knobs -------------------------


def _vmem_capacity_bytes():
    try:
        return int(pltpu.get_tpu_info().vmem_capacity_bytes)
    except Exception:
        return 64 * 1024 * 1024          # conservative (v7x per-TC VMEM)


_VMEM_CAP = _vmem_capacity_bytes()
_VMEM_LIMIT = min(int(_VMEM_CAP * 3 // 4), 100 * 1024 * 1024)


def _compiler_params():
    return pltpu.CompilerParams(dimension_semantics=("parallel",),
                                vmem_limit_bytes=_VMEM_LIMIT)


def _pick_tile(m, bytes_per_item, fixed_bytes,
               cands=(1024, 512, 256, 128, 64, 32, 16, 8)):
    """Largest tile from `cands` dividing m whose double-buffered footprint
    fits the VMEM budget; prefer >= 2 grid steps (pipelining / v7x 2 TCs)."""
    budget = _VMEM_LIMIT // 2
    divs = [c for c in cands if m % c == 0]
    if not divs:
        return m                                   # full-extent block fallback
    fits = [c for c in divs if 2 * c * bytes_per_item + 2 * fixed_bytes <= budget]
    pool = fits if fits else divs[-1:]             # nothing fits -> smallest tile
    for c in pool:
        if m // c >= 2:
            return c
    return pool[0]


# ----------------------------- math helpers ---------------------------------


def _erf_approx(x):
    # Abramowitz & Stegun 7.1.26 (max abs err ~1.5e-7) -> exact-GELU at f32.
    a1, a2, a3, a4, a5 = 0.254829592, -0.284496736, 1.421413741, -1.453152027, 1.061405429
    p = 0.3275911
    s = jnp.sign(x)
    ax = jnp.abs(x)
    t = 1.0 / (1.0 + p * ax)
    poly = ((((a5 * t + a4) * t + a3) * t + a2) * t + a1) * t
    return s * (1.0 - poly * jnp.exp(-ax * ax))


def _gelu_exact(x):
    return 0.5 * x * (1.0 + _erf_approx(x * (1.0 / math.sqrt(2.0))))


def _recip(x):
    # EUP approximate reciprocal + one Newton step (near-exact, frees VALU).
    if hasattr(pl, "reciprocal"):
        r = pl.reciprocal(x, approx=True)
        return r * (2.0 - x * r)
    return 1.0 / x


# ----------------------------- Kernel A: fused window attention -------------


def _win_attn_kernel(*refs, num_heads, scale, eps, has_mask):
    if has_mask:
        x_ref, m_ref, g_ref, b_ref, wqkv_ref, wproj_ref, bproj_ref, o_ref = refs
    else:
        x_ref, g_ref, b_ref, wqkv_ref, wproj_ref, bproj_ref, o_ref = refs
        m_ref = None

    x = x_ref[...].astype(jnp.float32)                    # (Wb, L, C)
    wb, L, C = x.shape
    hd = C // num_heads

    # LayerNorm1 (per token)
    mean = jnp.mean(x, axis=-1, keepdims=True)
    var = jnp.mean((x - mean) ** 2, axis=-1, keepdims=True)
    xn = (x - mean) * jax.lax.rsqrt(var + eps)
    xn = xn * g_ref[...] + b_ref[...]
    if m_ref is not None:
        xn = xn * m_ref[...]                              # zero padded tokens post-LN

    # QKV projection (no bias) on Wb*L rows -> good MXU occupancy.
    xn2 = xn.reshape(wb * L, C)
    qkv = jnp.dot(xn2, wqkv_ref[...], preferred_element_type=jnp.float32)   # (Wb*L, 3C)

    heads = []
    for h in range(num_heads):
        q = qkv[:, h * hd:(h + 1) * hd].reshape(wb, L, hd)
        k = qkv[:, C + h * hd:C + (h + 1) * hd].reshape(wb, L, hd)
        v = qkv[:, 2 * C + h * hd:2 * C + (h + 1) * hd].reshape(wb, L, hd)
        s = jnp.einsum("wld,wmd->wlm", q, k,
                       preferred_element_type=jnp.float32) * scale
        s = s - jnp.max(s, axis=-1, keepdims=True)
        p = jnp.exp(s)
        p = p * _recip(jnp.sum(p, axis=-1, keepdims=True))
        heads.append(jnp.einsum("wlm,wmd->wld", p, v,
                                preferred_element_type=jnp.float32))

    o = jnp.concatenate(heads, axis=-1).reshape(wb * L, C)
    y = jnp.dot(o, wproj_ref[...], preferred_element_type=jnp.float32) + bproj_ref[...]
    o_ref[...] = y.reshape(wb, L, C).astype(o_ref.dtype)


def window_attention_block(xw, gamma, beta, wqkv, wproj, bproj,
                           *, num_heads, scale, mask=None):
    G, L, C = xw.shape
    # rough per-window f32 footprint: x + xn + qkv + scores + head outs
    per_win = 4 * L * (8 * C + 2 * L)
    fixed = 4 * (4 * C * C + 4 * C)
    wb = _pick_tile(G, per_win, fixed, cands=(16, 8, 4, 2, 1))

    win_spec = pl.BlockSpec((wb, L, C), lambda i: (i, 0, 0))
    in_specs = [win_spec]
    if mask is not None:
        in_specs.append(pl.BlockSpec((wb, L, 1), lambda i: (i, 0, 0)))
    in_specs += [
        pl.BlockSpec((1, C), lambda i: (0, 0)),            # gamma
        pl.BlockSpec((1, C), lambda i: (0, 0)),            # beta
        pl.BlockSpec((C, 3 * C), lambda i: (0, 0)),         # Wqkv (resident)
        pl.BlockSpec((C, C), lambda i: (0, 0)),             # Wproj (resident)
        pl.BlockSpec((1, C), lambda i: (0, 0)),             # bproj
    ]
    args = (xw,) + ((mask,) if mask is not None else ()) + (
        gamma.reshape(1, C), beta.reshape(1, C), wqkv, wproj, bproj.reshape(1, C))

    return pl.pallas_call(
        partial(_win_attn_kernel, num_heads=num_heads, scale=scale, eps=1e-5,
                has_mask=mask is not None),
        out_shape=jax.ShapeDtypeStruct((G, L, C), xw.dtype),
        grid=(G // wb,),
        in_specs=in_specs,
        out_specs=win_spec,
        compiler_params=_compiler_params(),
    )(*args)


# ----------------------------- Kernel B: fused residual + MLP ---------------


def _mlp_block_kernel(x_ref, a_ref, g_ref, b_ref, w1_ref, b1_ref, w2_ref, b2_ref,
                      o_ref, *, eps):
    x1 = x_ref[...].astype(jnp.float32) + a_ref[...].astype(jnp.float32)   # residual 1
    mean = jnp.mean(x1, axis=-1, keepdims=True)
    var = jnp.mean((x1 - mean) ** 2, axis=-1, keepdims=True)
    xn = (x1 - mean) * jax.lax.rsqrt(var + eps)
    xn = xn * g_ref[...] + b_ref[...]
    h = jnp.dot(xn, w1_ref[...], preferred_element_type=jnp.float32) + b1_ref[...]
    h = _gelu_exact(h)
    y = jnp.dot(h, w2_ref[...], preferred_element_type=jnp.float32) + b2_ref[...]
    o_ref[...] = (x1 + y).astype(o_ref.dtype)                              # residual 2


def residual_mlp_block(x, attn, gamma, beta, w1, b1, w2, b2):
    M, C = x.shape
    Hid = w1.shape[1]
    per_row = 4 * (6 * C + 2 * Hid)
    fixed = 4 * (2 * C * Hid + 3 * C + Hid)
    tm = _pick_tile(M, per_row, fixed)

    row = lambda i: (i, 0)
    zero = lambda i: (0, 0)
    return pl.pallas_call(
        partial(_mlp_block_kernel, eps=1e-5),
        out_shape=jax.ShapeDtypeStruct((M, C), x.dtype),
        grid=(M // tm,),
        in_specs=[
            pl.BlockSpec((tm, C), row),       # x
            pl.BlockSpec((tm, C), row),       # attention output (token-major)
            pl.BlockSpec((1, C), zero),       # gamma3
            pl.BlockSpec((1, C), zero),       # beta3
            pl.BlockSpec((C, Hid), zero),     # fc1 W (resident)
            pl.BlockSpec((1, Hid), zero),     # fc1 b
            pl.BlockSpec((Hid, C), zero),     # fc2 W (resident)
            pl.BlockSpec((1, C), zero),       # fc2 b
        ],
        out_specs=pl.BlockSpec((tm, C), row),
        compiler_params=_compiler_params(),
    )(x, attn, gamma.reshape(1, C), beta.reshape(1, C),
      w1, b1.reshape(1, Hid), w2, b2.reshape(1, C))


# ----------------------------- STWT forward ---------------------------------


def init_params(key, dim, num_heads, mlp_ratio=4.0):
    hidden = int(dim * mlp_ratio)
    ks = jax.random.split(key, 12)
    w = lambda k, shape, s=0.05: s * jax.random.normal(k, shape, jnp.float32)
    return {
        "norm1_g": 1.0 + w(ks[0], (dim,)),
        "norm1_b": w(ks[1], (dim,)),
        "qkv_w": w(ks[2], (dim, 3 * dim)),       # qkv_bias=False in STWT
        "proj_w": w(ks[3], (dim, dim)),
        "proj_b": w(ks[4], (dim,)),
        "norm3_g": 1.0 + w(ks[5], (dim,)),
        "norm3_b": w(ks[6], (dim,)),
        "fc1_w": w(ks[7], (dim, hidden)),
        "fc1_b": w(ks[8], (hidden,)),
        "fc2_w": w(ks[9], (hidden, dim)),
        "fc2_b": w(ks[10], (dim,)),
    }


def stwt_forward(params, x, t, H, W, *, num_heads, ws):
    BT, N, C = x.shape
    B = BT // t
    hd = C // num_heads
    scale = hd ** (-0.5)
    M = BT * N
    x_flat = x.reshape(M, C)

    # ---- window partition (free reshapes + one transpose) ----
    a = x.reshape(B, t, H, W, C)
    pad_b = (ws - H % ws) % ws
    pad_r = (ws - W % ws) % ws
    if pad_b or pad_r:
        a = jnp.pad(a, ((0, 0), (0, 0), (0, pad_b), (0, pad_r), (0, 0)))
    Hp, Wp = H + pad_b, W + pad_r
    hg, wg = Hp // ws, Wp // ws
    nw = hg * wg
    L = t * ws * ws
    aw = a.reshape(B, t, hg, ws, wg, ws, C).transpose(0, 2, 4, 1, 3, 5, 6)
    xw = aw.reshape(B * nw, L, C)

    mask = None
    if pad_b or pad_r:
        valid = ((jnp.arange(Hp) < H)[:, None]
                 & (jnp.arange(Wp) < W)[None, :]).astype(x.dtype)
        m = jnp.broadcast_to(valid[None, None, :, :, None], (B, t, Hp, Wp, 1))
        mask = m.reshape(B, t, hg, ws, wg, ws, 1).transpose(0, 2, 4, 1, 3, 5, 6)
        mask = mask.reshape(B * nw, L, 1)

    # ---- fused LN1 + QKV + multi-head attention + proj (Kernel A) ----
    attn_w = window_attention_block(
        xw, params["norm1_g"], params["norm1_b"],
        params["qkv_w"], params["proj_w"], params["proj_b"],
        num_heads=num_heads, scale=scale, mask=mask)

    # ---- reverse window partition (one transpose) + crop ----
    o = attn_w.reshape(B, hg, wg, t, ws, ws, C).transpose(0, 3, 1, 4, 2, 5, 6)
    o = o.reshape(B, t, Hp, Wp, C)[:, :, :H, :W, :].reshape(M, C)

    # ---- fused residual + LN3 + MLP + residual (Kernel B) ----
    out = residual_mlp_block(
        x_flat, o,
        params["norm3_g"], params["norm3_b"],
        params["fc1_w"], params["fc1_b"], params["fc2_w"], params["fc2_b"])
    return out.reshape(BT, N, C)


# ----------------------------- pure-JAX reference ---------------------------


def _ln_ref(x, g, b):
    m = x.mean(-1, keepdims=True)
    v = ((x - m) ** 2).mean(-1, keepdims=True)
    return (x - m) / jnp.sqrt(v + 1e-5) * g + b


def _attn_ref(x, t, H, W, p, num_heads, ws):
    BT, N, C = x.shape
    B = BT // t
    hd = C // num_heads
    scale = hd ** (-0.5)
    a = x.reshape(B, t, H, W, C)
    pad_b = (ws - H % ws) % ws
    pad_r = (ws - W % ws) % ws
    if pad_b or pad_r:
        a = jnp.pad(a, ((0, 0), (0, 0), (0, pad_b), (0, pad_r), (0, 0)))
    Hp, Wp = H + pad_b, W + pad_r
    hg, wg = Hp // ws, Wp // ws
    a = a.reshape(B, t, hg, ws, wg, ws, C).transpose(0, 2, 4, 1, 3, 5, 6).reshape(B, hg * wg, -1, C)
    qkv = a @ p["qkv_w"]
    qkv = qkv.reshape(B, hg * wg, -1, 3, num_heads, hd).transpose(3, 0, 1, 4, 2, 5)
    q, k, v = qkv[0], qkv[1], qkv[2]
    attn = (q @ jnp.swapaxes(k, -2, -1)) * scale
    attn = jax.nn.softmax(attn, axis=-1)
    o = jnp.swapaxes(attn @ v, 2, 3).reshape(B, hg * wg, -1, C)
    o = o.reshape(B, hg, wg, t, ws, ws, C).transpose(0, 3, 1, 4, 2, 5, 6).reshape(B, t, Hp, Wp, C)
    o = o[:, :, :H, :W, :].reshape(B, -1, C)
    o = o @ p["proj_w"] + p["proj_b"]
    return o.reshape(-1, N, C)


def _mlp_ref(x, p):
    h = jax.nn.gelu(x @ p["fc1_w"] + p["fc1_b"], approximate=False)
    return h @ p["fc2_w"] + p["fc2_b"]


def stwt_ref(p, x, t, H, W, *, num_heads, ws):
    x = x + _attn_ref(_ln_ref(x, p["norm1_g"], p["norm1_b"]), t, H, W, p, num_heads, ws)
    x = x + _mlp_ref(_ln_ref(x, p["norm3_g"], p["norm3_b"]), p)
    return x


# ----------------------------- main -----------------------------------------


def _run_case(key, dim, num_heads, ws, B, t, H, W):
    BT, N = B * t, H * W
    kx, kp = jax.random.split(key)
    x = jax.random.normal(kx, (BT, N, dim), jnp.float32)
    params = init_params(kp, dim, num_heads)

    out = stwt_forward(params, x, t, H, W, num_heads=num_heads, ws=ws)
    out = jax.block_until_ready(out)
    assert out.shape == (BT, N, dim)

    ref = stwt_ref(params, x, t, H, W, num_heads=num_heads, ws=ws)
    err = float(jnp.max(jnp.abs(out - ref)))
    if not err < 3e-2:
        raise AssertionError(f"mismatch vs reference: max abs err {err}")


if __name__ == "__main__":
    key = jax.random.PRNGKey(0)
    k1, k2 = jax.random.split(key)

    # main case: no window padding (dim=32, heads=4, ws=4, B=2, t=2, H=W=8)
    _run_case(k1, dim=32, num_heads=4, ws=4, B=2, t=2, H=8, W=8)

    # padded case: H=W=6 with ws=4 exercises the masked-window path
    _run_case(k2, dim=32, num_heads=4, ws=4, B=1, t=2, H=6, W=6)

    print("KERNEL_OK")
</pallas_src>

<mosaic_0001>
module attributes {stable_mosaic.version = 11 : i64} {
  func.func @_win_attn_kernel(%arg0: i32, %arg1: memref<4x32x32xf32, #tpu.memory_space<vmem>>, %arg2: memref<1x32xf32, #tpu.memory_space<vmem>>, %arg3: memref<1x32xf32, #tpu.memory_space<vmem>>, %arg4: memref<32x96xf32, #tpu.memory_space<vmem>>, %arg5: memref<32x32xf32, #tpu.memory_space<vmem>>, %arg6: memref<1x32xf32, #tpu.memory_space<vmem>>, %arg7: memref<4x32x32xf32, #tpu.memory_space<vmem>>) attributes {dimension_semantics = [#tpu.dimension_semantics<parallel>], iteration_bounds = array<i64: 2>, scalar_prefetch = 0 : i64, scratch_operands = 0 : i64, tpu.core_type = #tpu.core_type<tc>, window_params = [{transform_indices = @transform_0, window_bounds = array<i64: 4, 32, 32>}, {pipeline_mode = #tpu.pipeline_mode<synchronous>, transform_indices = @transform_1, window_bounds = array<i64: 1, 32>}, {pipeline_mode = #tpu.pipeline_mode<synchronous>, transform_indices = @transform_2, window_bounds = array<i64: 1, 32>}, {pipeline_mode = #tpu.pipeline_mode<synchronous>, transform_indices = @transform_3, window_bounds = array<i64: 32, 96>}, {pipeline_mode = #tpu.pipeline_mode<synchronous>, transform_indices = @transform_4, window_bounds = array<i64: 32, 32>}, {pipeline_mode = #tpu.pipeline_mode<synchronous>, transform_indices = @transform_5, window_bounds = array<i64: 1, 32>}, {transform_indices = @transform_6, window_bounds = array<i64: 4, 32, 32>}]} {
    %c0 = arith.constant 0 : index
    %c0_0 = arith.constant 0 : index
    %c0_1 = arith.constant 0 : index
    %0 = vector.load %arg1[%c0, %c0_0, %c0_1] : memref<4x32x32xf32, #tpu.memory_space<vmem>>, vector<4x32x32xf32>
    %cst = arith.constant dense<0.000000e+00> : vector<4x32xf32>
    %1 = vector.multi_reduction <add>, %0, %cst [2] : vector<4x32x32xf32> to vector<4x32xf32>
    %2 = vector.shape_cast %1 : vector<4x32xf32> to vector<4x32x1xf32>
    %cst_2 = arith.constant 3.200000e+01 : f32
    %3 = vector.broadcast %cst_2 : f32 to vector<4x32x1xf32>
    %4 = arith.divf %2, %3 : vector<4x32x1xf32>
    %5 = vector.broadcast %4 : vector<4x32x1xf32> to vector<4x32x32xf32>
    %6 = arith.subf %0, %5 : vector<4x32x32xf32>
    %7 = arith.mulf %6, %6 : vector<4x32x32xf32>
    %cst_3 = arith.constant dense<0.000000e+00> : vector<4x32xf32>
    %8 = vector.multi_reduction <add>, %7, %cst_3 [2] : vector<4x32x32xf32> to vector<4x32xf32>
    %9 = vector.shape_cast %8 : vector<4x32xf32> to vector<4x32x1xf32>
    %cst_4 = arith.constant 3.200000e+01 : f32
    %10 = vector.broadcast %cst_4 : f32 to vector<4x32x1xf32>
    %11 = arith.divf %9, %10 : vector<4x32x1xf32>
    %12 = vector.broadcast %4 : vector<4x32x1xf32> to vector<4x32x32xf32>
    %13 = arith.subf %0, %12 : vector<4x32x32xf32>
    %cst_5 = arith.constant 9.99999974E-6 : f32
    %14 = vector.broadcast %cst_5 : f32 to vector<4x32x1xf32>
    %15 = arith.addf %11, %14 : vector<4x32x1xf32>
    %16 = math.rsqrt %15 : vector<4x32x1xf32>
    %17 = vector.broadcast %16 : vector<4x32x1xf32> to vector<4x32x32xf32>
    %18 = arith.mulf %13, %17 : vector<4x32x32xf32>
    %c0_6 = arith.constant 0 : index
    %c0_7 = arith.constant 0 : index
    %19 = vector.load %arg2[%c0_6, %c0_7] : memref<1x32xf32, #tpu.memory_space<vmem>>, vector<1x32xf32>
    %20 = vector.shape_cast %19 : vector<1x32xf32> to vector<1x1x32xf32>
    %21 = vector.broadcast %20 : vector<1x1x32xf32> to vector<4x32x32xf32>
    %22 = arith.mulf %18, %21 : vector<4x32x32xf32>
    %c0_8 = arith.constant 0 : index
    %c0_9 = arith.constant 0 : index
    %23 = vector.load %arg3[%c0_8, %c0_9] : memref<1x32xf32, #tpu.memory_space<vmem>>, vector<1x32xf32>
    %24 = vector.shape_cast %23 : vector<1x32xf32> to vector<1x1x32xf32>
    %25 = vector.broadcast %24 : vector<1x1x32xf32> to vector<4x32x32xf32>
    %26 = arith.addf %22, %25 : vector<4x32x32xf32>
    %27 = vector.shape_cast %26 : vector<4x32x32xf32> to vector<128x32xf32>
    %c0_10 = arith.constant 0 : index
    %c0_11 = arith.constant 0 : index
    %28 = vector.load %arg4[%c0_10, %c0_11] : memref<32x96xf32, #tpu.memory_space<vmem>>, vector<32x96xf32>
    %cst_12 = arith.constant dense<0.000000e+00> : vector<128x96xf32>
    %29 = tpu.matmul %27, %28, %cst_12 {dimension_numbers = #tpu.dot_dimension_numbers<[1], [0], [0], [1], [0, 0, 1, 1], [], []>} : vector<128x32xf32>, vector<32x96xf32>, vector<128x96xf32> -> vector<128x96xf32>
    %30 = vector.extract_strided_slice %29 {offsets = [0, 0], sizes = [128, 8], strides = [1, 1]} : vector<128x96xf32> to vector<128x8xf32>
    %31 = vector.shape_cast %30 : vector<128x8xf32> to vector<4x32x8xf32>
    %32 = vector.extract_strided_slice %29 {offsets = [0, 32], sizes = [128, 8], strides = [1, 1]} : vector<128x96xf32> to vector<128x8xf32>
    %33 = vector.shape_cast %32 : vector<128x8xf32> to vector<4x32x8xf32>
    %34 = vector.extract_strided_slice %29 {offsets = [0, 64], sizes = [128, 8], strides = [1, 1]} : vector<128x96xf32> to vector<128x8xf32>
    %35 = vector.shape_cast %34 : vector<128x8xf32> to vector<4x32x8xf32>
    "tpu.trace_start"() <{level = 10 : i32, message = "wld,wmd->wlm"}> : () -> ()
    %cst_13 = arith.constant dense<0.000000e+00> : vector<4x32x32xf32>
    %36 = tpu.matmul %31, %33, %cst_13 {dimension_numbers = #tpu.dot_dimension_numbers<[2], [2], [1], [1], [0, 0, 0, 1, 1, 1], [0], [0]>} : vector<4x32x8xf32>, vector<4x32x8xf32>, vector<4x32x32xf32> -> vector<4x32x32xf32>
    "tpu.trace_stop"() : () -> ()
    %cst_14 = arith.constant 0.353553385 : f32
    %37 = vector.broadcast %cst_14 : f32 to vector<4x32x32xf32>
    %38 = arith.mulf %36, %37 : vector<4x32x32xf32>
    %cst_15 = arith.constant dense<0xFF800000> : vector<4x32xf32>
    %39 = vector.multi_reduction <maximumf>, %38, %cst_15 [2] : vector<4x32x32xf32> to vector<4x32xf32>
    %40 = vector.shape_cast %39 : vector<4x32xf32> to vector<4x32x1xf32>
    %41 = vector.broadcast %40 : vector<4x32x1xf32> to vector<4x32x32xf32>
    %42 = arith.subf %38, %41 : vector<4x32x32xf32>
    %43 = math.exp %42 : vector<4x32x32xf32>
    %cst_16 = arith.constant dense<0.000000e+00> : vector<4x32xf32>
    %44 = vector.multi_reduction <add>, %43, %cst_16 [2] : vector<4x32x32xf32> to vector<4x32xf32>
    %45 = vector.shape_cast %44 : vector<4x32xf32> to vector<4x32x1xf32>
    %46 = tpu.reciprocal %45 {approx = true} : vector<4x32x1xf32> -> vector<4x32x1xf32>
    %47 = arith.mulf %45, %46 : vector<4x32x1xf32>
    %cst_17 = arith.constant 2.000000e+00 : f32
    %48 = vector.broadcast %cst_17 : f32 to vector<4x32x1xf32>
    %49 = arith.subf %48, %47 : vector<4x32x1xf32>
    %50 = arith.mulf %46, %49 : vector<4x32x1xf32>
    %51 = vector.broadcast %50 : vector<4x32x1xf32> to vector<4x32x32xf32>
    %52 = arith.mulf %43, %51 : vector<4x32x32xf32>
    "tpu.trace_start"() <{level = 10 : i32, message = "wlm,wmd->wld"}> : () -> ()
    %cst_18 = arith.constant dense<0.000000e+00> : vector<4x32x8xf32>
    %53 = tpu.matmul %52, %35, %cst_18 {dimension_numbers = #tpu.dot_dimension_numbers<[2], [1], [1], [2], [0, 0, 0, 1, 1, 2], [0], [0]>} : vector<4x32x32xf32>, vector<4x32x8xf32>, vector<4x32x8xf32> -> vector<4x32x8xf32>
    "tpu.trace_stop"() : () -> ()
    %54 = vector.extract_strided_slice %29 {offsets = [0, 8], sizes = [128, 8], strides = [1, 1]} : vector<128x96xf32> to vector<128x8xf32>
    %55 = vector.shape_cast %54 : vector<128x8xf32> to vector<4x32x8xf32>
    %56 = vector.extract_strided_slice %29 {offsets = [0, 40], sizes = [128, 8], strides = [1, 1]} : vector<128x96xf32> to vector<128x8xf32>
    %57 = vector.shape_cast %56 : vector<128x8xf32> to vector<4x32x8xf32>
    %58 = vector.extract_strided_slice %29 {offsets = [0, 72], sizes = [128, 8], strides = [1, 1]} : vector<128x96xf32> to vector<128x8xf32>
    %59 = vector.shape_cast %58 : vector<128x8xf32> to vector<4x32x8xf32>
    "tpu.trace_start"() <{level = 10 : i32, message = "wld,wmd->wlm"}> : () -> ()
    %cst_19 = arith.constant dense<0.000000e+00> : vector<4x32x32xf32>
    %60 = tpu.matmul %55, %57, %cst_19 {dimension_numbers = #tpu.dot_dimension_numbers<[2], [2], [1], [1], [0, 0, 0, 1, 1, 1], [0], [0]>} : vector<4x32x8xf32>, vector<4x32x8xf32>, vector<4x32x32xf32> -> vector<4x32x32xf32>
    "tpu.trace_stop"() : () -> ()
    %cst_20 = arith.constant 0.353553385 : f32
    %61 = vector.broadcast %cst_20 : f32 to vector<4x32x32xf32>
    %62 = arith.mulf %60, %61 : vector<4x32x32xf32>
    %cst_21 = arith.constant dense<0xFF800000> : vector<4x32xf32>
    %63 = vector.multi_reduction <maximumf>, %62, %cst_21 [2] : vector<4x32x32xf32> to vector<4x32xf32>
    %64 = vector.shape_cast %63 : vector<4x32xf32> to vector<4x32x1xf32>
    %65 = vector.broadcast %64 : vector<4x32x1xf32> to vector<4x32x32xf32>
    %66 = arith.subf %62, %65 : vector<4x32x32xf32>
    %67 = math.exp %66 : vector<4x32x32xf32>
    %cst_22 = arith.constant dense<0.000000e+00> : vector<4x32xf32>
    %68 = vector.multi_reduction <add>, %67, %cst_22 [2] : vector<4x32x32xf32> to vector<4x32xf32>
    %69 = vector.shape_cast %68 : vector<4x32xf32> to vector<4x32x1xf32>
    %70 = tpu.reciprocal %69 {approx = true} : vector<4x32x1xf32> -> vector<4x32x1xf32>
    %71 = arith.mulf %69, %70 : vector<4x32x1xf32>
    %cst_23 = arith.constant 2.000000e+00 : f32
    %72 = vector.broadcast %cst_23 : f32 to vector<4x32x1xf32>
    %73 = arith.subf %72, %71 : vector<4x32x1xf32>
    %74 = arith.mulf %70, %73 : vector<4x32x1xf32>
    %75 = vector.broadcast %74 : vector<4x32x1xf32> to vector<4x32x32xf32>
    %76 = arith.mulf %67, %75 : vector<4x32x32xf32>
    "tpu.trace_start"() <{level = 10 : i32, message = "wlm,wmd->wld"}> : () -> ()
    %cst_24 = arith.constant dense<0.000000e+00> : vector<4x32x8xf32>
    %77 = tpu.matmul %76, %59, %cst_24 {dimension_numbers = #tpu.dot_dimension_numbers<[2], [1], [1], [2], [0, 0, 0, 1, 1, 2], [0], [0]>} : vector<4x32x32xf32>, vector<4x32x8xf32>, vector<4x32x8xf32> -> vector<4x32x8xf32>
    "tpu.trace_stop"() : () -> ()
    %78 = vector.extract_strided_slice %29 {offsets = [0, 16], sizes = [128, 8], strides = [1, 1]} : vector<128x96xf32> to vector<128x8xf32>
    %79 = vector.shape_cast %78 : vector<128x8xf32> to vector<4x32x8xf32>
    %80 = vector.extract_strided_slice %29 {offsets = [0, 48], sizes = [128, 8], strides = [1, 1]} : vector<128x96xf32> to vector<128x8xf32>
    %81 = vector.shape_cast %80 : vector<128x8xf32> to vector<4x32x8xf32>
    %82 = vector.extract_strided_slice %29 {offsets = [0, 80], sizes = [128, 8], strides = [1, 1]} : vector<128x96xf32> to vector<128x8xf32>
    %83 = vector.shape_cast %82 : vector<128x8xf32> to vector<4x32x8xf32>
    "tpu.trace_start"() <{level = 10 : i32, message = "wld,wmd->wlm"}> : () -> ()
    %cst_25 = arith.constant dense<0.000000e+00> : vector<4x32x32xf32>
    %84 = tpu.matmul %79, %81, %cst_25 {dimension_numbers = #tpu.dot_dimension_numbers<[2], [2], [1], [1], [0, 0, 0, 1, 1, 1], [0], [0]>} : vector<4x32x8xf32>, vector<4x32x8xf32>, vector<4x32x32xf32> -> vector<4x32x32xf32>
    "tpu.trace_stop"() : () -> ()
    %cst_26 = arith.constant 0.353553385 : f32
    %85 = vector.broadcast %cst_26 : f32 to vector<4x32x32xf32>
    %86 = arith.mulf %84, %85 : vector<4x32x32xf32>
    %cst_27 = arith.constant dense<0xFF800000> : vector<4x32xf32>
    %87 = vector.multi_reduction <maximumf>, %86, %cst_27 [2] : vector<4x32x32xf32> to vector<4x32xf32>
    %88 = vector.shape_cast %87 : vector<4x32xf32> to vector<4x32x1xf32>
    %89 = vector.broadcast %88 : vector<4x32x1xf32> to vector<4x32x32xf32>
    %90 = arith.subf %86, %89 : vector<4x32x32xf32>
    %91 = math.exp %90 : vector<4x32x32xf32>
    %cst_28 = arith.constant dense<0.000000e+00> : vector<4x32xf32>
    %92 = vector.multi_reduction <add>, %91, %cst_28 [2] : vector<4x32x32xf32> to vector<4x32xf32>
    %93 = vector.shape_cast %92 : vector<4x32xf32> to vector<4x32x1xf32>
    %94 = tpu.reciprocal %93 {approx = true} : vector<4x32x1xf32> -> vector<4x32x1xf32>
    %95 = arith.mulf %93, %94 : vector<4x32x1xf32>
    %cst_29 = arith.constant 2.000000e+00 : f32
    %96 = vector.broadcast %cst_29 : f32 to vector<4x32x1xf32>
    %97 = arith.subf %96, %95 : vector<4x32x1xf32>
    %98 = arith.mulf %94, %97 : vector<4x32x1xf32>
    %99 = vector.broadcast %98 : vector<4x32x1xf32> to vector<4x32x32xf32>
    %100 = arith.mulf %91, %99 : vector<4x32x32xf32>
    "tpu.trace_start"() <{level = 10 : i32, message = "wlm,wmd->wld"}> : () -> ()
    %cst_30 = arith.constant dense<0.000000e+00> : vector<4x32x8xf32>
    %101 = tpu.matmul %100, %83, %cst_30 {dimension_numbers = #tpu.dot_dimension_numbers<[2], [1], [1], [2], [0, 0, 0, 1, 1, 2], [0], [0]>} : vector<4x32x32xf32>, vector<4x32x8xf32>, vector<4x32x8xf32> -> vector<4x32x8xf32>
    "tpu.trace_stop"() : () -> ()
    %102 = vector.extract_strided_slice %29 {offsets = [0, 24], sizes = [128, 8], strides = [1, 1]} : vector<128x96xf32> to vector<128x8xf32>
    %103 = vector.shape_cast %102 : vector<128x8xf32> to vector<4x32x8xf32>
    %104 = vector.extract_strided_slice %29 {offsets = [0, 56], sizes = [128, 8], strides = [1, 1]} : vector<128x96xf32> to vector<128x8xf32>
    %105 = vector.shape_cast %104 : vector<128x8xf32> to vector<4x32x8xf32>
    %106 = vector.extract_strided_slice %29 {offsets = [0, 88], sizes = [128, 8], strides = [1, 1]} : vector<128x96xf32> to vector<128x8xf32>
    %107 = vector.shape_cast %106 : vector<128x8xf32> to vector<4x32x8xf32>
    "tpu.trace_start"() <{level = 10 : i32, message = "wld,wmd->wlm"}> : () -> ()
    %cst_31 = arith.constant dense<0.000000e+00> : vector<4x32x32xf32>
    %108 = tpu.matmul %103, %105, %cst_31 {dimension_numbers = #tpu.dot_dimension_numbers<[2], [2], [1], [1], [0, 0, 0, 1, 1, 1], [0], [0]>} : vector<4x32x8xf32>, vector<4x32x8xf32>, vector<4x32x32xf32> -> vector<4x32x32xf32>
    "tpu.trace_stop"() : () -> ()
    %cst_32 = arith.constant 0.353553385 : f32
    %109 = vector.broadcast %cst_32 : f32 to vector<4x32x32xf32>
    %110 = arith.mulf %108, %109 : vector<4x32x32xf32>
    %cst_33 = arith.constant dense<0xFF800000> : vector<4x32xf32>
    %111 = vector.multi_reduction <maximumf>, %110, %cst_33 [2] : vector<4x32x32xf32> to vector<4x32xf32>
    %112 = vector.shape_cast %111 : vector<4x32xf32> to vector<4x32x1xf32>
    %113 = vector.broadcast %112 : vector<4x32x1xf32> to vector<4x32x32xf32>
    %114 = arith.subf %110, %113 : vector<4x32x32xf32>
    %115 = math.exp %114 : vector<4x32x32xf32>
    %cst_34 = arith.constant dense<0.000000e+00> : vector<4x32xf32>
    %116 = vector.multi_reduction <add>, %115, %cst_34 [2] : vector<4x32x32xf32> to vector<4x32xf32>
    %117 = vector.shape_cast %116 : vector<4x32xf32> to vector<4x32x1xf32>
    %118 = tpu.reciprocal %117 {approx = true} : vector<4x32x1xf32> -> vector<4x32x1xf32>
    %119 = arith.mulf %117, %118 : vector<4x32x1xf32>
    %cst_35 = arith.constant 2.000000e+00 : f32
    %120 = vector.broadcast %cst_35 : f32 to vector<4x32x1xf32>
    %121 = arith.subf %120, %119 : vector<4x32x1xf32>
    %122 = arith.mulf %118, %121 : vector<4x32x1xf32>
    %123 = vector.broadcast %122 : vector<4x32x1xf32> to vector<4x32x32xf32>
    %124 = arith.mulf %115, %123 : vector<4x32x32xf32>
    "tpu.trace_start"() <{level = 10 : i32, message = "wlm,wmd->wld"}> : () -> ()
    %cst_36 = arith.constant dense<0.000000e+00> : vector<4x32x8xf32>
    %125 = tpu.matmul %124, %107, %cst_36 {dimension_numbers = #tpu.dot_dimension_numbers<[2], [1], [1], [2], [0, 0, 0, 1, 1, 2], [0], [0]>} : vector<4x32x32xf32>, vector<4x32x8xf32>, vector<4x32x8xf32> -> vector<4x32x8xf32>
    "tpu.trace_stop"() : () -> ()
    %126 = tpu.concatenate %53, %77, %101, %125 in 2 : vector<4x32x8xf32>, vector<4x32x8xf32>, vector<4x32x8xf32>, vector<4x32x8xf32> -> vector<4x32x32xf32>
    %127 = vector.shape_cast %126 : vector<4x32x32xf32> to vector<128x32xf32>
    %c0_37 = arith.constant 0 : index
    %c0_38 = arith.constant 0 : index
    %128 = vector.load %arg5[%c0_37, %c0_38] : memref<32x32xf32, #tpu.memory_space<vmem>>, vector<32x32xf32>
    %cst_39 = arith.constant dense<0.000000e+00> : vector<128x32xf32>
    %129 = tpu.matmul %127, %128, %cst_39 {dimension_numbers = #tpu.dot_dimension_numbers<[1], [0], [0], [1], [0, 0, 1, 1], [], []>} : vector<128x32xf32>, vector<32x32xf32>, vector<128x32xf32> -> vector<128x32xf32>
    %c0_40 = arith.constant 0 : index
    %c0_41 = arith.constant 0 : index
    %130 = vector.load %arg6[%c0_40, %c0_41] : memref<1x32xf32, #tpu.memory_space<vmem>>, vector<1x32xf32>
    %131 = vector.broadcast %130 : vector<1x32xf32> to vector<128x32xf32>
    %132 = arith.addf %129, %131 : vector<128x32xf32>
    %133 = vector.shape_cast %132 : vector<128x32xf32> to vector<4x32x32xf32>
    %c0_42 = arith.constant 0 : index
    %c0_43 = arith.constant 0 : index
    %c0_44 = arith.constant 0 : index
    %134 = vector.load %arg7[%c0_42, %c0_43, %c0_44] : memref<4x32x32xf32, #tpu.memory_space<vmem>>, vector<4x32x32xf32>
    tpu.vector_store %arg7[%c0_42, %c0_43, %c0_44], %133 {strides = array<i32>} : memref<4x32x32xf32, #tpu.memory_space<vmem>>, vector<4x32x32xf32>,
    return
  }
  func.func @transform_0(%arg0: i32) -> (i32, i32, i32) {
    %c0_i32 = arith.constant 0 : i32
    %c0_i32_0 = arith.constant 0 : i32
    %c0_i32_1 = arith.constant 0 : i32
    return %arg0, %c0_i32, %c0_i32_0 : i32, i32, i32
  }
  func.func @transform_1(%arg0: i32) -> (i32, i32) {
    %c0_i32 = arith.constant 0 : i32
    %c0_i32_0 = arith.constant 0 : i32
    %c0_i32_1 = arith.constant 0 : i32
    return %c0_i32, %c0_i32_0 : i32, i32
  }
  func.func @transform_2(%arg0: i32) -> (i32, i32) {
    %c0_i32 = arith.constant 0 : i32
    %c0_i32_0 = arith.constant 0 : i32
    %c0_i32_1 = arith.constant 0 : i32
    return %c0_i32, %c0_i32_0 : i32, i32
  }
  func.func @transform_3(%arg0: i32) -> (i32, i32) {
    %c0_i32 = arith.constant 0 : i32
    %c0_i32_0 = arith.constant 0 : i32
    %c0_i32_1 = arith.constant 0 : i32
    return %c0_i32, %c0_i32_0 : i32, i32
  }
  func.func @transform_4(%arg0: i32) -> (i32, i32) {
    %c0_i32 = arith.constant 0 : i32
    %c0_i32_0 = arith.constant 0 : i32
    %c0_i32_1 = arith.constant 0 : i32
    return %c0_i32, %c0_i32_0 : i32, i32
  }
  func.func @transform_5(%arg0: i32) -> (i32, i32) {
    %c0_i32 = arith.constant 0 : i32
    %c0_i32_0 = arith.constant 0 : i32
    %c0_i32_1 = arith.constant 0 : i32
    return %c0_i32, %c0_i32_0 : i32, i32
  }
  func.func @transform_6(%arg0: i32) -> (i32, i32, i32) {
    %c0_i32 = arith.constant 0 : i32
    %c0_i32_0 = arith.constant 0 : i32
    %c0_i32_1 = arith.constant 0 : i32
    return %arg0, %c0_i32, %c0_i32_0 : i32, i32, i32
  }
}

</mosaic_0001>

<llo_original>
// kernel: tpu_custom_call.1
$region0: #{tpu_custom_call.1}
  #allocation0 [shape = 'u32[]', space=smem, size = 0x4, offset = 0x4, fixed_abs, tag = 'smem constant byte address 0x4 - core index']
  #allocation1 [shape = 'u32[144,128]{1,0:T(1,128)}', space=vmem, size = 0x12000, scoped, tag = 'internal scratch']
  %s0 = inlined_call_operand.hbm [shape: f32[8,32,32], index: 0, kind: input, shape index: {}]
  %s1 = inlined_call_operand.vmem [shape: f32[1,32], index: 1, kind: input, shape index: {}]
  %s2 = inlined_call_operand.vmem [shape: f32[1,32], index: 2, kind: input, shape index: {}]
  %s3 = inlined_call_operand.hbm [shape: f32[32,96], index: 3, kind: input, shape index: {}]
  %s4 = inlined_call_operand.hbm [shape: f32[32,32], index: 4, kind: input, shape index: {}]
  %s5 = inlined_call_operand.vmem [shape: f32[1,32], index: 5, kind: input, shape index: {}]
  %s6 = inlined_call_operand.hbm [shape: f32[8,32,32], index: 6, kind: output, shape index: {}]
  %s7 = sld [smem:[#allocation0]]
  $region69: #{tpu_custom_call.1} parent=0
    _
  %s9 = ssub.s32 1, %s7
  %s10 = scalar_select 0, %s9, %s7
  $region1: #{tpu_custom_call.1} parent=0
    #allocation2 [shape = 'u8[131072]{0}', space=vmem, size = 0x20000, scoped, tag = 'input window, operand 0']
    #allocation3 [shape = 's32[2]{0}', space=sflag, size = 0x8, scoped, tag = 'scoped memory for tpu_custom_call.1']
    #allocation4 [shape = 's32[2]{0}', space=sflag, size = 0x8, scoped, tag = 'scoped memory for tpu_custom_call.1']
    #allocation5 [shape = 'u8[16384]{0}', space=vmem, size = 0x4000, scoped, tag = 'input window, operand 3, single buffered']
    #allocation6 [shape = 's32[1]{0}', space=sflag, size = 0x4, scoped, tag = 'scoped memory for tpu_custom_call.1']
    #allocation7 [shape = 'u8[16384]{0}', space=vmem, size = 0x4000, scoped, tag = 'input window, operand 4, single buffered']
    #allocation8 [shape = 'u8[131072]{0}', space=vmem, size = 0x20000, scoped, tag = 'output window, operand 0']
    %11 = vsyncpa [#allocation3], 0
    %s12 = scalar_lea.sflag [#allocation3], 1
    %13 = vsyncpa %s12, 0
    %14 = vsyncpa [#allocation6], 0
    %15 = vsyncpa [#allocation4], 0
    %s16 = scalar_lea.sflag [#allocation4], 1
    %17 = vsyncpa %s16, 0
    loop: start=0, step=1, limit=4
    $region2: #{tpu_custom_call.1} parent=1 // loop_pre_header
      _
    $region3: #{tpu_custom_call.1} parent=1 // loop_header
      %s19 = sphi 0, %s23
      %p20 = scmp.ge.s32.totalorder %s19, 4
      %s29 = sphi 0, %s31
      %s32 = sphi 0, %s29
      %s33 = sphi 0, %s32
      %s49 = sphi 0, %s33
      %s53 = sphi 0, %s53
      %s55 = sphi 0, %s53
      %s56 = sphi 0, %s55
      %s70 = sphi 0, %s56
      %s74 = sphi 0, %s74
      %s76 = sphi 0, %s74
      %s77 = sphi 0, %s76
      %s91 = sphi 0, %s77
      %s95 = sphi 0, %s95
      %s97 = sphi 0, %s95
      %s98 = sphi 0, %s97
      %s112 = sphi 0, %s98
      %s116 = sphi 0, %s116
      %s118 = sphi 0, %s116
      %s119 = sphi 0, %s118
      %s133 = sphi 0, %s119
      %s137 = sphi 0, %s137
      %s139 = sphi 0, %s137
      %s140 = sphi 0, %s139
      %s154 = sphi 0, %s140
      %s160 = sphi 0, %s162
      %s163 = sphi 0, %s160
      %s164 = sphi 0, %s163
      %s180 = sphi 0, %s164
    $region4: #{tpu_custom_call.1} parent=1 // loop_header_branch
      %22 = sbr.rel (%p20) target = $region8
    $region5: #{tpu_custom_call.1} parent=1 // loop_body
      %s24 = ssub.s32 %s19, 1
      %s25 = ssub.s32 %s19, 2
      %s26 = sadd.s32 %s19, 1
      %s27 = ssub.s32 %s19, %s26
      %p28 = scmp.eq.s32.totalorder %s27, 0
      %s30 = sadd.s32 %s29, 1
      %s31 = scalar_select %p28, %s29, %s30
      %p34 = pneg %p28
      %p35 = scmp.eq.s32.totalorder %s19, 1
      %p36 = por %p34, %p35
      %p37 = scmp.ne.s32.totalorder %s29, %s32
      %p38 = scmp.eq.s32.totalorder %s19, 0
      %p39 = por %p37, %p38
      %p40 = scmp.ne.s32.totalorder %s29, %s32
      %p41 = scmp.eq.s32.totalorder %s24, 1
      %p42 = por %p40, %p41
      %p43 = scmp.ne.s32.totalorder %s32, %s33
      %p44 = scmp.eq.s32.totalorder %s24, 0
      %p45 = por %p43, %p44
      %p46 = scmp.ne.s32.totalorder %s32, %s33
      %p47 = scmp.eq.s32.totalorder %s25, 1
      %p48 = por %p46, %p47
      %p50 = scmp.ne.s32.totalorder %s33, %s49
      %p51 = scmp.eq.s32.totalorder %s25, 0
      %p52 = por %p50, %p51
      %s54 = sadd.s32 %s53, 1
      %p57 = scmp.eq.s32.totalorder %s19, 1
      %p58 = scmp.ne.s32.totalorder %s53, %s55
      %p59 = scmp.eq.s32.totalorder %s19, 0
      %p60 = por %p58, %p59
      %p61 = scmp.ne.s32.totalorder %s53, %s55
      %p62 = scmp.eq.s32.totalorder %s24, 1
      %p63 = por %p61, %p62
      %p64 = scmp.ne.s32.totalorder %s55, %s56
      %p65 = scmp.eq.s32.totalorder %s24, 0
      %p66 = por %p64, %p65
      %p67 = scmp.ne.s32.totalorder %s55, %s56
      %p68 = scmp.eq.s32.totalorder %s25, 1
      %p69 = por %p67, %p68
      %p71 = scmp.ne.s32.totalorder %s56, %s70
      %p72 = scmp.eq.s32.totalorder %s25, 0
      %p73 = por %p71, %p72
      %s75 = sadd.s32 %s74, 1
      %p78 = scmp.eq.s32.totalorder %s19, 1
      %p79 = scmp.ne.s32.totalorder %s74, %s76
      %p80 = scmp.eq.s32.totalorder %s19, 0
      %p81 = por %p79, %p80
      %p82 = scmp.ne.s32.totalorder %s74, %s76
      %p83 = scmp.eq.s32.totalorder %s24, 1
      %p84 = por %p82, %p83
      %p85 = scmp.ne.s32.totalorder %s76, %s77
      %p86 = scmp.eq.s32.totalorder %s24, 0
      %p87 = por %p85, %p86
      %p88 = scmp.ne.s32.totalorder %s76, %s77
      %p89 = scmp.eq.s32.totalorder %s25, 1
      %p90 = por %p88, %p89
      %p92 = scmp.ne.s32.totalorder %s77, %s91
      %p93 = scmp.eq.s32.totalorder %s25, 0
      %p94 = por %p92, %p93
      %s96 = sadd.s32 %s95, 1
      %p99 = scmp.eq.s32.totalorder %s19, 1
      %p100 = scmp.ne.s32.totalorder %s95, %s97
      %p101 = scmp.eq.s32.totalorder %s19, 0
      %p102 = por %p100, %p101
      %p103 = scmp.ne.s32.totalorder %s95, %s97
      %p104 = scmp.eq.s32.totalorder %s24, 1
      %p105 = por %p103, %p104
      %p106 = scmp.ne.s32.totalorder %s97, %s98
      %p107 = scmp.eq.s32.totalorder %s24, 0
      %p108 = por %p106, %p107
      %p109 = scmp.ne.s32.totalorder %s97, %s98
      %p110 = scmp.eq.s32.totalorder %s25, 1
      %p111 = por %p109, %p110
      %p113 = scmp.ne.s32.totalorder %s98, %s112
      %p114 = scmp.eq.s32.totalorder %s25, 0
      %p115 = por %p113, %p114
      %s117 = sadd.s32 %s116, 1
      %p120 = scmp.eq.s32.totalorder %s19, 1
      %p121 = scmp.ne.s32.totalorder %s116, %s118
      %p122 = scmp.eq.s32.totalorder %s19, 0
      %p123 = por %p121, %p122
      %p124 = scmp.ne.s32.totalorder %s116, %s118
      %p125 = scmp.eq.s32.totalorder %s24, 1
      %p126 = por %p124, %p125
      %p127 = scmp.ne.s32.totalorder %s118, %s119
      %p128 = scmp.eq.s32.totalorder %s24, 0
      %p129 = por %p127, %p128
      %p130 = scmp.ne.s32.totalorder %s118, %s119
      %p131 = scmp.eq.s32.totalorder %s25, 1
      %p132 = por %p130, %p131
      %p134 = scmp.ne.s32.totalorder %s119, %s133
      %p135 = scmp.eq.s32.totalorder %s25, 0
      %p136 = por %p134, %p135
      %s138 = sadd.s32 %s137, 1
      %p141 = scmp.eq.s32.totalorder %s19, 1
      %p142 = scmp.ne.s32.totalorder %s137, %s139
      %p143 = scmp.eq.s32.totalorder %s19, 0
      %p144 = por %p142, %p143
      %p145 = scmp.ne.s32.totalorder %s137, %s139
      %p146 = scmp.eq.s32.totalorder %s24, 1
      %p147 = por %p145, %p146
      %p148 = scmp.ne.s32.totalorder %s139, %s140
      %p149 = scmp.eq.s32.totalorder %s24, 0
      %p150 = por %p148, %p149
      %p151 = scmp.ne.s32.totalorder %s139, %s140
      %p152 = scmp.eq.s32.totalorder %s25, 1
      %p153 = por %p151, %p152
      %p155 = scmp.ne.s32.totalorder %s140, %s154
      %p156 = scmp.eq.s32.totalorder %s25, 0
      %p157 = por %p155, %p156
      %s158 = ssub.s32 %s19, %s26
      %p159 = scmp.eq.s32.totalorder %s158, 0
      %s161 = sadd.s32 %s160, 1
      %s162 = scalar_select %p159, %s160, %s161
      %p165 = pneg %p159
      %p166 = scmp.eq.s32.totalorder %s19, 1
      %p167 = por %p165, %p166
      %p168 = scmp.ne.s32.totalorder %s160, %s163
      %p169 = scmp.eq.s32.totalorder %s19, 0
      %p170 = por %p168, %p169
      %p171 = scmp.ne.s32.totalorder %s160, %s163
      %p172 = scmp.eq.s32.totalorder %s24, 1
      %p173 = por %p171, %p172
      %p174 = scmp.ne.s32.totalorder %s163, %s164
      %p175 = scmp.eq.s32.totalorder %s24, 0
      %p176 = por %p174, %p175
      %p177 = scmp.ne.s32.totalorder %s163, %s164
      %p178 = scmp.eq.s32.totalorder %s25, 1
      %p179 = por %p177, %p178
      %p181 = scmp.ne.s32.totalorder %s164, %s180
      %p182 = scmp.eq.s32.totalorder %s25, 0
      %p183 = por %p181, %p182
      %p184 = scmp.le.s32.totalorder 1, %s19
      %p185 = scmp.lt.s32.totalorder %s19, 3
      %p186 = pnand %p184, %p185
      %p187 = pneg %p186
      // Predicated region
      $region9: #{tpu_custom_call.1} parent=5 // pred_check
        _
      $region10: #{tpu_custom_call.1} parent=5 // pred_check_branch
        %189 = sbr.rel (%p186) target = $region12
      $region11: #{tpu_custom_call.1} parent=5 // pred_region
        %s190 = ssub.s32 %s19, 1
        // Predicated region
        $region13: #{tpu_custom_call.1} parent=11 // pred_check
          %p191 = pneg %p66
        $region14: #{tpu_custom_call.1} parent=11 // pred_check_branch
          %193 = sbr.rel (%p191) target = $region16
        $region15: #{tpu_custom_call.1} parent=11 // pred_region
          _
        $region16: #{tpu_custom_call.1} parent=11 // pred_fallthru
          _
        // Predicated region
        $region17: #{tpu_custom_call.1} parent=11 // pred_check
          %p194 = pneg %p87
        $region18: #{tpu_custom_call.1} parent=11 // pred_check_branch
          %196 = sbr.rel (%p194) target = $region20
        $region19: #{tpu_custom_call.1} parent=11 // pred_region
          _
        $region20: #{tpu_custom_call.1} parent=11 // pred_fallthru
          _
        // Predicated region
        $region21: #{tpu_custom_call.1} parent=11 // pred_check
          %p197 = pneg %p108
        $region22: #{tpu_custom_call.1} parent=11 // pred_check_branch
          %199 = sbr.rel (%p197) target = $region24
        $region23: #{tpu_custom_call.1} parent=11 // pred_region
          %s201 = ssub.s32 512, 512
          %202 = vsyncadd [#allocation6], %s201
          %s203 = sshll.u32 [#allocation5], 4
          %s204 = int_to_ptr.vmem [resolvable:$true] %s203
          %209 = dma.hbm_to_vmem [thread:$0]  %s3, 512, %s204, [#allocation6], 128, 128, 8
        $region24: #{tpu_custom_call.1} parent=11 // pred_fallthru
          _
        // Predicated region
        $region25: #{tpu_custom_call.1} parent=11 // pred_check
          %p210 = pneg %p129
        $region26: #{tpu_custom_call.1} parent=11 // pred_check_branch
          %212 = sbr.rel (%p210) target = $region28
        $region27: #{tpu_custom_call.1} parent=11 // pred_region
          %s214 = ssub.s32 512, 512
          %215 = vsyncadd [#allocation6], %s214
          %s216 = sshll.u32 [#allocation7], 4
          %s217 = int_to_ptr.vmem [resolvable:$true] %s216
          %222 = dma.hbm_to_vmem [thread:$0]  %s4, 512, %s217, [#allocation6], 128, 128, 8
        $region28: #{tpu_custom_call.1} parent=11 // pred_fallthru
          _
        // Predicated region
        $region29: #{tpu_custom_call.1} parent=11 // pred_check
          %p223 = pneg %p150
        $region30: #{tpu_custom_call.1} parent=11 // pred_check_branch
          %225 = sbr.rel (%p223) target = $region32
        $region31: #{tpu_custom_call.1} parent=11 // pred_region
          _
        $region32: #{tpu_custom_call.1} parent=11 // pred_fallthru
          _
      $region12: #{tpu_custom_call.1} parent=5 // pred_fallthru
        _
      %p226 = scmp.lt.s32.totalorder %s19, 2
      // Predicated region
      $region33: #{tpu_custom_call.1} parent=5 // pred_check
        %p227 = pneg %p226
      $region34: #{tpu_custom_call.1} parent=5 // pred_check_branch
        %229 = sbr.rel (%p227) target = $region36
      $region35: #{tpu_custom_call.1} parent=5 // pred_region
        // Predicated region
        $region37: #{tpu_custom_call.1} parent=35 // pred_check
          %p230 = pneg %p39
        $region38: #{tpu_custom_call.1} parent=35 // pred_check_branch
          %232 = sbr.rel (%p230) target = $region40
        $region39: #{tpu_custom_call.1} parent=35 // pred_region
          %s233 = sand.u32 %s29, 1
          %s234 = scalar_lea.sflag [#allocation3], %s233
          %s235 = sand.u32 %s29, 1
          %s236 = smul.addr %s235, 128
          %s237 = scalar_lea.vmem [#allocation2], %s236
          %s238 = smul.u32 4, %s19
          %s240 = ssub.s32 2048, 2048
          %241 = vsyncadd %s234, %s240
          %s242 = smul.addr %s238, 4
          %s243 = smul.addr %s242, 128
          %s244 = scalar_lea.hbm %s0, %s243
          %s245 = sshll.u32 %s237, 4
          %s246 = int_to_ptr.vmem [resolvable:$true] %s245
          %251 = dma.hbm_to_vmem [thread:$0]  %s244, 2048, %s246, %s234, 128, 128, 8
        $region40: #{tpu_custom_call.1} parent=35 // pred_fallthru
          _
      $region36: #{tpu_custom_call.1} parent=5 // pred_fallthru
        _
      %p252 = scmp.le.s32.totalorder 1, %s19
      %p253 = scmp.lt.s32.totalorder %s19, 3
      %p254 = pnand %p252, %p253
      %p255 = pneg %p254
      // Predicated region
      $region41: #{tpu_custom_call.1} parent=5 // pred_check
        _
      $region42: #{tpu_custom_call.1} parent=5 // pred_check_branch
        %257 = sbr.rel (%p254) target = $region44
      $region43: #{tpu_custom_call.1} parent=5 // pred_region
        %s258 = ssub.s32 %s19, 1
        %s259 = sand.u32 %s32, 1
        %s260 = scalar_lea.sflag [#allocation3], %s259
        %s261 = sand.u32 %s32, 1
        %s262 = smul.addr %s261, 128
        %s263 = scalar_lea.vmem [#allocation2], %s262
        // Predicated region
        $region45: #{tpu_custom_call.1} parent=43 // pred_check
          %p264 = pneg %p45
        $region46: #{tpu_custom_call.1} parent=43 // pred_check_branch
          %266 = sbr.rel (%p264) target = $region48
        $region47: #{tpu_custom_call.1} parent=43 // pred_region
          %267 = dma.done %s260, 2048
        $region48: #{tpu_custom_call.1} parent=43 // pred_fallthru
          _
        // Predicated region
        $region49: #{tpu_custom_call.1} parent=43 // pred_check
          %p268 = pneg %p108
        $region50: #{tpu_custom_call.1} parent=43 // pred_check_branch
          %270 = sbr.rel (%p268) target = $region52
        $region51: #{tpu_custom_call.1} parent=43 // pred_region
          %271 = dma.done [#allocation6], 512
        $region52: #{tpu_custom_call.1} parent=43 // pred_fallthru
          _
        // Predicated region
        $region53: #{tpu_custom_call.1} parent=43 // pred_check
          %p272 = pneg %p129
        $region54: #{tpu_custom_call.1} parent=43 // pred_check_branch
          %274 = sbr.rel (%p272) target = $region56
        $region55: #{tpu_custom_call.1} parent=43 // pred_region
          %275 = dma.done [#allocation6], 512
        $region56: #{tpu_custom_call.1} parent=43 // pred_fallthru
          _
        %s276 = sand.u32 %s32, 1
        %s277 = scalar_lea.sflag [#allocation3], %s276
        %s278 = sand.u32 %s32, 1
        %s279 = smul.addr %s278, 128
        %s280 = scalar_lea.vmem [#allocation2], %s279
        %p281 = pneg %p45
        %p282 = pneg %p42
        %p283 = pneg %p66
        %p284 = pneg %p63
        %p285 = pneg %p87
        %p286 = pneg %p84
        %p287 = pneg %p108
        %p288 = pneg %p105
        %p289 = pneg %p129
        %p290 = pneg %p126
        %p291 = pneg %p150
        %p292 = pneg %p147
        %p293 = pneg %p176
        %p294 = pneg %p173
        %s295 = sand.u32 %s163, 1
        %s296 = scalar_lea.sflag [#allocation4], %s295
        %s297 = sand.u32 %s163, 1
        %s298 = smul.addr %s297, 128
        %s299 = scalar_lea.vmem [#allocation8], %s298
        %s300 = smul.u32 4, %s24
        %s301 = smul.u32 4, %s24
        %v302 = vld [vmem:[%s263] sm:$0xff]
        %v303 = vld [vmem:[%s263 + $0x8] sm:$0xff]
        %v304 = vld [vmem:[%s263 + $0x10] sm:$0xff]
        %v305 = vld [vmem:[%s263 + $0x18] sm:$0xff]
        %v306 = vld [vmem:[%s263 + $0x20] sm:$0xff]
        %v307 = vld [vmem:[%s263 + $0x28] sm:$0xff]
        %v308 = vld [vmem:[%s263 + $0x30] sm:$0xff]
        %v309 = vld [vmem:[%s263 + $0x38] sm:$0xff]
        %v310 = vld [vmem:[%s263 + $0x40] sm:$0xff]
        %v311 = vld [vmem:[%s263 + $0x48] sm:$0xff]
        %v312 = vld [vmem:[%s263 + $0x50] sm:$0xff]
        %v313 = vld [vmem:[%s263 + $0x58] sm:$0xff]
        %v314 = vld [vmem:[%s263 + $0x60] sm:$0xff]
        %v315 = vld [vmem:[%s263 + $0x68] sm:$0xff]
        %v316 = vld [vmem:[%s263 + $0x70] sm:$0xff]
        %v317 = vld [vmem:[%s263 + $0x78] sm:$0xff]
        %vm318 = vcmask 261120
        %v319 = vsel %vm318, %v302, 0.0
        %320 = vadd.xlane.f32.xlu0 %v319
        %v321 = vpop.xlane.xlu0 %320
        %v322 = vsel %vm318, %v303, 0.0
        %323 = vadd.xlane.f32.xlu0 %v322
        %v324 = vpop.xlane.xlu0 %323
        %v325 = vsel %vm318, %v304, 0.0
        %326 = vadd.xlane.f32.xlu0 %v325
        %v327 = vpop.xlane.xlu0 %326
        %v328 = vsel %vm318, %v305, 0.0
        %329 = vadd.xlane.f32.xlu0 %v328
        %v330 = vpop.xlane.xlu0 %329
        %v331 = vsel %vm318, %v306, 0.0
        %332 = vadd.xlane.f32.xlu0 %v331
        %v333 = vpop.xlane.xlu0 %332
        %v334 = vsel %vm318, %v307, 0.0
        %335 = vadd.xlane.f32.xlu0 %v334
        %v336 = vpop.xlane.xlu0 %335
        %v337 = vsel %vm318, %v308, 0.0
        %338 = vadd.xlane.f32.xlu0 %v337
        %v339 = vpop.xlane.xlu0 %338
        %v340 = vsel %vm318, %v309, 0.0
        %341 = vadd.xlane.f32.xlu0 %v340
        %v342 = vpop.xlane.xlu0 %341
        %v343 = vsel %vm318, %v310, 0.0
        %344 = vadd.xlane.f32.xlu0 %v343
        %v345 = vpop.xlane.xlu0 %344
        %v346 = vsel %vm318, %v311, 0.0
        %347 = vadd.xlane.f32.xlu0 %v346
        %v348 = vpop.xlane.xlu0 %347
        %v349 = vsel %vm318, %v312, 0.0
        %350 = vadd.xlane.f32.xlu0 %v349
        %v351 = vpop.xlane.xlu0 %350
        %v352 = vsel %vm318, %v313, 0.0
        %353 = vadd.xlane.f32.xlu0 %v352
        %v354 = vpop.xlane.xlu0 %353
        %v355 = vsel %vm318, %v314, 0.0
        %356 = vadd.xlane.f32.xlu0 %v355
        %v357 = vpop.xlane.xlu0 %356
        %v358 = vsel %vm318, %v315, 0.0
        %359 = vadd.xlane.f32.xlu0 %v358
        %v360 = vpop.xlane.xlu0 %359
        %v361 = vsel %vm318, %v316, 0.0
        %362 = vadd.xlane.f32.xlu0 %v361
        %v363 = vpop.xlane.xlu0 %362
        %v364 = vsel %vm318, %v317, 0.0
        %365 = vadd.xlane.f32.xlu0 %v364
        %v366 = vpop.xlane.xlu0 %365
        %v367 = vrcp.pop 32.0
        %v368 = vmul.f32 %v321, %v367
        %v369 = vmul.f32 %v324, %v367
        %v370 = vmul.f32 %v327, %v367
        %v371 = vmul.f32 %v330, %v367
        %v372 = vmul.f32 %v333, %v367
        %v373 = vmul.f32 %v336, %v367
        %v374 = vmul.f32 %v339, %v367
        %v375 = vmul.f32 %v342, %v367
        %v376 = vmul.f32 %v345, %v367
        %v377 = vmul.f32 %v348, %v367
        %v378 = vmul.f32 %v351, %v367
        %v379 = vmul.f32 %v354, %v367
        %v380 = vmul.f32 %v357, %v367
        %v381 = vmul.f32 %v360, %v367
        %v382 = vmul.f32 %v363, %v367
        %v383 = vmul.f32 %v366, %v367
        %v384 = vsub.f32 %v302, %v368
        %v385 = vsub.f32 %v303, %v369
        %v386 = vsub.f32 %v304, %v370
        %v387 = vsub.f32 %v305, %v371
        %v388 = vsub.f32 %v306, %v372
        %v389 = vsub.f32 %v307, %v373
        %v390 = vsub.f32 %v308, %v374
        %v391 = vsub.f32 %v309, %v375
        %v392 = vsub.f32 %v310, %v376
        %v393 = vsub.f32 %v311, %v377
        %v394 = vsub.f32 %v312, %v378
        %v395 = vsub.f32 %v313, %v379
        %v396 = vsub.f32 %v314, %v380
        %v397 = vsub.f32 %v315, %v381
        %v398 = vsub.f32 %v316, %v382
        %v399 = vsub.f32 %v317, %v383
        %v400 = vmul.f32 %v384, %v384
        %v401 = vmul.f32 %v385, %v385
        %v402 = vmul.f32 %v386, %v386
        %v403 = vmul.f32 %v387, %v387
        %v404 = vmul.f32 %v388, %v388
        %v405 = vmul.f32 %v389, %v389
        %v406 = vmul.f32 %v390, %v390
        %v407 = vmul.f32 %v391, %v391
        %v408 = vmul.f32 %v392, %v392
        %v409 = vmul.f32 %v393, %v393
        %v410 = vmul.f32 %v394, %v394
        %v411 = vmul.f32 %v395, %v395
        %v412 = vmul.f32 %v396, %v396
        %v413 = vmul.f32 %v397, %v397
        %v414 = vmul.f32 %v398, %v398
        %v415 = vmul.f32 %v399, %v399
        %v416 = vsel %vm318, %v400, 0.0
        %417 = vadd.xlane.f32.xlu0 %v416
        %v418 = vpop.xlane.xlu0 %417
        %v419 = vsel %vm318, %v401, 0.0
        %420 = vadd.xlane.f32.xlu0 %v419
        %v421 = vpop.xlane.xlu0 %420
        %v422 = vsel %vm318, %v402, 0.0
        %423 = vadd.xlane.f32.xlu0 %v422
        %v424 = vpop.xlane.xlu0 %423
        %v425 = vsel %vm318, %v403, 0.0
        %426 = vadd.xlane.f32.xlu0 %v425
        %v427 = vpop.xlane.xlu0 %426
        %v428 = vsel %vm318, %v404, 0.0
        %429 = vadd.xlane.f32.xlu0 %v428
        %v430 = vpop.xlane.xlu0 %429
        %v431 = vsel %vm318, %v405, 0.0
        %432 = vadd.xlane.f32.xlu0 %v431
        %v433 = vpop.xlane.xlu0 %432
        %v434 = vsel %vm318, %v406, 0.0
        %435 = vadd.xlane.f32.xlu0 %v434
        %v436 = vpop.xlane.xlu0 %435
        %v437 = vsel %vm318, %v407, 0.0
        %438 = vadd.xlane.f32.xlu0 %v437
        %v439 = vpop.xlane.xlu0 %438
        %v440 = vsel %vm318, %v408, 0.0
        %441 = vadd.xlane.f32.xlu0 %v440
        %v442 = vpop.xlane.xlu0 %441
        %v443 = vsel %vm318, %v409, 0.0
        %444 = vadd.xlane.f32.xlu0 %v443
        %v445 = vpop.xlane.xlu0 %444
        %v446 = vsel %vm318, %v410, 0.0
        %447 = vadd.xlane.f32.xlu0 %v446
        %v448 = vpop.xlane.xlu0 %447
        %v449 = vsel %vm318, %v411, 0.0
        %450 = vadd.xlane.f32.xlu0 %v449
        %v451 = vpop.xlane.xlu0 %450
        %v452 = vsel %vm318, %v412, 0.0
        %453 = vadd.xlane.f32.xlu0 %v452
        %v454 = vpop.xlane.xlu0 %453
        %v455 = vsel %vm318, %v413, 0.0
        %456 = vadd.xlane.f32.xlu0 %v455
        %v457 = vpop.xlane.xlu0 %456
        %v458 = vsel %vm318, %v414, 0.0
        %459 = vadd.xlane.f32.xlu0 %v458
        %v460 = vpop.xlane.xlu0 %459
        %v461 = vsel %vm318, %v415, 0.0
        %462 = vadd.xlane.f32.xlu0 %v461
        %v463 = vpop.xlane.xlu0 %462
        %v464 = vmul.f32 %v418, %v367
        %v465 = vmul.f32 %v421, %v367
        %v466 = vmul.f32 %v424, %v367
        %v467 = vmul.f32 %v427, %v367
        %v468 = vmul.f32 %v430, %v367
        %v469 = vmul.f32 %v433, %v367
        %v470 = vmul.f32 %v436, %v367
        %v471 = vmul.f32 %v439, %v367
        %v472 = vmul.f32 %v442, %v367
        %v473 = vmul.f32 %v445, %v367
        %v474 = vmul.f32 %v448, %v367
        %v475 = vmul.f32 %v451, %v367
        %v476 = vmul.f32 %v454, %v367
        %v477 = vmul.f32 %v457, %v367
        %v478 = vmul.f32 %v460, %v367
        %v479 = vmul.f32 %v463, %v367
        %v480 = vadd.f32 %v464, 1e-05
        %v481 = vadd.f32 %v465, 1e-05
        %v482 = vadd.f32 %v466, 1e-05
        %v483 = vadd.f32 %v467, 1e-05
        %v484 = vadd.f32 %v468, 1e-05
        %v485 = vadd.f32 %v469, 1e-05
        %v486 = vadd.f32 %v470, 1e-05
        %v487 = vadd.f32 %v471, 1e-05
        %v488 = vadd.f32 %v472, 1e-05
        %v489 = vadd.f32 %v473, 1e-05
        %v490 = vadd.f32 %v474, 1e-05
        %v491 = vadd.f32 %v475, 1e-05
        %v492 = vadd.f32 %v476, 1e-05
        %v493 = vadd.f32 %v477, 1e-05
        %v494 = vadd.f32 %v478, 1e-05
        %v495 = vadd.f32 %v479, 1e-05
        %v496 = vrsqrt.pop %v480
        %v497 = vrsqrt.pop %v481
        %v498 = vrsqrt.pop %v482
        %v499 = vrsqrt.pop %v483
        %v500 = vrsqrt.pop %v484
        %v501 = vrsqrt.pop %v485
        %v502 = vrsqrt.pop %v486
        %v503 = vrsqrt.pop %v487
        %v504 = vrsqrt.pop %v488
        %v505 = vrsqrt.pop %v489
        %v506 = vrsqrt.pop %v490
        %v507 = vrsqrt.pop %v491
        %v508 = vrsqrt.pop %v492
        %v509 = vrsqrt.pop %v493
        %v510 = vrsqrt.pop %v494
        %v511 = vrsqrt.pop %v495
        %v512 = vmul.f32 %v384, %v496
        %v513 = vmul.f32 %v385, %v497
        %v514 = vmul.f32 %v386, %v498
        %v515 = vmul.f32 %v387, %v499
        %v516 = vmul.f32 %v388, %v500
        %v517 = vmul.f32 %v389, %v501
        %v518 = vmul.f32 %v390, %v502
        %v519 = vmul.f32 %v391, %v503
        %v520 = vmul.f32 %v392, %v504
        %v521 = vmul.f32 %v393, %v505
        %v522 = vmul.f32 %v394, %v506
        %v523 = vmul.f32 %v395, %v507
        %v524 = vmul.f32 %v396, %v508
        %v525 = vmul.f32 %v397, %v509
        %v526 = vmul.f32 %v398, %v510
        %v527 = vmul.f32 %v399, %v511
        %v528 = vld [vmem:[%s1] sm:$0x1]
        %v530 = vlaneseq
        %v531 = vshrl.u32 %v530, 7
        %v532 = vsub.s32 0, %v531
        %v533 = vrot.slane %v528, %v532
        %v535 = vmul.f32 %v512, %v533
        %v536 = vmul.f32 %v513, %v533
        %v537 = vmul.f32 %v514, %v533
        %v538 = vmul.f32 %v515, %v533
        %v539 = vmul.f32 %v516, %v533
        %v540 = vmul.f32 %v517, %v533
        %v541 = vmul.f32 %v518, %v533
        %v542 = vmul.f32 %v519, %v533
        %v543 = vmul.f32 %v520, %v533
        %v544 = vmul.f32 %v521, %v533
        %v545 = vmul.f32 %v522, %v533
        %v546 = vmul.f32 %v523, %v533
        %v547 = vmul.f32 %v524, %v533
        %v548 = vmul.f32 %v525, %v533
        %v549 = vmul.f32 %v526, %v533
        %v550 = vmul.f32 %v527, %v533
        %v551 = vld [vmem:[%s2] sm:$0x1]
        %v553 = vlaneseq
        %v554 = vshrl.u32 %v553, 7
        %v555 = vsub.s32 0, %v554
        %v556 = vrot.slane %v551, %v555
        %v558 = vadd.f32 %v535, %v556
        %v559 = vadd.f32 %v536, %v556
        %v560 = vadd.f32 %v537, %v556
        %v561 = vadd.f32 %v538, %v556
        %v562 = vadd.f32 %v539, %v556
        %v563 = vadd.f32 %v540, %v556
        %v564 = vadd.f32 %v541, %v556
        %v565 = vadd.f32 %v542, %v556
        %v566 = vadd.f32 %v543, %v556
        %v567 = vadd.f32 %v544, %v556
        %v568 = vadd.f32 %v545, %v556
        %v569 = vadd.f32 %v546, %v556
        %v570 = vadd.f32 %v547, %v556
        %v571 = vadd.f32 %v548, %v556
        %v572 = vadd.f32 %v549, %v556
        %v573 = vadd.f32 %v550, %v556
        %v574 = vld [vmem:[#allocation5] sm:$0xff]
        %v575 = vld [vmem:[#allocation5 + $0x8] sm:$0xff]
        %v576 = vld [vmem:[#allocation5 + $0x10] sm:$0xff]
        %v577 = vld [vmem:[#allocation5 + $0x18] sm:$0xff]
        %v579 = vsel %vm318, %v558, 0
        %v582 = vsel %vm318, %v559, 0
        %v585 = vsel %vm318, %v560, 0
        %v588 = vsel %vm318, %v561, 0
        %v591 = vsel %vm318, %v562, 0
        %v594 = vsel %vm318, %v563, 0
        %v597 = vsel %vm318, %v564, 0
        %v600 = vsel %vm318, %v565, 0
        %v603 = vsel %vm318, %v566, 0
        %v606 = vsel %vm318, %v567, 0
        %v609 = vsel %vm318, %v568, 0
        %v612 = vsel %vm318, %v569, 0
        %v615 = vsel %vm318, %v570, 0
        %v618 = vsel %vm318, %v571, 0
        %v621 = vsel %vm318, %v572, 0
        %v624 = vsel %vm318, %v573, 0
        %626 = vmatprep.subr.mxu0 0.0
        %627 = vmatpush1.msra.mxu0 %v574
        %628 = vmatprep.subr.mxu0 0.0
        %629 = vmatpush1.msra.mxu0 %v575
        %630 = vmatprep.subr.mxu0 0.0
        %631 = vmatpush1.msra.mxu0 %v576
        %632 = vmatprep.subr.mxu0 0.0
        %633 = vmatpush1.msra.mxu0 %v577
        %634 = vmatprep.subr.mxu0 0.0
        %635 = vmatpush1.msra.mxu0 0.0
        %636 = vmatprep.subr.mxu0 0.0
        %637 = vmatpush1.msra.mxu0 0.0
        %638 = vmatprep.subr.mxu0 0.0
        %639 = vmatpush1.msra.mxu0 0.0
        %640 = vmatprep.subr.mxu0 0.0
        %641 = vmatpush1.msra.mxu0 0.0
        %642 = vmatprep.subr.mxu0 0.0
        %643 = vmatpush1.msra.mxu0 0.0
        %644 = vmatprep.subr.mxu0 0.0
        %645 = vmatpush1.msra.mxu0 0.0
        %646 = vmatprep.subr.mxu0 0.0
        %647 = vmatpush1.msra.mxu0 0.0
        %648 = vmatprep.subr.mxu0 0.0
        %649 = vmatpush1.msra.mxu0 0.0
        %650 = vmatprep.subr.mxu0 0.0
        %651 = vmatpush1.msra.mxu0 0.0
        %652 = vmatprep.subr.mxu0 0.0
        %653 = vmatpush1.msra.mxu0 0.0
        %654 = vmatprep.subr.mxu0 0.0
        %655 = vmatpush1.msra.mxu0 0.0
        %656 = vmatprep.subr.mxu0 0.0
        %657 = vmatpush1.msra.mxu0 0.0
        %658 = vmatprep.subr.mxu0 0.0
        %659 = vmatpush1.msra.mxu0 0.0
        %660 = vmatprep.subr.mxu0 0.0
        %661 = vmatpush1.msra.mxu0 0.0
        %662 = vmatprep.subr.mxu0 0.0
        %663 = vmatpush1.msra.mxu0 0.0
        %664 = vmatprep.subr.mxu0 0.0
        %665 = vmatpush1.msra.mxu0 0.0
        %666 = vmatprep.subr.mxu0 0.0
        %667 = vmatpush1.msra.mxu0 0.0
        %668 = vmatprep.subr.mxu0 0.0
        %669 = vmatpush1.msra.mxu0 0.0
        %670 = vmatprep.subr.mxu0 0.0
        %671 = vmatpush1.msra.mxu0 0.0
        %672 = vmatprep.subr.mxu0 0.0
        %673 = vmatpush1.msra.mxu0 0.0
        %674 = vmatprep.subr.mxu0 0.0
        %675 = vmatpush1.msra.mxu0 0.0
        %676 = vmatprep.subr.mxu0 0.0
        %677 = vmatpush1.msra.mxu0 0.0
        %678 = vmatprep.subr.mxu0 0.0
        %679 = vmatpush1.msra.mxu0 0.0
        %680 = vmatprep.subr.mxu0 0.0
        %681 = vmatpush1.msra.mxu0 0.0
        %682 = vmatprep.subr.mxu0 0.0
        %683 = vmatpush1.msra.mxu0 0.0
        %684 = vmatprep.subr.mxu0 0.0
        %685 = vmatpush1.msra.mxu0 0.0
        %686 = vmatprep.subr.mxu0 0.0
        %687 = vmatpush1.msra.mxu0 0.0
        %688 = vmatprep.subr.mxu0 0.0
        %689 = vmatpush1.msra.mxu0 0.0
        %690 = vmatprep.mubr.f32.mxu0 0.0
        %691 = vmatmul.mubr.f32.gmra.mrb[0].mxu0 %v579
        %v692 = vpop.f32.mrb[0].mxu0
        %v693 = vadd.f32 0.0, %v692
        %v694 = vpop.f32.mrb[0].mxu0
        %695 = vmatprep.mubr.f32.mxu0 0.0
        %696 = vmatmul.mubr.f32.gmra.mrb[0].mxu0 %v582
        %v697 = vpop.f32.mrb[0].mxu0
        %v698 = vadd.f32 0.0, %v697
        %v699 = vpop.f32.mrb[0].mxu0
        %700 = vmatprep.mubr.f32.mxu0 0.0
        %701 = vmatmul.mubr.f32.gmra.mrb[0].mxu0 %v585
        %v702 = vpop.f32.mrb[0].mxu0
        %v703 = vadd.f32 0.0, %v702
        %v704 = vpop.f32.mrb[0].mxu0
        %705 = vmatprep.mubr.f32.mxu0 0.0
        %706 = vmatmul.mubr.f32.gmra.mrb[0].mxu0 %v588
        %v707 = vpop.f32.mrb[0].mxu0
        %v708 = vadd.f32 0.0, %v707
        %v709 = vpop.f32.mrb[0].mxu0
        %710 = vmatprep.mubr.f32.mxu0 0.0
        %711 = vmatmul.mubr.f32.gmra.mrb[0].mxu0 %v591
        %v712 = vpop.f32.mrb[0].mxu0
        %v713 = vadd.f32 0.0, %v712
        %v714 = vpop.f32.mrb[0].mxu0
        %715 = vmatprep.mubr.f32.mxu0 0.0
        %716 = vmatmul.mubr.f32.gmra.mrb[0].mxu0 %v594
        %v717 = vpop.f32.mrb[0].mxu0
        %v718 = vadd.f32 0.0, %v717
        %v719 = vpop.f32.mrb[0].mxu0
        %720 = vmatprep.mubr.f32.mxu0 0.0
        %721 = vmatmul.mubr.f32.gmra.mrb[0].mxu0 %v597
        %v722 = vpop.f32.mrb[0].mxu0
        %v723 = vadd.f32 0.0, %v722
        %v724 = vpop.f32.mrb[0].mxu0
        %725 = vmatprep.mubr.f32.mxu0 0.0
        %726 = vmatmul.mubr.f32.gmra.mrb[0].mxu0 %v600
        %v727 = vpop.f32.mrb[0].mxu0
        %v728 = vadd.f32 0.0, %v727
        %v729 = vpop.f32.mrb[0].mxu0
        %730 = vmatprep.mubr.f32.mxu0 0.0
        %731 = vmatmul.mubr.f32.gmra.mrb[0].mxu0 %v603
        %v732 = vpop.f32.mrb[0].mxu0
        %v733 = vadd.f32 0.0, %v732
        %v734 = vpop.f32.mrb[0].mxu0
        %735 = vmatprep.mubr.f32.mxu0 0.0
        %736 = vmatmul.mubr.f32.gmra.mrb[0].mxu0 %v606
        %v737 = vpop.f32.mrb[0].mxu0
        %v738 = vadd.f32 0.0, %v737
        %v739 = vpop.f32.mrb[0].mxu0
        %740 = vmatprep.mubr.f32.mxu0 0.0
        %741 = vmatmul.mubr.f32.gmra.mrb[0].mxu0 %v609
        %v742 = vpop.f32.mrb[0].mxu0
        %v743 = vadd.f32 0.0, %v742
        %v744 = vpop.f32.mrb[0].mxu0
        %745 = vmatprep.mubr.f32.mxu0 0.0
        %746 = vmatmul.mubr.f32.gmra.mrb[0].mxu0 %v612
        %v747 = vpop.f32.mrb[0].mxu0
        %v748 = vadd.f32 0.0, %v747
        %v749 = vpop.f32.mrb[0].mxu0
        %750 = vmatprep.mubr.f32.mxu0 0.0
        %751 = vmatmul.mubr.f32.gmra.mrb[0].mxu0 %v615
        %v752 = vpop.f32.mrb[0].mxu0
        %v753 = vadd.f32 0.0, %v752
        %v754 = vpop.f32.mrb[0].mxu0
        %755 = vmatprep.mubr.f32.mxu0 0.0
        %756 = vmatmul.mubr.f32.gmra.mrb[0].mxu0 %v618
        %v757 = vpop.f32.mrb[0].mxu0
        %v758 = vadd.f32 0.0, %v757
        %v759 = vpop.f32.mrb[0].mxu0
        %760 = vmatprep.mubr.f32.mxu0 0.0
        %761 = vmatmul.mubr.f32.gmra.mrb[0].mxu0 %v621
        %v762 = vpop.f32.mrb[0].mxu0
        %v763 = vadd.f32 0.0, %v762
        %v764 = vpop.f32.mrb[0].mxu0
        %765 = vmatprep.mubr.f32.mxu0 0.0
        %766 = vmatmul.mubr.f32.gmra.mrb[0].mxu0 %v624
        %v767 = vpop.f32.mrb[0].mxu0
        %v768 = vadd.f32 0.0, %v767
        %v769 = vpop.f32.mrb[0].mxu0
        %770 = vdwg.mxu0
        %775 = vrot.lane.b32.xlu0 %v693, 96
        %v776 = vpop.permute.xlu0 %775
        %777 = vrot.lane.b32.xlu0 %v698, 96
        %v778 = vpop.permute.xlu0 %777
        %779 = vrot.lane.b32.xlu0 %v703, 96
        %v780 = vpop.permute.xlu0 %779
        %781 = vrot.lane.b32.xlu0 %v708, 96
        %v782 = vpop.permute.xlu0 %781
        %vm783 = vcmask 64512
        %v784 = vsel %vm783, %v693, 0
        %v786 = vsel %vm783, %v698, 0
        %v788 = vsel %vm783, %v703, 0
        %v790 = vsel %vm783, %v708, 0
        %v792 = vsel %vm783, %v776, 0
        %v794 = vsel %vm783, %v778, 0
        %v796 = vsel %vm783, %v780, 0
        %v798 = vsel %vm783, %v782, 0
        %800 = vmatprep.subr.mxu0 0.0
        %801 = vmatpush1.xpose.msra.mxu0 %v792
        %802 = vmatprep.subr.mxu0 0.0
        %803 = vmatpush1.xpose.msra.mxu0 %v794
        %804 = vmatprep.subr.mxu0 0.0
        %805 = vmatpush1.xpose.msra.mxu0 %v796
        %806 = vmatprep.subr.mxu0 0.0
        %807 = vmatpush1.xpose.msra.mxu0 %v798
        %808 = vmatprep.subr.mxu0 0.0
        %809 = vmatpush1.xpose.msra.mxu0 0.0
        %810 = vmatprep.subr.mxu0 0.0
        %811 = vmatpush1.xpose.msra.mxu0 0.0
        %812 = vmatprep.subr.mxu0 0.0
        %813 = vmatpush1.xpose.msra.mxu0 0.0
        %814 = vmatprep.subr.mxu0 0.0
        %815 = vmatpush1.xpose.msra.mxu0 0.0
        %816 = vmatprep.subr.mxu0 0.0
        %817 = vmatpush1.xpose.msra.mxu0 0.0
        %818 = vmatprep.subr.mxu0 0.0
        %819 = vmatpush1.xpose.msra.mxu0 0.0
        %820 = vmatprep.subr.mxu0 0.0
        %821 = vmatpush1.xpose.msra.mxu0 0.0
        %822 = vmatprep.subr.mxu0 0.0
        %823 = vmatpush1.xpose.msra.mxu0 0.0
        %824 = vmatprep.subr.mxu0 0.0
        %825 = vmatpush1.xpose.msra.mxu0 0.0
        %826 = vmatprep.subr.mxu0 0.0
        %827 = vmatpush1.xpose.msra.mxu0 0.0
        %828 = vmatprep.subr.mxu0 0.0
        %829 = vmatpush1.xpose.msra.mxu0 0.0
        %830 = vmatprep.subr.mxu0 0.0
        %831 = vmatpush1.xpose.msra.mxu0 0.0
        %832 = vmatprep.subr.mxu0 0.0
        %833 = vmatpush1.xpose.msra.mxu0 0.0
        %834 = vmatprep.subr.mxu0 0.0
        %835 = vmatpush1.xpose.msra.mxu0 0.0
        %836 = vmatprep.subr.mxu0 0.0
        %837 = vmatpush1.xpose.msra.mxu0 0.0
        %838 = vmatprep.subr.mxu0 0.0
        %839 = vmatpush1.xpose.msra.mxu0 0.0
        %840 = vmatprep.subr.mxu0 0.0
        %841 = vmatpush1.xpose.msra.mxu0 0.0
        %842 = vmatprep.subr.mxu0 0.0
        %843 = vmatpush1.xpose.msra.mxu0 0.0
        %844 = vmatprep.subr.mxu0 0.0
        %845 = vmatpush1.xpose.msra.mxu0 0.0
        %846 = vmatprep.subr.mxu0 0.0
        %847 = vmatpush1.xpose.msra.mxu0 0.0
        %848 = vmatprep.subr.mxu0 0.0
        %849 = vmatpush1.xpose.msra.mxu0 0.0
        %850 = vmatprep.subr.mxu0 0.0
        %851 = vmatpush1.xpose.msra.mxu0 0.0
        %852 = vmatprep.subr.mxu0 0.0
        %853 = vmatpush1.xpose.msra.mxu0 0.0
        %854 = vmatprep.subr.mxu0 0.0
        %855 = vmatpush1.xpose.msra.mxu0 0.0
        %856 = vmatprep.subr.mxu0 0.0
        %857 = vmatpush1.xpose.msra.mxu0 0.0
        %858 = vmatprep.subr.mxu0 0.0
        %859 = vmatpush1.xpose.msra.mxu0 0.0
        %860 = vmatprep.subr.mxu0 0.0
        %861 = vmatpush1.xpose.msra.mxu0 0.0
        %862 = vmatprep.subr.mxu0 0.0
        %863 = vmatpush1.xpose.msra.mxu0 0.0
        %864 = vmatprep.mubr.f32.mxu0 0.0
        %865 = vmatmul.mubr.f32.gmra.mrb[0].mxu0 %v784
        %v866 = vpop.f32.mrb[0].mxu0
        %v867 = vadd.f32 0.0, %v866
        %v868 = vpop.f32.mrb[0].mxu0
        %869 = vmatprep.mubr.f32.mxu0 0.0
        %870 = vmatmul.mubr.f32.gmra.mrb[0].mxu0 %v786
        %v871 = vpop.f32.mrb[0].mxu0
        %v872 = vadd.f32 0.0, %v871
        %v873 = vpop.f32.mrb[0].mxu0
        %874 = vmatprep.mubr.f32.mxu0 0.0
        %875 = vmatmul.mubr.f32.gmra.mrb[0].mxu0 %v788
        %v876 = vpop.f32.mrb[0].mxu0
        %v877 = vadd.f32 0.0, %v876
        %v878 = vpop.f32.mrb[0].mxu0
        %879 = vmatprep.mubr.f32.mxu0 0.0
        %880 = vmatmul.mubr.f32.gmra.mrb[0].mxu0 %v790
        %v881 = vpop.f32.mrb[0].mxu0
        %v882 = vadd.f32 0.0, %v881
        %v883 = vpop.f32.mrb[0].mxu0
        %884 = vdwg.mxu0
        %889 = vrot.lane.b32.xlu0 %v713, 96
        %v890 = vpop.permute.xlu0 %889
        %891 = vrot.lane.b32.xlu0 %v718, 96
        %v892 = vpop.permute.xlu0 %891
        %893 = vrot.lane.b32.xlu0 %v723, 96
        %v894 = vpop.permute.xlu0 %893
        %895 = vrot.lane.b32.xlu0 %v728, 96
        %v896 = vpop.permute.xlu0 %895
        %v897 = vsel %vm783, %v713, 0
        %v899 = vsel %vm783, %v718, 0
        %v901 = vsel %vm783, %v723, 0
        %v903 = vsel %vm783, %v728, 0
        %v905 = vsel %vm783, %v890, 0
        %v907 = vsel %vm783, %v892, 0
        %v909 = vsel %vm783, %v894, 0
        %v911 = vsel %vm783, %v896, 0
        %913 = vmatprep.subr.mxu0 0.0
        %914 = vmatpush1.xpose.msra.mxu0 %v905
        %915 = vmatprep.subr.mxu0 0.0
        %916 = vmatpush1.xpose.msra.mxu0 %v907
        %917 = vmatprep.subr.mxu0 0.0
        %918 = vmatpush1.xpose.msra.mxu0 %v909
        %919 = vmatprep.subr.mxu0 0.0
        %920 = vmatpush1.xpose.msra.mxu0 %v911
        %921 = vmatprep.subr.mxu0 0.0
        %922 = vmatpush1.xpose.msra.mxu0 0.0
        %923 = vmatprep.subr.mxu0 0.0
        %924 = vmatpush1.xpose.msra.mxu0 0.0
        %925 = vmatprep.subr.mxu0 0.0
        %926 = vmatpush1.xpose.msra.mxu0 0.0
        %927 = vmatprep.subr.mxu0 0.0
        %928 = vmatpush1.xpose.msra.mxu0 0.0
        %929 = vmatprep.subr.mxu0 0.0
        %930 = vmatpush1.xpose.msra.mxu0 0.0
        %931 = vmatprep.subr.mxu0 0.0
        %932 = vmatpush1.xpose.msra.mxu0 0.0
        %933 = vmatprep.subr.mxu0 0.0
        %934 = vmatpush1.xpose.msra.mxu0 0.0
        %935 = vmatprep.subr.mxu0 0.0
        %936 = vmatpush1.xpose.msra.mxu0 0.0
        %937 = vmatprep.subr.mxu0 0.0
        %938 = vmatpush1.xpose.msra.mxu0 0.0
        %939 = vmatprep.subr.mxu0 0.0
        %940 = vmatpush1.xpose.msra.mxu0 0.0
        %941 = vmatprep.subr.mxu0 0.0
        %942 = vmatpush1.xpose.msra.mxu0 0.0
        %943 = vmatprep.subr.mxu0 0.0
        %944 = vmatpush1.xpose.msra.mxu0 0.0
        %945 = vmatprep.subr.mxu0 0.0
        %946 = vmatpush1.xpose.msra.mxu0 0.0
        %947 = vmatprep.subr.mxu0 0.0
        %948 = vmatpush1.xpose.msra.mxu0 0.0
        %949 = vmatprep.subr.mxu0 0.0
        %950 = vmatpush1.xpose.msra.mxu0 0.0
        %951 = vmatprep.subr.mxu0 0.0
        %952 = vmatpush1.xpose.msra.mxu0 0.0
        %953 = vmatprep.subr.mxu0 0.0
        %954 = vmatpush1.xpose.msra.mxu0 0.0
        %955 = vmatprep.subr.mxu0 0.0
        %956 = vmatpush1.xpose.msra.mxu0 0.0
        %957 = vmatprep.subr.mxu0 0.0
        %958 = vmatpush1.xpose.msra.mxu0 0.0
        %959 = vmatprep.subr.mxu0 0.0
        %960 = vmatpush1.xpose.msra.mxu0 0.0
        %961 = vmatprep.subr.mxu0 0.0
        %962 = vmatpush1.xpose.msra.mxu0 0.0
        %963 = vmatprep.subr.mxu0 0.0
        %964 = vmatpush1.xpose.msra.mxu0 0.0
        %965 = vmatprep.subr.mxu0 0.0
        %966 = vmatpush1.xpose.msra.mxu0 0.0
        %967 = vmatprep.subr.mxu0 0.0
        %968 = vmatpush1.xpose.msra.mxu0 0.0
        %969 = vmatprep.subr.mxu0 0.0
        %970 = vmatpush1.xpose.msra.mxu0 0.0
        %971 = vmatprep.subr.mxu0 0.0
        %972 = vmatpush1.xpose.msra.mxu0 0.0
        %973 = vmatprep.subr.mxu0 0.0
        %974 = vmatpush1.xpose.msra.mxu0 0.0
        %975 = vmatprep.subr.mxu0 0.0
        %976 = vmatpush1.xpose.msra.mxu0 0.0
        %977 = vmatprep.mubr.f32.mxu0 0.0
        %978 = vmatmul.mubr.f32.gmra.mrb[0].mxu0 %v897
        %v979 = vpop.f32.mrb[0].mxu0
        %v980 = vadd.f32 0.0, %v979
        %v981 = vpop.f32.mrb[0].mxu0
        %982 = vmatprep.mubr.f32.mxu0 0.0
        %983 = vmatmul.mubr.f32.gmra.mrb[0].mxu0 %v899
        %v984 = vpop.f32.mrb[0].mxu0
        %v985 = vadd.f32 0.0, %v984
        %v986 = vpop.f32.mrb[0].mxu0
        %987 = vmatprep.mubr.f32.mxu0 0.0
        %988 = vmatmul.mubr.f32.gmra.mrb[0].mxu0 %v901
        %v989 = vpop.f32.mrb[0].mxu0
        %v990 = vadd.f32 0.0, %v989
        %v991 = vpop.f32.mrb[0].mxu0
        %992 = vmatprep.mubr.f32.mxu0 0.0
        %993 = vmatmul.mubr.f32.gmra.mrb[0].mxu0 %v903
        %v994 = vpop.f32.mrb[0].mxu0
        %v995 = vadd.f32 0.0, %v994
        %v996 = vpop.f32.mrb[0].mxu0
        %997 = vdwg.mxu0
        %1002 = vrot.lane.b32.xlu0 %v733, 96
        %v1003 = vpop.permute.xlu0 %1002
        %1004 = vrot.lane.b32.xlu0 %v738, 96
        %v1005 = vpop.permute.xlu0 %1004
        %1006 = vrot.lane.b32.xlu0 %v743, 96
        %v1007 = vpop.permute.xlu0 %1006
        %1008 = vrot.lane.b32.xlu0 %v748, 96
        %v1009 = vpop.permute.xlu0 %1008
        %v1010 = vsel %vm783, %v733, 0
        %v1012 = vsel %vm783, %v738, 0
        %v1014 = vsel %vm783, %v743, 0
        %v1016 = vsel %vm783, %v748, 0
        %v1018 = vsel %vm783, %v1003, 0
        %v1020 = vsel %vm783, %v1005, 0
        %v1022 = vsel %vm783, %v1007, 0
        %v1024 = vsel %vm783, %v1009, 0
        %1026 = vmatprep.subr.mxu0 0.0
        %1027 = vmatpush1.xpose.msra.mxu0 %v1018
        %1028 = vmatprep.subr.mxu0 0.0
        %1029 = vmatpush1.xpose.msra.mxu0 %v1020
        %1030 = vmatprep.subr.mxu0 0.0
        %1031 = vmatpush1.xpose.msra.mxu0 %v1022
        %1032 = vmatprep.subr.mxu0 0.0
        %1033 = vmatpush1.xpose.msra.mxu0 %v1024
        %1034 = vmatprep.subr.mxu0 0.0
        %1035 = vmatpush1.xpose.msra.mxu0 0.0
        %1036 = vmatprep.subr.mxu0 0.0
        %1037 = vmatpush1.xpose.msra.mxu0 0.0
        %1038 = vmatprep.subr.mxu0 0.0
        %1039 = vmatpush1.xpose.msra.mxu0 0.0
        %1040 = vmatprep.subr.mxu0 0.0
        %1041 = vmatpush1.xpose.msra.mxu0 0.0
        %1042 = vmatprep.subr.mxu0 0.0
        %1043 = vmatpush1.xpose.msra.mxu0 0.0
        %1044 = vmatprep.subr.mxu0 0.0
        %1045 = vmatpush1.xpose.msra.mxu0 0.0
        %1046 = vmatprep.subr.mxu0 0.0
        %1047 = vmatpush1.xpose.msra.mxu0 0.0
        %1048 = vmatprep.subr.mxu0 0.0
        %1049 = vmatpush1.xpose.msra.mxu0 0.0
        %1050 = vmatprep.subr.mxu0 0.0
        %1051 = vmatpush1.xpose.msra.mxu0 0.0
        %1052 = vmatprep.subr.mxu0 0.0
        %1053 = vmatpush1.xpose.msra.mxu0 0.0
        %1054 = vmatprep.subr.mxu0 0.0
        %1055 = vmatpush1.xpose.msra.mxu0 0.0
        %1056 = vmatprep.subr.mxu0 0.0
        %1057 = vmatpush1.xpose.msra.mxu0 0.0
        %1058 = vmatprep.subr.mxu0 0.0
        %1059 = vmatpush1.xpose.msra.mxu0 0.0
        %1060 = vmatprep.subr.mxu0 0.0
        %1061 = vmatpush1.xpose.msra.mxu0 0.0
        %1062 = vmatprep.subr.mxu0 0.0
        %1063 = vmatpush1.xpose.msra.mxu0 0.0
        %1064 = vmatprep.subr.mxu0 0.0
        %1065 = vmatpush1.xpose.msra.mxu0 0.0
        %1066 = vmatprep.subr.mxu0 0.0
        %1067 = vmatpush1.xpose.msra.mxu0 0.0
        %1068 = vmatprep.subr.mxu0 0.0
        %1069 = vmatpush1.xpose.msra.mxu0 0.0
        %1070 = vmatprep.subr.mxu0 0.0
        %1071 = vmatpush1.xpose.msra.mxu0 0.0
        %1072 = vmatprep.subr.mxu0 0.0
        %1073 = vmatpush1.xpose.msra.mxu0 0.0
        %1074 = vmatprep.subr.mxu0 0.0
        %1075 = vmatpush1.xpose.msra.mxu0 0.0
        %1076 = vmatprep.subr.mxu0 0.0
        %1077 = vmatpush1.xpose.msra.mxu0 0.0
        %1078 = vmatprep.subr.mxu0 0.0
        %1079 = vmatpush1.xpose.msra.mxu0 0.0
        %1080 = vmatprep.subr.mxu0 0.0
        %1081 = vmatpush1.xpose.msra.mxu0 0.0
        %1082 = vmatprep.subr.mxu0 0.0
        %1083 = vmatpush1.xpose.msra.mxu0 0.0
        %1084 = vmatprep.subr.mxu0 0.0
        %1085 = vmatpush1.xpose.msra.mxu0 0.0
        %1086 = vmatprep.subr.mxu0 0.0
        %1087 = vmatpush1.xpose.msra.mxu0 0.0
        %1088 = vmatprep.subr.mxu0 0.0
        %1089 = vmatpush1.xpose.msra.mxu0 0.0
        %1090 = vmatprep.mubr.f32.mxu0 0.0
        %1091 = vmatmul.mubr.f32.gmra.mrb[0].mxu0 %v1010
        %v1092 = vpop.f32.mrb[0].mxu0
        %v1093 = vadd.f32 0.0, %v1092
        %v1094 = vpop.f32.mrb[0].mxu0
        %1095 = vmatprep.mubr.f32.mxu0 0.0
        %1096 = vmatmul.mubr.f32.gmra.mrb[0].mxu0 %v1012
        %v1097 = vpop.f32.mrb[0].mxu0
        %v1098 = vadd.f32 0.0, %v1097
        %v1099 = vpop.f32.mrb[0].mxu0
        %1100 = vmatprep.mubr.f32.mxu0 0.0
        %1101 = vmatmul.mubr.f32.gmra.mrb[0].mxu0 %v1014
        %v1102 = vpop.f32.mrb[0].mxu0
        %v1103 = vadd.f32 0.0, %v1102
        %v1104 = vpop.f32.mrb[0].mxu0
        %1105 = vmatprep.mubr.f32.mxu0 0.0
        %1106 = vmatmul.mubr.f32.gmra.mrb[0].mxu0 %v1016
        %v1107 = vpop.f32.mrb[0].mxu0
        %v1108 = vadd.f32 0.0, %v1107
        %v1109 = vpop.f32.mrb[0].mxu0
        %1110 = vdwg.mxu0
        %1115 = vrot.lane.b32.xlu0 %v753, 96
        %v1116 = vpop.permute.xlu0 %1115
        %1117 = vrot.lane.b32.xlu0 %v758, 96
        %v1118 = vpop.permute.xlu0 %1117
        %1119 = vrot.lane.b32.xlu0 %v763, 96
        %v1120 = vpop.permute.xlu0 %1119
        %1121 = vrot.lane.b32.xlu0 %v768, 96
        %v1122 = vpop.permute.xlu0 %1121
        %v1123 = vsel %vm783, %v753, 0
        %v1125 = vsel %vm783, %v758, 0
        %v1127 = vsel %vm783, %v763, 0
        %v1129 = vsel %vm783, %v768, 0
        %v1131 = vsel %vm783, %v1116, 0
        %v1133 = vsel %vm783, %v1118, 0
        %v1135 = vsel %vm783, %v1120, 0
        %v1137 = vsel %vm783, %v1122, 0
        %1139 = vmatprep.subr.mxu0 0.0
        %1140 = vmatpush1.xpose.msra.mxu0 %v1131
        %1141 = vmatprep.subr.mxu0 0.0
        %1142 = vmatpush1.xpose.msra.mxu0 %v1133
        %1143 = vmatprep.subr.mxu0 0.0
        %1144 = vmatpush1.xpose.msra.mxu0 %v1135
        %1145 = vmatprep.subr.mxu0 0.0
        %1146 = vmatpush1.xpose.msra.mxu0 %v1137
        %1147 = vmatprep.subr.mxu0 0.0
        %1148 = vmatpush1.xpose.msra.mxu0 0.0
        %1149 = vmatprep.subr.mxu0 0.0
        %1150 = vmatpush1.xpose.msra.mxu0 0.0
        %1151 = vmatprep.subr.mxu0 0.0
        %1152 = vmatpush1.xpose.msra.mxu0 0.0
        %1153 = vmatprep.subr.mxu0 0.0
        %1154 = vmatpush1.xpose.msra.mxu0 0.0
        %1155 = vmatprep.subr.mxu0 0.0
        %1156 = vmatpush1.xpose.msra.mxu0 0.0
        %1157 = vmatprep.subr.mxu0 0.0
        %1158 = vmatpush1.xpose.msra.mxu0 0.0
        %1159 = vmatprep.subr.mxu0 0.0
        %1160 = vmatpush1.xpose.msra.mxu0 0.0
        %1161 = vmatprep.subr.mxu0 0.0
        %1162 = vmatpush1.xpose.msra.mxu0 0.0
        %1163 = vmatprep.subr.mxu0 0.0
        %1164 = vmatpush1.xpose.msra.mxu0 0.0
        %1165 = vmatprep.subr.mxu0 0.0
        %1166 = vmatpush1.xpose.msra.mxu0 0.0
        %1167 = vmatprep.subr.mxu0 0.0
        %1168 = vmatpush1.xpose.msra.mxu0 0.0
        %1169 = vmatprep.subr.mxu0 0.0
        %1170 = vmatpush1.xpose.msra.mxu0 0.0
        %1171 = vmatprep.subr.mxu0 0.0
        %1172 = vmatpush1.xpose.msra.mxu0 0.0
        %1173 = vmatprep.subr.mxu0 0.0
        %1174 = vmatpush1.xpose.msra.mxu0 0.0
        %1175 = vmatprep.subr.mxu0 0.0
        %1176 = vmatpush1.xpose.msra.mxu0 0.0
        %1177 = vmatprep.subr.mxu0 0.0
        %1178 = vmatpush1.xpose.msra.mxu0 0.0
        %1179 = vmatprep.subr.mxu0 0.0
        %1180 = vmatpush1.xpose.msra.mxu0 0.0
        %1181 = vmatprep.subr.mxu0 0.0
        %1182 = vmatpush1.xpose.msra.mxu0 0.0
        %1183 = vmatprep.subr.mxu0 0.0
        %1184 = vmatpush1.xpose.msra.mxu0 0.0
        %1185 = vmatprep.subr.mxu0 0.0
        %1186 = vmatpush1.xpose.msra.mxu0 0.0
        %1187 = vmatprep.subr.mxu0 0.0
        %1188 = vmatpush1.xpose.msra.mxu0 0.0
        %1189 = vmatprep.subr.mxu0 0.0
        %1190 = vmatpush1.xpose.msra.mxu0 0.0
        %1191 = vmatprep.subr.mxu0 0.0
        %1192 = vmatpush1.xpose.msra.mxu0 0.0
        %1193 = vmatprep.subr.mxu0 0.0
        %1194 = vmatpush1.xpose.msra.mxu0 0.0
        %1195 = vmatprep.subr.mxu0 0.0
        %1196 = vmatpush1.xpose.msra.mxu0 0.0
        %1197 = vmatprep.subr.mxu0 0.0
        %1198 = vmatpush1.xpose.msra.mxu0 0.0
        %1199 = vmatprep.subr.mxu0 0.0
        %1200 = vmatpush1.xpose.msra.mxu0 0.0
        %1201 = vmatprep.subr.mxu0 0.0
        %1202 = vmatpush1.xpose.msra.mxu0 0.0
        %1203 = vmatprep.mubr.f32.mxu0 0.0
        %1204 = vmatmul.mubr.f32.gmra.mrb[0].mxu0 %v1123
        %v1205 = vpop.f32.mrb[0].mxu0
        %v1206 = vadd.f32 0.0, %v1205
        %v1207 = vpop.f32.mrb[0].mxu0
        %1208 = vmatprep.mubr.f32.mxu0 0.0
        %1209 = vmatmul.mubr.f32.gmra.mrb[0].mxu0 %v1125
        %v1210 = vpop.f32.mrb[0].mxu0
        %v1211 = vadd.f32 0.0, %v1210
        %v1212 = vpop.f32.mrb[0].mxu0
        %1213 = vmatprep.mubr.f32.mxu0 0.0
        %1214 = vmatmul.mubr.f32.gmra.mrb[0].mxu0 %v1127
        %v1215 = vpop.f32.mrb[0].mxu0
        %v1216 = vadd.f32 0.0, %v1215
        %v1217 = vpop.f32.mrb[0].mxu0
        %1218 = vmatprep.mubr.f32.mxu0 0.0
        %1219 = vmatmul.mubr.f32.gmra.mrb[0].mxu0 %v1129
        %v1220 = vpop.f32.mrb[0].mxu0
        %v1221 = vadd.f32 0.0, %v1220
        %v1222 = vpop.f32.mrb[0].mxu0
        %1223 = vdwg.mxu0
        %v1224 = vmul.f32 %v867, 0.35355338
        %v1225 = vmul.f32 %v872, 0.35355338
        %v1226 = vmul.f32 %v877, 0.35355338
        %v1227 = vmul.f32 %v882, 0.35355338
        %v1228 = vmul.f32 %v980, 0.35355338
        %v1229 = vmul.f32 %v985, 0.35355338
        %v1230 = vmul.f32 %v990, 0.35355338
        %v1231 = vmul.f32 %v995, 0.35355338
        %v1232 = vmul.f32 %v1093, 0.35355338
        %v1233 = vmul.f32 %v1098, 0.35355338
        %v1234 = vmul.f32 %v1103, 0.35355338
        %v1235 = vmul.f32 %v1108, 0.35355338
        %v1236 = vmul.f32 %v1206, 0.35355338
        %v1237 = vmul.f32 %v1211, 0.35355338
        %v1238 = vmul.f32 %v1216, 0.35355338
        %v1239 = vmul.f32 %v1221, 0.35355338
        %v1240 = vsel %vm318, %v1224, -inf
        %1241 = vmax.xlane.f32.xlu0 %v1240
        %v1242 = vpop.xlane.xlu0 %1241
        %v1243 = vsel %vm318, %v1225, -inf
        %1244 = vmax.xlane.f32.xlu0 %v1243
        %v1245 = vpop.xlane.xlu0 %1244
        %v1246 = vsel %vm318, %v1226, -inf
        %1247 = vmax.xlane.f32.xlu0 %v1246
        %v1248 = vpop.xlane.xlu0 %1247
        %v1249 = vsel %vm318, %v1227, -inf
        %1250 = vmax.xlane.f32.xlu0 %v1249
        %v1251 = vpop.xlane.xlu0 %1250
        %v1252 = vsel %vm318, %v1228, -inf
        %1253 = vmax.xlane.f32.xlu0 %v1252
        %v1254 = vpop.xlane.xlu0 %1253
        %v1255 = vsel %vm318, %v1229, -inf
        %1256 = vmax.xlane.f32.xlu0 %v1255
        %v1257 = vpop.xlane.xlu0 %1256
        %v1258 = vsel %vm318, %v1230, -inf
        %1259 = vmax.xlane.f32.xlu0 %v1258
        %v1260 = vpop.xlane.xlu0 %1259
        %v1261 = vsel %vm318, %v1231, -inf
        %1262 = vmax.xlane.f32.xlu0 %v1261
        %v1263 = vpop.xlane.xlu0 %1262
        %v1264 = vsel %vm318, %v1232, -inf
        %1265 = vmax.xlane.f32.xlu0 %v1264
        %v1266 = vpop.xlane.xlu0 %1265
        %v1267 = vsel %vm318, %v1233, -inf
        %1268 = vmax.xlane.f32.xlu0 %v1267
        %v1269 = vpop.xlane.xlu0 %1268
        %v1270 = vsel %vm318, %v1234, -inf
        %1271 = vmax.xlane.f32.xlu0 %v1270
        %v1272 = vpop.xlane.xlu0 %1271
        %v1273 = vsel %vm318, %v1235, -inf
        %1274 = vmax.xlane.f32.xlu0 %v1273
        %v1275 = vpop.xlane.xlu0 %1274
        %v1276 = vsel %vm318, %v1236, -inf
        %1277 = vmax.xlane.f32.xlu0 %v1276
        %v1278 = vpop.xlane.xlu0 %1277
        %v1279 = vsel %vm318, %v1237, -inf
        %1280 = vmax.xlane.f32.xlu0 %v1279
        %v1281 = vpop.xlane.xlu0 %1280
        %v1282 = vsel %vm318, %v1238, -inf
        %1283 = vmax.xlane.f32.xlu0 %v1282
        %v1284 = vpop.xlane.xlu0 %1283
        %v1285 = vsel %vm318, %v1239, -inf
        %1286 = vmax.xlane.f32.xlu0 %v1285
        %v1287 = vpop.xlane.xlu0 %1286
        %v1288 = vsub.f32 %v1224, %v1242
        %v1289 = vsub.f32 %v1225, %v1245
        %v1290 = vsub.f32 %v1226, %v1248
        %v1291 = vsub.f32 %v1227, %v1251
        %v1292 = vsub.f32 %v1228, %v1254
        %v1293 = vsub.f32 %v1229, %v1257
        %v1294 = vsub.f32 %v1230, %v1260
        %v1295 = vsub.f32 %v1231, %v1263
        %v1296 = vsub.f32 %v1232, %v1266
        %v1297 = vsub.f32 %v1233, %v1269
        %v1298 = vsub.f32 %v1234, %v1272
        %v1299 = vsub.f32 %v1235, %v1275
        %v1300 = vsub.f32 %v1236, %v1278
        %v1301 = vsub.f32 %v1237, %v1281
        %v1302 = vsub.f32 %v1238, %v1284
        %v1303 = vsub.f32 %v1239, %v1287
        %v1304 = vmul.f32 %v1288, 1.442695
        %v1305 = vpow.pop %v1304
        %v1306 = vmul.f32 %v1289, 1.442695
        %v1307 = vpow.pop %v1306
        %v1308 = vmul.f32 %v1290, 1.442695
        %v1309 = vpow.pop %v1308
        %v1310 = vmul.f32 %v1291, 1.442695
        %v1311 = vpow.pop %v1310
        %v1312 = vmul.f32 %v1292, 1.442695
        %v1313 = vpow.pop %v1312
        %v1314 = vmul.f32 %v1293, 1.442695
        %v1315 = vpow.pop %v1314
        %v1316 = vmul.f32 %v1294, 1.442695
        %v1317 = vpow.pop %v1316
        %v1318 = vmul.f32 %v1295, 1.442695
        %v1319 = vpow.pop %v1318
        %v1320 = vmul.f32 %v1296, 1.442695
        %v1321 = vpow.pop %v1320
        %v1322 = vmul.f32 %v1297, 1.442695
        %v1323 = vpow.pop %v1322
        %v1324 = vmul.f32 %v1298, 1.442695
        %v1325 = vpow.pop %v1324
        %v1326 = vmul.f32 %v1299, 1.442695
        %v1327 = vpow.pop %v1326
        %v1328 = vmul.f32 %v1300, 1.442695
        %v1329 = vpow.pop %v1328
        %v1330 = vmul.f32 %v1301, 1.442695
        %v1331 = vpow.pop %v1330
        %v1332 = vmul.f32 %v1302, 1.442695
        %v1333 = vpow.pop %v1332
        %v1334 = vmul.f32 %v1303, 1.442695
        %v1335 = vpow.pop %v1334
        %v1336 = vsel %vm318, %v1305, 0.0
        %1337 = vadd.xlane.f32.xlu0 %v1336
        %v1338 = vpop.xlane.xlu0 %1337
        %v1339 = vsel %vm318, %v1307, 0.0
        %1340 = vadd.xlane.f32.xlu0 %v1339
        %v1341 = vpop.xlane.xlu0 %1340
        %v1342 = vsel %vm318, %v1309, 0.0
        %1343 = vadd.xlane.f32.xlu0 %v1342
        %v1344 = vpop.xlane.xlu0 %1343
        %v1345 = vsel %vm318, %v1311, 0.0
        %1346 = vadd.xlane.f32.xlu0 %v1345
        %v1347 = vpop.xlane.xlu0 %1346
        %v1348 = vsel %vm318, %v1313, 0.0
        %1349 = vadd.xlane.f32.xlu0 %v1348
        %v1350 = vpop.xlane.xlu0 %1349
        %v1351 = vsel %vm318, %v1315, 0.0
        %1352 = vadd.xlane.f32.xlu0 %v1351
        %v1353 = vpop.xlane.xlu0 %1352
        %v1354 = vsel %vm318, %v1317, 0.0
        %1355 = vadd.xlane.f32.xlu0 %v1354
        %v1356 = vpop.xlane.xlu0 %1355
        %v1357 = vsel %vm318, %v1319, 0.0
        %1358 = vadd.xlane.f32.xlu0 %v1357
        %v1359 = vpop.xlane.xlu0 %1358
        %v1360 = vsel %vm318, %v1321, 0.0
        %1361 = vadd.xlane.f32.xlu0 %v1360
        %v1362 = vpop.xlane.xlu0 %1361
        %v1363 = vsel %vm318, %v1323, 0.0
        %1364 = vadd.xlane.f32.xlu0 %v1363
        %v1365 = vpop.xlane.xlu0 %1364
        %v1366 = vsel %vm318, %v1325, 0.0
        %1367 = vadd.xlane.f32.xlu0 %v1366
        %v1368 = vpop.xlane.xlu0 %1367
        %v1369 = vsel %vm318, %v1327, 0.0
        %1370 = vadd.xlane.f32.xlu0 %v1369
        %v1371 = vpop.xlane.xlu0 %1370
        %v1372 = vsel %vm318, %v1329, 0.0
        %1373 = vadd.xlane.f32.xlu0 %v1372
        %v1374 = vpop.xlane.xlu0 %1373
        %v1375 = vsel %vm318, %v1331, 0.0
        %1376 = vadd.xlane.f32.xlu0 %v1375
        %v1377 = vpop.xlane.xlu0 %1376
        %v1378 = vsel %vm318, %v1333, 0.0
        %1379 = vadd.xlane.f32.xlu0 %v1378
        %v1380 = vpop.xlane.xlu0 %1379
        %v1381 = vsel %vm318, %v1335, 0.0
        %1382 = vadd.xlane.f32.xlu0 %v1381
        %v1383 = vpop.xlane.xlu0 %1382
        %v1384 = vrcp.pop %v1338
        %v1385 = vrcp.pop %v1341
        %v1386 = vrcp.pop %v1344
        %v1387 = vrcp.pop %v1347
        %v1388 = vrcp.pop %v1350
        %v1389 = vrcp.pop %v1353
        %v1390 = vrcp.pop %v1356
        %v1391 = vrcp.pop %v1359
        %v1392 = vrcp.pop %v1362
        %v1393 = vrcp.pop %v1365
        %v1394 = vrcp.pop %v1368
        %v1395 = vrcp.pop %v1371
        %v1396 = vrcp.pop %v1374
        %v1397 = vrcp.pop %v1377
        %v1398 = vrcp.pop %v1380
        %v1399 = vrcp.pop %v1383
        %v1400 = vmul.f32 %v1338, %v1384
        %v1401 = vmul.f32 %v1341, %v1385
        %v1402 = vmul.f32 %v1344, %v1386
        %v1403 = vmul.f32 %v1347, %v1387
        %v1404 = vmul.f32 %v1350, %v1388
        %v1405 = vmul.f32 %v1353, %v1389
        %v1406 = vmul.f32 %v1356, %v1390
        %v1407 = vmul.f32 %v1359, %v1391
        %v1408 = vmul.f32 %v1362, %v1392
        %v1409 = vmul.f32 %v1365, %v1393
        %v1410 = vmul.f32 %v1368, %v1394
        %v1411 = vmul.f32 %v1371, %v1395
        %v1412 = vmul.f32 %v1374, %v1396
        %v1413 = vmul.f32 %v1377, %v1397
        %v1414 = vmul.f32 %v1380, %v1398
        %v1415 = vmul.f32 %v1383, %v1399
        %v1416 = vsub.f32 2.0, %v1400
        %v1417 = vsub.f32 2.0, %v1401
        %v1418 = vsub.f32 2.0, %v1402
        %v1419 = vsub.f32 2.0, %v1403
        %v1420 = vsub.f32 2.0, %v1404
        %v1421 = vsub.f32 2.0, %v1405
        %v1422 = vsub.f32 2.0, %v1406
        %v1423 = vsub.f32 2.0, %v1407
        %v1424 = vsub.f32 2.0, %v1408
        %v1425 = vsub.f32 2.0, %v1409
        %v1426 = vsub.f32 2.0, %v1410
        %v1427 = vsub.f32 2.0, %v1411
        %v1428 = vsub.f32 2.0, %v1412
        %v1429 = vsub.f32 2.0, %v1413
        %v1430 = vsub.f32 2.0, %v1414
        %v1431 = vsub.f32 2.0, %v1415
        %v1432 = vmul.f32 %v1384, %v1416
        %v1433 = vmul.f32 %v1385, %v1417
        %v1434 = vmul.f32 %v1386, %v1418
        %v1435 = vmul.f32 %v1387, %v1419
        %v1436 = vmul.f32 %v1388, %v1420
        %v1437 = vmul.f32 %v1389, %v1421
        %v1438 = vmul.f32 %v1390, %v1422
        %v1439 = vmul.f32 %v1391, %v1423
        %v1440 = vmul.f32 %v1392, %v1424
        %v1441 = vmul.f32 %v1393, %v1425
        %v1442 = vmul.f32 %v1394, %v1426
        %v1443 = vmul.f32 %v1395, %v1427
        %v1444 = vmul.f32 %v1396, %v1428
        %v1445 = vmul.f32 %v1397, %v1429
        %v1446 = vmul.f32 %v1398, %v1430
        %v1447 = vmul.f32 %v1399, %v1431
        %v1448 = vmul.f32 %v1305, %v1432
        %v1449 = vmul.f32 %v1307, %v1433
        %v1450 = vmul.f32 %v1309, %v1434
        %v1451 = vmul.f32 %v1311, %v1435
        %v1452 = vmul.f32 %v1313, %v1436
        %v1453 = vmul.f32 %v1315, %v1437
        %v1454 = vmul.f32 %v1317, %v1438
        %v1455 = vmul.f32 %v1319, %v1439
        %v1456 = vmul.f32 %v1321, %v1440
        %v1457 = vmul.f32 %v1323, %v1441
        %v1458 = vmul.f32 %v1325, %v1442
        %v1459 = vmul.f32 %v1327, %v1443
        %v1460 = vmul.f32 %v1329, %v1444
        %v1461 = vmul.f32 %v1331, %v1445
        %v1462 = vmul.f32 %v1333, %v1446
        %v1463 = vmul.f32 %v1335, %v1447
        %1464 = vrot.lane.b32.xlu0 %v693, 64
        %v1465 = vpop.permute.xlu0 %1464
        %1466 = vrot.lane.b32.xlu0 %v698, 64
        %v1467 = vpop.permute.xlu0 %1466
        %1468 = vrot.lane.b32.xlu0 %v703, 64
        %v1469 = vpop.permute.xlu0 %1468
        %1470 = vrot.lane.b32.xlu0 %v708, 64
        %v1471 = vpop.permute.xlu0 %1470
        %v1477 = vsel %vm318, %v1448, 0
        %v1480 = vsel %vm318, %v1449, 0
        %v1483 = vsel %vm318, %v1450, 0
        %v1486 = vsel %vm318, %v1451, 0
        %1488 = vmatprep.subr.mxu0 0.0
        %1489 = vmatpush1.msra.mxu0 %v1465
        %1490 = vmatprep.subr.mxu0 0.0
        %1491 = vmatpush1.msra.mxu0 %v1467
        %1492 = vmatprep.subr.mxu0 0.0
        %1493 = vmatpush1.msra.mxu0 %v1469
        %1494 = vmatprep.subr.mxu0 0.0
        %1495 = vmatpush1.msra.mxu0 %v1471
        %1496 = vmatprep.subr.mxu0 0.0
        %1497 = vmatpush1.msra.mxu0 0.0
        %1498 = vmatprep.subr.mxu0 0.0
        %1499 = vmatpush1.msra.mxu0 0.0
        %1500 = vmatprep.subr.mxu0 0.0
        %1501 = vmatpush1.msra.mxu0 0.0
        %1502 = vmatprep.subr.mxu0 0.0
        %1503 = vmatpush1.msra.mxu0 0.0
        %1504 = vmatprep.subr.mxu0 0.0
        %1505 = vmatpush1.msra.mxu0 0.0
        %1506 = vmatprep.subr.mxu0 0.0
        %1507 = vmatpush1.msra.mxu0 0.0
        %1508 = vmatprep.subr.mxu0 0.0
        %1509 = vmatpush1.msra.mxu0 0.0
        %1510 = vmatprep.subr.mxu0 0.0
        %1511 = vmatpush1.msra.mxu0 0.0
        %1512 = vmatprep.subr.mxu0 0.0
        %1513 = vmatpush1.msra.mxu0 0.0
        %1514 = vmatprep.subr.mxu0 0.0
        %1515 = vmatpush1.msra.mxu0 0.0
        %1516 = vmatprep.subr.mxu0 0.0
        %1517 = vmatpush1.msra.mxu0 0.0
        %1518 = vmatprep.subr.mxu0 0.0
        %1519 = vmatpush1.msra.mxu0 0.0
        %1520 = vmatprep.subr.mxu0 0.0
        %1521 = vmatpush1.msra.mxu0 0.0
        %1522 = vmatprep.subr.mxu0 0.0
        %1523 = vmatpush1.msra.mxu0 0.0
        %1524 = vmatprep.subr.mxu0 0.0
        %1525 = vmatpush1.msra.mxu0 0.0
        %1526 = vmatprep.subr.mxu0 0.0
        %1527 = vmatpush1.msra.mxu0 0.0
        %1528 = vmatprep.subr.mxu0 0.0
        %1529 = vmatpush1.msra.mxu0 0.0
        %1530 = vmatprep.subr.mxu0 0.0
        %1531 = vmatpush1.msra.mxu0 0.0
        %1532 = vmatprep.subr.mxu0 0.0
        %1533 = vmatpush1.msra.mxu0 0.0
        %1534 = vmatprep.subr.mxu0 0.0
        %1535 = vmatpush1.msra.mxu0 0.0
        %1536 = vmatprep.subr.mxu0 0.0
        %1537 = vmatpush1.msra.mxu0 0.0
        %1538 = vmatprep.subr.mxu0 0.0
        %1539 = vmatpush1.msra.mxu0 0.0
        %1540 = vmatprep.subr.mxu0 0.0
        %1541 = vmatpush1.msra.mxu0 0.0
        %1542 = vmatprep.subr.mxu0 0.0
        %1543 = vmatpush1.msra.mxu0 0.0
        %1544 = vmatprep.subr.mxu0 0.0
        %1545 = vmatpush1.msra.mxu0 0.0
        %1546 = vmatprep.subr.mxu0 0.0
        %1547 = vmatpush1.msra.mxu0 0.0
        %1548 = vmatprep.subr.mxu0 0.0
        %1549 = vmatpush1.msra.mxu0 0.0
        %1550 = vmatprep.subr.mxu0 0.0
        %1551 = vmatpush1.msra.mxu0 0.0
        %1552 = vmatprep.mubr.f32.mxu0 0.0
        %1553 = vmatmul.mubr.f32.gmra.mrb[0].mxu0 %v1477
        %v1554 = vpop.f32.mrb[0].mxu0
        %v1555 = vadd.f32 0.0, %v1554
        %v1556 = vpop.f32.mrb[0].mxu0
        %1557 = vmatprep.mubr.f32.mxu0 0.0
        %1558 = vmatmul.mubr.f32.gmra.mrb[0].mxu0 %v1480
        %v1559 = vpop.f32.mrb[0].mxu0
        %v1560 = vadd.f32 0.0, %v1559
        %v1561 = vpop.f32.mrb[0].mxu0
        %1562 = vmatprep.mubr.f32.mxu0 0.0
        %1563 = vmatmul.mubr.f32.gmra.mrb[0].mxu0 %v1483
        %v1564 = vpop.f32.mrb[0].mxu0
        %v1565 = vadd.f32 0.0, %v1564
        %v1566 = vpop.f32.mrb[0].mxu0
        %1567 = vmatprep.mubr.f32.mxu0 0.0
        %1568 = vmatmul.mubr.f32.gmra.mrb[0].mxu0 %v1486
        %v1569 = vpop.f32.mrb[0].mxu0
        %v1570 = vadd.f32 0.0, %v1569
        %v1571 = vpop.f32.mrb[0].mxu0
        %1572 = vdwg.mxu0
        %1573 = vrot.lane.b32.xlu0 %v713, 64
        %v1574 = vpop.permute.xlu0 %1573
        %1575 = vrot.lane.b32.xlu0 %v718, 64
        %v1576 = vpop.permute.xlu0 %1575
        %1577 = vrot.lane.b32.xlu0 %v723, 64
        %v1578 = vpop.permute.xlu0 %1577
        %1579 = vrot.lane.b32.xlu0 %v728, 64
        %v1580 = vpop.permute.xlu0 %1579
        %v1586 = vsel %vm318, %v1452, 0
        %v1589 = vsel %vm318, %v1453, 0
        %v1592 = vsel %vm318, %v1454, 0
        %v1595 = vsel %vm318, %v1455, 0
        %1597 = vmatprep.subr.mxu0 0.0
        %1598 = vmatpush1.msra.mxu0 %v1574
        %1599 = vmatprep.subr.mxu0 0.0
        %1600 = vmatpush1.msra.mxu0 %v1576
        %1601 = vmatprep.subr.mxu0 0.0
        %1602 = vmatpush1.msra.mxu0 %v1578
        %1603 = vmatprep.subr.mxu0 0.0
        %1604 = vmatpush1.msra.mxu0 %v1580
        %1605 = vmatprep.subr.mxu0 0.0
        %1606 = vmatpush1.msra.mxu0 0.0
        %1607 = vmatprep.subr.mxu0 0.0
        %1608 = vmatpush1.msra.mxu0 0.0
        %1609 = vmatprep.subr.mxu0 0.0
        %1610 = vmatpush1.msra.mxu0 0.0
        %1611 = vmatprep.subr.mxu0 0.0
        %1612 = vmatpush1.msra.mxu0 0.0
        %1613 = vmatprep.subr.mxu0 0.0
        %1614 = vmatpush1.msra.mxu0 0.0
        %1615 = vmatprep.subr.mxu0 0.0
        %1616 = vmatpush1.msra.mxu0 0.0
        %1617 = vmatprep.subr.mxu0 0.0
        %1618 = vmatpush1.msra.mxu0 0.0
        %1619 = vmatprep.subr.mxu0 0.0
        %1620 = vmatpush1.msra.mxu0 0.0
        %1621 = vmatprep.subr.mxu0 0.0
        %1622 = vmatpush1.msra.mxu0 0.0
        %1623 = vmatprep.subr.mxu0 0.0
        %1624 = vmatpush1.msra.mxu0 0.0
        %1625 = vmatprep.subr.mxu0 0.0
        %1626 = vmatpush1.msra.mxu0 0.0
        %1627 = vmatprep.subr.mxu0 0.0
        %1628 = vmatpush1.msra.mxu0 0.0
        %1629 = vmatprep.subr.mxu0 0.0
        %1630 = vmatpush1.msra.mxu0 0.0
        %1631 = vmatprep.subr.mxu0 0.0
        %1632 = vmatpush1.msra.mxu0 0.0
        %1633 = vmatprep.subr.mxu0 0.0
        %1634 = vmatpush1.msra.mxu0 0.0
        %1635 = vmatprep.subr.mxu0 0.0
        %1636 = vmatpush1.msra.mxu0 0.0
        %1637 = vmatprep.subr.mxu0 0.0
        %1638 = vmatpush1.msra.mxu0 0.0
        %1639 = vmatprep.subr.mxu0 0.0
        %1640 = vmatpush1.msra.mxu0 0.0
        %1641 = vmatprep.subr.mxu0 0.0
        %1642 = vmatpush1.msra.mxu0 0.0
        %1643 = vmatprep.subr.mxu0 0.0
        %1644 = vmatpush1.msra.mxu0 0.0
        %1645 = vmatprep.subr.mxu0 0.0
        %1646 = vmatpush1.msra.mxu0 0.0
        %1647 = vmatprep.subr.mxu0 0.0
        %1648 = vmatpush1.msra.mxu0 0.0
        %1649 = vmatprep.subr.mxu0 0.0
        %1650 = vmatpush1.msra.mxu0 0.0
        %1651 = vmatprep.subr.mxu0 0.0
        %1652 = vmatpush1.msra.mxu0 0.0
        %1653 = vmatprep.subr.mxu0 0.0
        %1654 = vmatpush1.msra.mxu0 0.0
        %1655 = vmatprep.subr.mxu0 0.0
        %1656 = vmatpush1.msra.mxu0 0.0
        %1657 = vmatprep.subr.mxu0 0.0
        %1658 = vmatpush1.msra.mxu0 0.0
        %1659 = vmatprep.subr.mxu0 0.0
        %1660 = vmatpush1.msra.mxu0 0.0
        %1661 = vmatprep.mubr.f32.mxu0 0.0
        %1662 = vmatmul.mubr.f32.gmra.mrb[0].mxu0 %v1586
        %v1663 = vpop.f32.mrb[0].mxu0
        %v1664 = vadd.f32 0.0, %v1663
        %v1665 = vpop.f32.mrb[0].mxu0
        %1666 = vmatprep.mubr.f32.mxu0 0.0
        %1667 = vmatmul.mubr.f32.gmra.mrb[0].mxu0 %v1589
        %v1668 = vpop.f32.mrb[0].mxu0
        %v1669 = vadd.f32 0.0, %v1668
        %v1670 = vpop.f32.mrb[0].mxu0
        %1671 = vmatprep.mubr.f32.mxu0 0.0
        %1672 = vmatmul.mubr.f32.gmra.mrb[0].mxu0 %v1592
        %v1673 = vpop.f32.mrb[0].mxu0
        %v1674 = vadd.f32 0.0, %v1673
        %v1675 = vpop.f32.mrb[0].mxu0
        %1676 = vmatprep.mubr.f32.mxu0 0.0
        %1677 = vmatmul.mubr.f32.gmra.mrb[0].mxu0 %v1595
        %v1678 = vpop.f32.mrb[0].mxu0
        %v1679 = vadd.f32 0.0, %v1678
        %v1680 = vpop.f32.mrb[0].mxu0
        %1681 = vdwg.mxu0
        %1682 = vrot.lane.b32.xlu0 %v733, 64
        %v1683 = vpop.permute.xlu0 %1682
        %1684 = vrot.lane.b32.xlu0 %v738, 64
        %v1685 = vpop.permute.xlu0 %1684
        %1686 = vrot.lane.b32.xlu0 %v743, 64
        %v1687 = vpop.permute.xlu0 %1686
        %1688 = vrot.lane.b32.xlu0 %v748, 64
        %v1689 = vpop.permute.xlu0 %1688
        %v1695 = vsel %vm318, %v1456, 0
        %v1698 = vsel %vm318, %v1457, 0
        %v1701 = vsel %vm318, %v1458, 0
        %v1704 = vsel %vm318, %v1459, 0
        %1706 = vmatprep.subr.mxu0 0.0
        %1707 = vmatpush1.msra.mxu0 %v1683
        %1708 = vmatprep.subr.mxu0 0.0
        %1709 = vmatpush1.msra.mxu0 %v1685
        %1710 = vmatprep.subr.mxu0 0.0
        %1711 = vmatpush1.msra.mxu0 %v1687
        %1712 = vmatprep.subr.mxu0 0.0
        %1713 = vmatpush1.msra.mxu0 %v1689
        %1714 = vmatprep.subr.mxu0 0.0
        %1715 = vmatpush1.msra.mxu0 0.0
        %1716 = vmatprep.subr.mxu0 0.0
        %1717 = vmatpush1.msra.mxu0 0.0
        %1718 = vmatprep.subr.mxu0 0.0
        %1719 = vmatpush1.msra.mxu0 0.0
        %1720 = vmatprep.subr.mxu0 0.0
        %1721 = vmatpush1.msra.mxu0 0.0
        %1722 = vmatprep.subr.mxu0 0.0
        %1723 = vmatpush1.msra.mxu0 0.0
        %1724 = vmatprep.subr.mxu0 0.0
        %1725 = vmatpush1.msra.mxu0 0.0
        %1726 = vmatprep.subr.mxu0 0.0
        %1727 = vmatpush1.msra.mxu0 0.0
        %1728 = vmatprep.subr.mxu0 0.0
        %1729 = vmatpush1.msra.mxu0 0.0
        %1730 = vmatprep.subr.mxu0 0.0
        %1731 = vmatpush1.msra.mxu0 0.0
        %1732 = vmatprep.subr.mxu0 0.0
        %1733 = vmatpush1.msra.mxu0 0.0
        %1734 = vmatprep.subr.mxu0 0.0
        %1735 = vmatpush1.msra.mxu0 0.0
        %1736 = vmatprep.subr.mxu0 0.0
        %1737 = vmatpush1.msra.mxu0 0.0
        %1738 = vmatprep.subr.mxu0 0.0
        %1739 = vmatpush1.msra.mxu0 0.0
        %1740 = vmatprep.subr.mxu0 0.0
        %1741 = vmatpush1.msra.mxu0 0.0
        %1742 = vmatprep.subr.mxu0 0.0
        %1743 = vmatpush1.msra.mxu0 0.0
        %1744 = vmatprep.subr.mxu0 0.0
        %1745 = vmatpush1.msra.mxu0 0.0
        %1746 = vmatprep.subr.mxu0 0.0
        %1747 = vmatpush1.msra.mxu0 0.0
        %1748 = vmatprep.subr.mxu0 0.0
        %1749 = vmatpush1.msra.mxu0 0.0
        %1750 = vmatprep.subr.mxu0 0.0
        %1751 = vmatpush1.msra.mxu0 0.0
        %1752 = vmatprep.subr.mxu0 0.0
        %1753 = vmatpush1.msra.mxu0 0.0
        %1754 = vmatprep.subr.mxu0 0.0
        %1755 = vmatpush1.msra.mxu0 0.0
        %1756 = vmatprep.subr.mxu0 0.0
        %1757 = vmatpush1.msra.mxu0 0.0
        %1758 = vmatprep.subr.mxu0 0.0
        %1759 = vmatpush1.msra.mxu0 0.0
        %1760 = vmatprep.subr.mxu0 0.0
        %1761 = vmatpush1.msra.mxu0 0.0
        %1762 = vmatprep.subr.mxu0 0.0
        %1763 = vmatpush1.msra.mxu0 0.0
        %1764 = vmatprep.subr.mxu0 0.0
        %1765 = vmatpush1.msra.mxu0 0.0
        %1766 = vmatprep.subr.mxu0 0.0
        %1767 = vmatpush1.msra.mxu0 0.0
        %1768 = vmatprep.subr.mxu0 0.0
        %1769 = vmatpush1.msra.mxu0 0.0
        %1770 = vmatprep.mubr.f32.mxu0 0.0
        %1771 = vmatmul.mubr.f32.gmra.mrb[0].mxu0 %v1695
        %v1772 = vpop.f32.mrb[0].mxu0
        %v1773 = vadd.f32 0.0, %v1772
        %v1774 = vpop.f32.mrb[0].mxu0
        %1775 = vmatprep.mubr.f32.mxu0 0.0
        %1776 = vmatmul.mubr.f32.gmra.mrb[0].mxu0 %v1698
        %v1777 = vpop.f32.mrb[0].mxu0
        %v1778 = vadd.f32 0.0, %v1777
        %v1779 = vpop.f32.mrb[0].mxu0
        %1780 = vmatprep.mubr.f32.mxu0 0.0
        %1781 = vmatmul.mubr.f32.gmra.mrb[0].mxu0 %v1701
        %v1782 = vpop.f32.mrb[0].mxu0
        %v1783 = vadd.f32 0.0, %v1782
        %v1784 = vpop.f32.mrb[0].mxu0
        %1785 = vmatprep.mubr.f32.mxu0 0.0
        %1786 = vmatmul.mubr.f32.gmra.mrb[0].mxu0 %v1704
        %v1787 = vpop.f32.mrb[0].mxu0
        %v1788 = vadd.f32 0.0, %v1787
        %v1789 = vpop.f32.mrb[0].mxu0
        %1790 = vdwg.mxu0
        %1791 = vrot.lane.b32.xlu0 %v753, 64
        %v1792 = vpop.permute.xlu0 %1791
        %1793 = vrot.lane.b32.xlu0 %v758, 64
        %v1794 = vpop.permute.xlu0 %1793
        %1795 = vrot.lane.b32.xlu0 %v763, 64
        %v1796 = vpop.permute.xlu0 %1795
        %1797 = vrot.lane.b32.xlu0 %v768, 64
        %v1798 = vpop.permute.xlu0 %1797
        %v1804 = vsel %vm318, %v1460, 0
        %v1807 = vsel %vm318, %v1461, 0
        %v1810 = vsel %vm318, %v1462, 0
        %v1813 = vsel %vm318, %v1463, 0
        %1815 = vmatprep.subr.mxu0 0.0
        %1816 = vmatpush1.msra.mxu0 %v1792
        %1817 = vmatprep.subr.mxu0 0.0
        %1818 = vmatpush1.msra.mxu0 %v1794
        %1819 = vmatprep.subr.mxu0 0.0
        %1820 = vmatpush1.msra.mxu0 %v1796
        %1821 = vmatprep.subr.mxu0 0.0
        %1822 = vmatpush1.msra.mxu0 %v1798
        %1823 = vmatprep.subr.mxu0 0.0
        %1824 = vmatpush1.msra.mxu0 0.0
        %1825 = vmatprep.subr.mxu0 0.0
        %1826 = vmatpush1.msra.mxu0 0.0
        %1827 = vmatprep.subr.mxu0 0.0
        %1828 = vmatpush1.msra.mxu0 0.0
        %1829 = vmatprep.subr.mxu0 0.0
        %1830 = vmatpush1.msra.mxu0 0.0
        %1831 = vmatprep.subr.mxu0 0.0
        %1832 = vmatpush1.msra.mxu0 0.0
        %1833 = vmatprep.subr.mxu0 0.0
        %1834 = vmatpush1.msra.mxu0 0.0
        %1835 = vmatprep.subr.mxu0 0.0
        %1836 = vmatpush1.msra.mxu0 0.0
        %1837 = vmatprep.subr.mxu0 0.0
        %1838 = vmatpush1.msra.mxu0 0.0
        %1839 = vmatprep.subr.mxu0 0.0
        %1840 = vmatpush1.msra.mxu0 0.0
        %1841 = vmatprep.subr.mxu0 0.0
        %1842 = vmatpush1.msra.mxu0 0.0
        %1843 = vmatprep.subr.mxu0 0.0
        %1844 = vmatpush1.msra.mxu0 0.0
        %1845 = vmatprep.subr.mxu0 0.0
        %1846 = vmatpush1.msra.mxu0 0.0
        %1847 = vmatprep.subr.mxu0 0.0
        %1848 = vmatpush1.msra.mxu0 0.0
        %1849 = vmatprep.subr.mxu0 0.0
        %1850 = vmatpush1.msra.mxu0 0.0
        %1851 = vmatprep.subr.mxu0 0.0
        %1852 = vmatpush1.msra.mxu0 0.0
        %1853 = vmatprep.subr.mxu0 0.0
        %1854 = vmatpush1.msra.mxu0 0.0
        %1855 = vmatprep.subr.mxu0 0.0
        %1856 = vmatpush1.msra.mxu0 0.0
        %1857 = vmatprep.subr.mxu0 0.0
        %1858 = vmatpush1.msra.mxu0 0.0
        %1859 = vmatprep.subr.mxu0 0.0
        %1860 = vmatpush1.msra.mxu0 0.0
        %1861 = vmatprep.subr.mxu0 0.0
        %1862 = vmatpush1.msra.mxu0 0.0
        %1863 = vmatprep.subr.mxu0 0.0
        %1864 = vmatpush1.msra.mxu0 0.0
        %1865 = vmatprep.subr.mxu0 0.0
        %1866 = vmatpush1.msra.mxu0 0.0
        %1867 = vmatprep.subr.mxu0 0.0
        %1868 = vmatpush1.msra.mxu0 0.0
        %1869 = vmatprep.subr.mxu0 0.0
        %1870 = vmatpush1.msra.mxu0 0.0
        %1871 = vmatprep.subr.mxu0 0.0
        %1872 = vmatpush1.msra.mxu0 0.0
        %1873 = vmatprep.subr.mxu0 0.0
        %1874 = vmatpush1.msra.mxu0 0.0
        %1875 = vmatprep.subr.mxu0 0.0
        %1876 = vmatpush1.msra.mxu0 0.0
        %1877 = vmatprep.subr.mxu0 0.0
        %1878 = vmatpush1.msra.mxu0 0.0
        %1879 = vmatprep.mubr.f32.mxu0 0.0
        %1880 = vmatmul.mubr.f32.gmra.mrb[0].mxu0 %v1804
        %v1881 = vpop.f32.mrb[0].mxu0
        %v1882 = vadd.f32 0.0, %v1881
        %v1883 = vpop.f32.mrb[0].mxu0
        %1884 = vmatprep.mubr.f32.mxu0 0.0
        %1885 = vmatmul.mubr.f32.gmra.mrb[0].mxu0 %v1807
        %v1886 = vpop.f32.mrb[0].mxu0
        %v1887 = vadd.f32 0.0, %v1886
        %v1888 = vpop.f32.mrb[0].mxu0
        %1889 = vmatprep.mubr.f32.mxu0 0.0
        %1890 = vmatmul.mubr.f32.gmra.mrb[0].mxu0 %v1810
        %v1891 = vpop.f32.mrb[0].mxu0
        %v1892 = vadd.f32 0.0, %v1891
        %v1893 = vpop.f32.mrb[0].mxu0
        %1894 = vmatprep.mubr.f32.mxu0 0.0
        %1895 = vmatmul.mubr.f32.gmra.mrb[0].mxu0 %v1813
        %v1896 = vpop.f32.mrb[0].mxu0
        %v1897 = vadd.f32 0.0, %v1896
        %v1898 = vpop.f32.mrb[0].mxu0
        %1899 = vdwg.mxu0
        %1900 = vrot.lane.b32.xlu0 %v693, 120
        %v1901 = vpop.permute.xlu0 %1900
        %1902 = vrot.lane.b32.xlu0 %v698, 120
        %v1903 = vpop.permute.xlu0 %1902
        %1904 = vrot.lane.b32.xlu0 %v703, 120
        %v1905 = vpop.permute.xlu0 %1904
        %1906 = vrot.lane.b32.xlu0 %v708, 120
        %v1907 = vpop.permute.xlu0 %1906
        %1908 = vrot.lane.b32.xlu0 %v693, 88
        %v1909 = vpop.permute.xlu0 %1908
        %1910 = vrot.lane.b32.xlu0 %v698, 88
        %v1911 = vpop.permute.xlu0 %1910
        %1912 = vrot.lane.b32.xlu0 %v703, 88
        %v1913 = vpop.permute.xlu0 %1912
        %1914 = vrot.lane.b32.xlu0 %v708, 88
        %v1915 = vpop.permute.xlu0 %1914
        %v1916 = vsel %vm783, %v1901, 0
        %v1918 = vsel %vm783, %v1903, 0
        %v1920 = vsel %vm783, %v1905, 0
        %v1922 = vsel %vm783, %v1907, 0
        %v1924 = vsel %vm783, %v1909, 0
        %v1926 = vsel %vm783, %v1911, 0
        %v1928 = vsel %vm783, %v1913, 0
        %v1930 = vsel %vm783, %v1915, 0
        %1932 = vmatprep.subr.mxu0 0.0
        %1933 = vmatpush1.xpose.msra.mxu0 %v1924
        %1934 = vmatprep.subr.mxu0 0.0
        %1935 = vmatpush1.xpose.msra.mxu0 %v1926
        %1936 = vmatprep.subr.mxu0 0.0
        %1937 = vmatpush1.xpose.msra.mxu0 %v1928
        %1938 = vmatprep.subr.mxu0 0.0
        %1939 = vmatpush1.xpose.msra.mxu0 %v1930
        %1940 = vmatprep.subr.mxu0 0.0
        %1941 = vmatpush1.xpose.msra.mxu0 0.0
        %1942 = vmatprep.subr.mxu0 0.0
        %1943 = vmatpush1.xpose.msra.mxu0 0.0
        %1944 = vmatprep.subr.mxu0 0.0
        %1945 = vmatpush1.xpose.msra.mxu0 0.0
        %1946 = vmatprep.subr.mxu0 0.0
        %1947 = vmatpush1.xpose.msra.mxu0 0.0
        %1948 = vmatprep.subr.mxu0 0.0
        %1949 = vmatpush1.xpose.msra.mxu0 0.0
        %1950 = vmatprep.subr.mxu0 0.0
        %1951 = vmatpush1.xpose.msra.mxu0 0.0
        %1952 = vmatprep.subr.mxu0 0.0
        %1953 = vmatpush1.xpose.msra.mxu0 0.0
        %1954 = vmatprep.subr.mxu0 0.0
        %1955 = vmatpush1.xpose.msra.mxu0 0.0
        %1956 = vmatprep.subr.mxu0 0.0
        %1957 = vmatpush1.xpose.msra.mxu0 0.0
        %1958 = vmatprep.subr.mxu0 0.0
        %1959 = vmatpush1.xpose.msra.mxu0 0.0
        %1960 = vmatprep.subr.mxu0 0.0
        %1961 = vmatpush1.xpose.msra.mxu0 0.0
        %1962 = vmatprep.subr.mxu0 0.0
        %1963 = vmatpush1.xpose.msra.mxu0 0.0
        %1964 = vmatprep.subr.mxu0 0.0
        %1965 = vmatpush1.xpose.msra.mxu0 0.0
        %1966 = vmatprep.subr.mxu0 0.0
        %1967 = vmatpush1.xpose.msra.mxu0 0.0
        %1968 = vmatprep.subr.mxu0 0.0
        %1969 = vmatpush1.xpose.msra.mxu0 0.0
        %1970 = vmatprep.subr.mxu0 0.0
        %1971 = vmatpush1.xpose.msra.mxu0 0.0
        %1972 = vmatprep.subr.mxu0 0.0
        %1973 = vmatpush1.xpose.msra.mxu0 0.0
        %1974 = vmatprep.subr.mxu0 0.0
        %1975 = vmatpush1.xpose.msra.mxu0 0.0
        %1976 = vmatprep.subr.mxu0 0.0
        %1977 = vmatpush1.xpose.msra.mxu0 0.0
        %1978 = vmatprep.subr.mxu0 0.0
        %1979 = vmatpush1.xpose.msra.mxu0 0.0
        %1980 = vmatprep.subr.mxu0 0.0
        %1981 = vmatpush1.xpose.msra.mxu0 0.0
        %1982 = vmatprep.subr.mxu0 0.0
        %1983 = vmatpush1.xpose.msra.mxu0 0.0
        %1984 = vmatprep.subr.mxu0 0.0
        %1985 = vmatpush1.xpose.msra.mxu0 0.0
        %1986 = vmatprep.subr.mxu0 0.0
        %1987 = vmatpush1.xpose.msra.mxu0 0.0
        %1988 = vmatprep.subr.mxu0 0.0
        %1989 = vmatpush1.xpose.msra.mxu0 0.0
        %1990 = vmatprep.subr.mxu0 0.0
        %1991 = vmatpush1.xpose.msra.mxu0 0.0
        %1992 = vmatprep.subr.mxu0 0.0
        %1993 = vmatpush1.xpose.msra.mxu0 0.0
        %1994 = vmatprep.subr.mxu0 0.0
        %1995 = vmatpush1.xpose.msra.mxu0 0.0
        %1996 = vmatprep.mubr.f32.mxu0 0.0
        %1997 = vmatmul.mubr.f32.gmra.mrb[0].mxu0 %v1916
        %v1998 = vpop.f32.mrb[0].mxu0
        %v1999 = vadd.f32 0.0, %v1998
        %v2000 = vpop.f32.mrb[0].mxu0
        %2001 = vmatprep.mubr.f32.mxu0 0.0
        %2002 = vmatmul.mubr.f32.gmra.mrb[0].mxu0 %v1918
        %v2003 = vpop.f32.mrb[0].mxu0
        %v2004 = vadd.f32 0.0, %v2003
        %v2005 = vpop.f32.mrb[0].mxu0
        %2006 = vmatprep.mubr.f32.mxu0 0.0
        %2007 = vmatmul.mubr.f32.gmra.mrb[0].mxu0 %v1920
        %v2008 = vpop.f32.mrb[0].mxu0
        %v2009 = vadd.f32 0.0, %v2008
        %v2010 = vpop.f32.mrb[0].mxu0
        %2011 = vmatprep.mubr.f32.mxu0 0.0
        %2012 = vmatmul.mubr.f32.gmra.mrb[0].mxu0 %v1922
        %v2013 = vpop.f32.mrb[0].mxu0
        %v2014 = vadd.f32 0.0, %v2013
        %v2015 = vpop.f32.mrb[0].mxu0
        %2016 = vdwg.mxu0
        %2017 = vrot.lane.b32.xlu0 %v713, 120
        %v2018 = vpop.permute.xlu0 %2017
        %2019 = vrot.lane.b32.xlu0 %v718, 120
        %v2020 = vpop.permute.xlu0 %2019
        %2021 = vrot.lane.b32.xlu0 %v723, 120
        %v2022 = vpop.permute.xlu0 %2021
        %2023 = vrot.lane.b32.xlu0 %v728, 120
        %v2024 = vpop.permute.xlu0 %2023
        %2025 = vrot.lane.b32.xlu0 %v713, 88
        %v2026 = vpop.permute.xlu0 %2025
        %2027 = vrot.lane.b32.xlu0 %v718, 88
        %v2028 = vpop.permute.xlu0 %2027
        %2029 = vrot.lane.b32.xlu0 %v723, 88
        %v2030 = vpop.permute.xlu0 %2029
        %2031 = vrot.lane.b32.xlu0 %v728, 88
        %v2032 = vpop.permute.xlu0 %2031
        %v2033 = vsel %vm783, %v2018, 0
        %v2035 = vsel %vm783, %v2020, 0
        %v2037 = vsel %vm783, %v2022, 0
        %v2039 = vsel %vm783, %v2024, 0
        %v2041 = vsel %vm783, %v2026, 0
        %v2043 = vsel %vm783, %v2028, 0
        %v2045 = vsel %vm783, %v2030, 0
        %v2047 = vsel %vm783, %v2032, 0
        %2049 = vmatprep.subr.mxu0 0.0
        %2050 = vmatpush1.xpose.msra.mxu0 %v2041
        %2051 = vmatprep.subr.mxu0 0.0
        %2052 = vmatpush1.xpose.msra.mxu0 %v2043
        %2053 = vmatprep.subr.mxu0 0.0
        %2054 = vmatpush1.xpose.msra.mxu0 %v2045
        %2055 = vmatprep.subr.mxu0 0.0
        %2056 = vmatpush1.xpose.msra.mxu0 %v2047
        %2057 = vmatprep.subr.mxu0 0.0
        %2058 = vmatpush1.xpose.msra.mxu0 0.0
        %2059 = vmatprep.subr.mxu0 0.0
        %2060 = vmatpush1.xpose.msra.mxu0 0.0
        %2061 = vmatprep.subr.mxu0 0.0
        %2062 = vmatpush1.xpose.msra.mxu0 0.0
        %2063 = vmatprep.subr.mxu0 0.0
        %2064 = vmatpush1.xpose.msra.mxu0 0.0
        %2065 = vmatprep.subr.mxu0 0.0
        %2066 = vmatpush1.xpose.msra.mxu0 0.0
        %2067 = vmatprep.subr.mxu0 0.0
        %2068 = vmatpush1.xpose.msra.mxu0 0.0
        %2069 = vmatprep.subr.mxu0 0.0
        %2070 = vmatpush1.xpose.msra.mxu0 0.0
        %2071 = vmatprep.subr.mxu0 0.0
        %2072 = vmatpush1.xpose.msra.mxu0 0.0
        %2073 = vmatprep.subr.mxu0 0.0
        %2074 = vmatpush1.xpose.msra.mxu0 0.0
        %2075 = vmatprep.subr.mxu0 0.0
        %2076 = vmatpush1.xpose.msra.mxu0 0.0
        %2077 = vmatprep.subr.mxu0 0.0
        %2078 = vmatpush1.xpose.msra.mxu0 0.0
        %2079 = vmatprep.subr.mxu0 0.0
        %2080 = vmatpush1.xpose.msra.mxu0 0.0
        %2081 = vmatprep.subr.mxu0 0.0
        %2082 = vmatpush1.xpose.msra.mxu0 0.0
        %2083 = vmatprep.subr.mxu0 0.0
        %2084 = vmatpush1.xpose.msra.mxu0 0.0
        %2085 = vmatprep.subr.mxu0 0.0
        %2086 = vmatpush1.xpose.msra.mxu0 0.0
        %2087 = vmatprep.subr.mxu0 0.0
        %2088 = vmatpush1.xpose.msra.mxu0 0.0
        %2089 = vmatprep.subr.mxu0 0.0
        %2090 = vmatpush1.xpose.msra.mxu0 0.0
        %2091 = vmatprep.subr.mxu0 0.0
        %2092 = vmatpush1.xpose.msra.mxu0 0.0
        %2093 = vmatprep.subr.mxu0 0.0
        %2094 = vmatpush1.xpose.msra.mxu0 0.0
        %2095 = vmatprep.subr.mxu0 0.0
        %2096 = vmatpush1.xpose.msra.mxu0 0.0
        %2097 = vmatprep.subr.mxu0 0.0
        %2098 = vmatpush1.xpose.msra.mxu0 0.0
        %2099 = vmatprep.subr.mxu0 0.0
        %2100 = vmatpush1.xpose.msra.mxu0 0.0
        %2101 = vmatprep.subr.mxu0 0.0
        %2102 = vmatpush1.xpose.msra.mxu0 0.0
        %2103 = vmatprep.subr.mxu0 0.0
        %2104 = vmatpush1.xpose.msra.mxu0 0.0
        %2105 = vmatprep.subr.mxu0 0.0
        %2106 = vmatpush1.xpose.msra.mxu0 0.0
        %2107 = vmatprep.subr.mxu0 0.0
        %2108 = vmatpush1.xpose.msra.mxu0 0.0
        %2109 = vmatprep.subr.mxu0 0.0
        %2110 = vmatpush1.xpose.msra.mxu0 0.0
        %2111 = vmatprep.subr.mxu0 0.0
        %2112 = vmatpush1.xpose.msra.mxu0 0.0
        %2113 = vmatprep.mubr.f32.mxu0 0.0
        %2114 = vmatmul.mubr.f32.gmra.mrb[0].mxu0 %v2033
        %v2115 = vpop.f32.mrb[0].mxu0
        %v2116 = vadd.f32 0.0, %v2115
        %v2117 = vpop.f32.mrb[0].mxu0
        %2118 = vmatprep.mubr.f32.mxu0 0.0
        %2119 = vmatmul.mubr.f32.gmra.mrb[0].mxu0 %v2035
        %v2120 = vpop.f32.mrb[0].mxu0
        %v2121 = vadd.f32 0.0, %v2120
        %v2122 = vpop.f32.mrb[0].mxu0
        %2123 = vmatprep.mubr.f32.mxu0 0.0
        %2124 = vmatmul.mubr.f32.gmra.mrb[0].mxu0 %v2037
        %v2125 = vpop.f32.mrb[0].mxu0
        %v2126 = vadd.f32 0.0, %v2125
        %v2127 = vpop.f32.mrb[0].mxu0
        %2128 = vmatprep.mubr.f32.mxu0 0.0
        %2129 = vmatmul.mubr.f32.gmra.mrb[0].mxu0 %v2039
        %v2130 = vpop.f32.mrb[0].mxu0
        %v2131 = vadd.f32 0.0, %v2130
        %v2132 = vpop.f32.mrb[0].mxu0
        %2133 = vdwg.mxu0
        %2134 = vrot.lane.b32.xlu0 %v733, 120
        %v2135 = vpop.permute.xlu0 %2134
        %2136 = vrot.lane.b32.xlu0 %v738, 120
        %v2137 = vpop.permute.xlu0 %2136
        %2138 = vrot.lane.b32.xlu0 %v743, 120
        %v2139 = vpop.permute.xlu0 %2138
        %2140 = vrot.lane.b32.xlu0 %v748, 120
        %v2141 = vpop.permute.xlu0 %2140
        %2142 = vrot.lane.b32.xlu0 %v733, 88
        %v2143 = vpop.permute.xlu0 %2142
        %2144 = vrot.lane.b32.xlu0 %v738, 88
        %v2145 = vpop.permute.xlu0 %2144
        %2146 = vrot.lane.b32.xlu0 %v743, 88
        %v2147 = vpop.permute.xlu0 %2146
        %2148 = vrot.lane.b32.xlu0 %v748, 88
        %v2149 = vpop.permute.xlu0 %2148
        %v2150 = vsel %vm783, %v2135, 0
        %v2152 = vsel %vm783, %v2137, 0
        %v2154 = vsel %vm783, %v2139, 0
        %v2156 = vsel %vm783, %v2141, 0
        %v2158 = vsel %vm783, %v2143, 0
        %v2160 = vsel %vm783, %v2145, 0
        %v2162 = vsel %vm783, %v2147, 0
        %v2164 = vsel %vm783, %v2149, 0
        %2166 = vmatprep.subr.mxu0 0.0
        %2167 = vmatpush1.xpose.msra.mxu0 %v2158
        %2168 = vmatprep.subr.mxu0 0.0
        %2169 = vmatpush1.xpose.msra.mxu0 %v2160
        %2170 = vmatprep.subr.mxu0 0.0
        %2171 = vmatpush1.xpose.msra.mxu0 %v2162
        %2172 = vmatprep.subr.mxu0 0.0
        %2173 = vmatpush1.xpose.msra.mxu0 %v2164
        %2174 = vmatprep.subr.mxu0 0.0
        %2175 = vmatpush1.xpose.msra.mxu0 0.0
        %2176 = vmatprep.subr.mxu0 0.0
        %2177 = vmatpush1.xpose.msra.mxu0 0.0
        %2178 = vmatprep.subr.mxu0 0.0
        %2179 = vmatpush1.xpose.msra.mxu0 0.0
        %2180 = vmatprep.subr.mxu0 0.0
        %2181 = vmatpush1.xpose.msra.mxu0 0.0
        %2182 = vmatprep.subr.mxu0 0.0
        %2183 = vmatpush1.xpose.msra.mxu0 0.0
        %2184 = vmatprep.subr.mxu0 0.0
        %2185 = vmatpush1.xpose.msra.mxu0 0.0
        %2186 = vmatprep.subr.mxu0 0.0
        %2187 = vmatpush1.xpose.msra.mxu0 0.0
        %2188 = vmatprep.subr.mxu0 0.0
        %2189 = vmatpush1.xpose.msra.mxu0 0.0
        %2190 = vmatprep.subr.mxu0 0.0
        %2191 = vmatpush1.xpose.msra.mxu0 0.0
        %2192 = vmatprep.subr.mxu0 0.0
        %2193 = vmatpush1.xpose.msra.mxu0 0.0
        %2194 = vmatprep.subr.mxu0 0.0
        %2195 = vmatpush1.xpose.msra.mxu0 0.0
        %2196 = vmatprep.subr.mxu0 0.0
        %2197 = vmatpush1.xpose.msra.mxu0 0.0
        %2198 = vmatprep.subr.mxu0 0.0
        %2199 = vmatpush1.xpose.msra.mxu0 0.0
        %2200 = vmatprep.subr.mxu0 0.0
        %2201 = vmatpush1.xpose.msra.mxu0 0.0
        %2202 = vmatprep.subr.mxu0 0.0
        %2203 = vmatpush1.xpose.msra.mxu0 0.0
        %2204 = vmatprep.subr.mxu0 0.0
        %2205 = vmatpush1.xpose.msra.mxu0 0.0
        %2206 = vmatprep.subr.mxu0 0.0
        %2207 = vmatpush1.xpose.msra.mxu0 0.0
        %2208 = vmatprep.subr.mxu0 0.0
        %2209 = vmatpush1.xpose.msra.mxu0 0.0
        %2210 = vmatprep.subr.mxu0 0.0
        %2211 = vmatpush1.xpose.msra.mxu0 0.0
        %2212 = vmatprep.subr.mxu0 0.0
        %2213 = vmatpush1.xpose.msra.mxu0 0.0
        %2214 = vmatprep.subr.mxu0 0.0
        %2215 = vmatpush1.xpose.msra.mxu0 0.0
        %2216 = vmatprep.subr.mxu0 0.0
        %2217 = vmatpush1.xpose.msra.mxu0 0.0
        %2218 = vmatprep.subr.mxu0 0.0
        %2219 = vmatpush1.xpose.msra.mxu0 0.0
        %2220 = vmatprep.subr.mxu0 0.0
        %2221 = vmatpush1.xpose.msra.mxu0 0.0
        %2222 = vmatprep.subr.mxu0 0.0
        %2223 = vmatpush1.xpose.msra.mxu0 0.0
        %2224 = vmatprep.subr.mxu0 0.0
        %2225 = vmatpush1.xpose.msra.mxu0 0.0
        %2226 = vmatprep.subr.mxu0 0.0
        %2227 = vmatpush1.xpose.msra.mxu0 0.0
        %2228 = vmatprep.subr.mxu0 0.0
        %2229 = vmatpush1.xpose.msra.mxu0 0.0
        %2230 = vmatprep.mubr.f32.mxu0 0.0
        %2231 = vmatmul.mubr.f32.gmra.mrb[0].mxu0 %v2150
        %v2232 = vpop.f32.mrb[0].mxu0
        %v2233 = vadd.f32 0.0, %v2232
        %v2234 = vpop.f32.mrb[0].mxu0
        %2235 = vmatprep.mubr.f32.mxu0 0.0
        %2236 = vmatmul.mubr.f32.gmra.mrb[0].mxu0 %v2152
        %v2237 = vpop.f32.mrb[0].mxu0
        %v2238 = vadd.f32 0.0, %v2237
        %v2239 = vpop.f32.mrb[0].mxu0
        %2240 = vmatprep.mubr.f32.mxu0 0.0
        %2241 = vmatmul.mubr.f32.gmra.mrb[0].mxu0 %v2154
        %v2242 = vpop.f32.mrb[0].mxu0
        %v2243 = vadd.f32 0.0, %v2242
        %v2244 = vpop.f32.mrb[0].mxu0
        %2245 = vmatprep.mubr.f32.mxu0 0.0
        %2246 = vmatmul.mubr.f32.gmra.mrb[0].mxu0 %v2156
        %v2247 = vpop.f32.mrb[0].mxu0
        %v2248 = vadd.f32 0.0, %v2247
        %v2249 = vpop.f32.mrb[0].mxu0
        %2250 = vdwg.mxu0
        %2251 = vrot.lane.b32.xlu0 %v753, 120
        %v2252 = vpop.permute.xlu0 %2251
        %2253 = vrot.lane.b32.xlu0 %v758, 120
        %v2254 = vpop.permute.xlu0 %2253
        %2255 = vrot.lane.b32.xlu0 %v763, 120
        %v2256 = vpop.permute.xlu0 %2255
        %2257 = vrot.lane.b32.xlu0 %v768, 120
        %v2258 = vpop.permute.xlu0 %2257
        %2259 = vrot.lane.b32.xlu0 %v753, 88
        %v2260 = vpop.permute.xlu0 %2259
        %2261 = vrot.lane.b32.xlu0 %v758, 88
        %v2262 = vpop.permute.xlu0 %2261
        %2263 = vrot.lane.b32.xlu0 %v763, 88
        %v2264 = vpop.permute.xlu0 %2263
        %2265 = vrot.lane.b32.xlu0 %v768, 88
        %v2266 = vpop.permute.xlu0 %2265
        %v2267 = vsel %vm783, %v2252, 0
        %v2269 = vsel %vm783, %v2254, 0
        %v2271 = vsel %vm783, %v2256, 0
        %v2273 = vsel %vm783, %v2258, 0
        %v2275 = vsel %vm783, %v2260, 0
        %v2277 = vsel %vm783, %v2262, 0
        %v2279 = vsel %vm783, %v2264, 0
        %v2281 = vsel %vm783, %v2266, 0
        %2283 = vmatprep.subr.mxu0 0.0
        %2284 = vmatpush1.xpose.msra.mxu0 %v2275
        %2285 = vmatprep.subr.mxu0 0.0
        %2286 = vmatpush1.xpose.msra.mxu0 %v2277
        %2287 = vmatprep.subr.mxu0 0.0
        %2288 = vmatpush1.xpose.msra.mxu0 %v2279
        %2289 = vmatprep.subr.mxu0 0.0
        %2290 = vmatpush1.xpose.msra.mxu0 %v2281
        %2291 = vmatprep.subr.mxu0 0.0
        %2292 = vmatpush1.xpose.msra.mxu0 0.0
        %2293 = vmatprep.subr.mxu0 0.0
        %2294 = vmatpush1.xpose.msra.mxu0 0.0
        %2295 = vmatprep.subr.mxu0 0.0
        %2296 = vmatpush1.xpose.msra.mxu0 0.0
        %2297 = vmatprep.subr.mxu0 0.0
        %2298 = vmatpush1.xpose.msra.mxu0 0.0
        %2299 = vmatprep.subr.mxu0 0.0
        %2300 = vmatpush1.xpose.msra.mxu0 0.0
        %2301 = vmatprep.subr.mxu0 0.0
        %2302 = vmatpush1.xpose.msra.mxu0 0.0
        %2303 = vmatprep.subr.mxu0 0.0
        %2304 = vmatpush1.xpose.msra.mxu0 0.0
        %2305 = vmatprep.subr.mxu0 0.0
        %2306 = vmatpush1.xpose.msra.mxu0 0.0
        %2307 = vmatprep.subr.mxu0 0.0
        %2308 = vmatpush1.xpose.msra.mxu0 0.0
        %2309 = vmatprep.subr.mxu0 0.0
        %2310 = vmatpush1.xpose.msra.mxu0 0.0
        %2311 = vmatprep.subr.mxu0 0.0
        %2312 = vmatpush1.xpose.msra.mxu0 0.0
        %2313 = vmatprep.subr.mxu0 0.0
        %2314 = vmatpush1.xpose.msra.mxu0 0.0
        %2315 = vmatprep.subr.mxu0 0.0
        %2316 = vmatpush1.xpose.msra.mxu0 0.0
        %2317 = vmatprep.subr.mxu0 0.0
        %2318 = vmatpush1.xpose.msra.mxu0 0.0
        %2319 = vmatprep.subr.mxu0 0.0
        %2320 = vmatpush1.xpose.msra.mxu0 0.0
        %2321 = vmatprep.subr.mxu0 0.0
        %2322 = vmatpush1.xpose.msra.mxu0 0.0
        %2323 = vmatprep.subr.mxu0 0.0
        %2324 = vmatpush1.xpose.msra.mxu0 0.0
        %2325 = vmatprep.subr.mxu0 0.0
        %2326 = vmatpush1.xpose.msra.mxu0 0.0
        %2327 = vmatprep.subr.mxu0 0.0
        %2328 = vmatpush1.xpose.msra.mxu0 0.0
        %2329 = vmatprep.subr.mxu0 0.0
        %2330 = vmatpush1.xpose.msra.mxu0 0.0
        %2331 = vmatprep.subr.mxu0 0.0
        %2332 = vmatpush1.xpose.msra.mxu0 0.0
        %2333 = vmatprep.subr.mxu0 0.0
        %2334 = vmatpush1.xpose.msra.mxu0 0.0
        %2335 = vmatprep.subr.mxu0 0.0
        %2336 = vmatpush1.xpose.msra.mxu0 0.0
        %2337 = vmatprep.subr.mxu0 0.0
        %2338 = vmatpush1.xpose.msra.mxu0 0.0
        %2339 = vmatprep.subr.mxu0 0.0
        %2340 = vmatpush1.xpose.msra.mxu0 0.0
        %2341 = vmatprep.subr.mxu0 0.0
        %2342 = vmatpush1.xpose.msra.mxu0 0.0
        %2343 = vmatprep.subr.mxu0 0.0
        %2344 = vmatpush1.xpose.msra.mxu0 0.0
        %2345 = vmatprep.subr.mxu0 0.0
        %2346 = vmatpush1.xpose.msra.mxu0 0.0
        %2347 = vmatprep.mubr.f32.mxu0 0.0
        %2348 = vmatmul.mubr.f32.gmra.mrb[0].mxu0 %v2267
        %v2349 = vpop.f32.mrb[0].mxu0
        %v2350 = vadd.f32 0.0, %v2349
        %v2351 = vpop.f32.mrb[0].mxu0
        %2352 = vmatprep.mubr.f32.mxu0 0.0
        %2353 = vmatmul.mubr.f32.gmra.mrb[0].mxu0 %v2269
        %v2354 = vpop.f32.mrb[0].mxu0
        %v2355 = vadd.f32 0.0, %v2354
        %v2356 = vpop.f32.mrb[0].mxu0
        %2357 = vmatprep.mubr.f32.mxu0 0.0
        %2358 = vmatmul.mubr.f32.gmra.mrb[0].mxu0 %v2271
        %v2359 = vpop.f32.mrb[0].mxu0
        %v2360 = vadd.f32 0.0, %v2359
        %v2361 = vpop.f32.mrb[0].mxu0
        %2362 = vmatprep.mubr.f32.mxu0 0.0
        %2363 = vmatmul.mubr.f32.gmra.mrb[0].mxu0 %v2273
        %v2364 = vpop.f32.mrb[0].mxu0
        %v2365 = vadd.f32 0.0, %v2364
        %v2366 = vpop.f32.mrb[0].mxu0
        %2367 = vdwg.mxu0
        %v2368 = vmul.f32 %v1999, 0.35355338
        %v2369 = vmul.f32 %v2004, 0.35355338
        %v2370 = vmul.f32 %v2009, 0.35355338
        %v2371 = vmul.f32 %v2014, 0.35355338
        %v2372 = vmul.f32 %v2116, 0.35355338
        %v2373 = vmul.f32 %v2121, 0.35355338
        %v2374 = vmul.f32 %v2126, 0.35355338
        %v2375 = vmul.f32 %v2131, 0.35355338
        %v2376 = vmul.f32 %v2233, 0.35355338
        %v2377 = vmul.f32 %v2238, 0.35355338
        %v2378 = vmul.f32 %v2243, 0.35355338
        %v2379 = vmul.f32 %v2248, 0.35355338
        %v2380 = vmul.f32 %v2350, 0.35355338
        %v2381 = vmul.f32 %v2355, 0.35355338
        %v2382 = vmul.f32 %v2360, 0.35355338
        %v2383 = vmul.f32 %v2365, 0.35355338
        %v2384 = vsel %vm318, %v2368, -inf
        %2385 = vmax.xlane.f32.xlu0 %v2384
        %v2386 = vpop.xlane.xlu0 %2385
        %v2387 = vsel %vm318, %v2369, -inf
        %2388 = vmax.xlane.f32.xlu0 %v2387
        %v2389 = vpop.xlane.xlu0 %2388
        %v2390 = vsel %vm318, %v2370, -inf
        %2391 = vmax.xlane.f32.xlu0 %v2390
        %v2392 = vpop.xlane.xlu0 %2391
        %v2393 = vsel %vm318, %v2371, -inf
        %2394 = vmax.xlane.f32.xlu0 %v2393
        %v2395 = vpop.xlane.xlu0 %2394
        %v2396 = vsel %vm318, %v2372, -inf
        %2397 = vmax.xlane.f32.xlu0 %v2396
        %v2398 = vpop.xlane.xlu0 %2397
        %v2399 = vsel %vm318, %v2373, -inf
        %2400 = vmax.xlane.f32.xlu0 %v2399
        %v2401 = vpop.xlane.xlu0 %2400
        %v2402 = vsel %vm318, %v2374, -inf
        %2403 = vmax.xlane.f32.xlu0 %v2402
        %v2404 = vpop.xlane.xlu0 %2403
        %v2405 = vsel %vm318, %v2375, -inf
        %2406 = vmax.xlane.f32.xlu0 %v2405
        %v2407 = vpop.xlane.xlu0 %2406
        %v2408 = vsel %vm318, %v2376, -inf
        %2409 = vmax.xlane.f32.xlu0 %v2408
        %v2410 = vpop.xlane.xlu0 %2409
        %v2411 = vsel %vm318, %v2377, -inf
        %2412 = vmax.xlane.f32.xlu0 %v2411
        %v2413 = vpop.xlane.xlu0 %2412
        %v2414 = vsel %vm318, %v2378, -inf
        %2415 = vmax.xlane.f32.xlu0 %v2414
        %v2416 = vpop.xlane.xlu0 %2415
        %v2417 = vsel %vm318, %v2379, -inf
        %2418 = vmax.xlane.f32.xlu0 %v2417
        %v2419 = vpop.xlane.xlu0 %2418
        %v2420 = vsel %vm318, %v2380, -inf
        %2421 = vmax.xlane.f32.xlu0 %v2420
        %v2422 = vpop.xlane.xlu0 %2421
        %v2423 = vsel %vm318, %v2381, -inf
        %2424 = vmax.xlane.f32.xlu0 %v2423
        %v2425 = vpop.xlane.xlu0 %2424
        %v2426 = vsel %vm318, %v2382, -inf
        %2427 = vmax.xlane.f32.xlu0 %v2426
        %v2428 = vpop.xlane.xlu0 %2427
        %v2429 = vsel %vm318, %v2383, -inf
        %2430 = vmax.xlane.f32.xlu0 %v2429
        %v2431 = vpop.xlane.xlu0 %2430
        %v2432 = vsub.f32 %v2368, %v2386
        %v2433 = vsub.f32 %v2369, %v2389
        %v2434 = vsub.f32 %v2370, %v2392
        %v2435 = vsub.f32 %v2371, %v2395
        %v2436 = vsub.f32 %v2372, %v2398
        %v2437 = vsub.f32 %v2373, %v2401
        %v2438 = vsub.f32 %v2374, %v2404
        %v2439 = vsub.f32 %v2375, %v2407
        %v2440 = vsub.f32 %v2376, %v2410
        %v2441 = vsub.f32 %v2377, %v2413
        %v2442 = vsub.f32 %v2378, %v2416
        %v2443 = vsub.f32 %v2379, %v2419
        %v2444 = vsub.f32 %v2380, %v2422
        %v2445 = vsub.f32 %v2381, %v2425
        %v2446 = vsub.f32 %v2382, %v2428
        %v2447 = vsub.f32 %v2383, %v2431
        %v2448 = vmul.f32 %v2432, 1.442695
        %v2449 = vpow.pop %v2448
        %v2450 = vmul.f32 %v2433, 1.442695
        %v2451 = vpow.pop %v2450
        %v2452 = vmul.f32 %v2434, 1.442695
        %v2453 = vpow.pop %v2452
        %v2454 = vmul.f32 %v2435, 1.442695
        %v2455 = vpow.pop %v2454
        %v2456 = vmul.f32 %v2436, 1.442695
        %v2457 = vpow.pop %v2456
        %v2458 = vmul.f32 %v2437, 1.442695
        %v2459 = vpow.pop %v2458
        %v2460 = vmul.f32 %v2438, 1.442695
        %v2461 = vpow.pop %v2460
        %v2462 = vmul.f32 %v2439, 1.442695
        %v2463 = vpow.pop %v2462
        %v2464 = vmul.f32 %v2440, 1.442695
        %v2465 = vpow.pop %v2464
        %v2466 = vmul.f32 %v2441, 1.442695
        %v2467 = vpow.pop %v2466
        %v2468 = vmul.f32 %v2442, 1.442695
        %v2469 = vpow.pop %v2468
        %v2470 = vmul.f32 %v2443, 1.442695
        %v2471 = vpow.pop %v2470
        %v2472 = vmul.f32 %v2444, 1.442695
        %v2473 = vpow.pop %v2472
        %v2474 = vmul.f32 %v2445, 1.442695
        %v2475 = vpow.pop %v2474
        %v2476 = vmul.f32 %v2446, 1.442695
        %v2477 = vpow.pop %v2476
        %v2478 = vmul.f32 %v2447, 1.442695
        %v2479 = vpow.pop %v2478
        %v2480 = vsel %vm318, %v2449, 0.0
        %2481 = vadd.xlane.f32.xlu0 %v2480
        %v2482 = vpop.xlane.xlu0 %2481
        %v2483 = vsel %vm318, %v2451, 0.0
        %2484 = vadd.xlane.f32.xlu0 %v2483
        %v2485 = vpop.xlane.xlu0 %2484
        %v2486 = vsel %vm318, %v2453, 0.0
        %2487 = vadd.xlane.f32.xlu0 %v2486
        %v2488 = vpop.xlane.xlu0 %2487
        %v2489 = vsel %vm318, %v2455, 0.0
        %2490 = vadd.xlane.f32.xlu0 %v2489
        %v2491 = vpop.xlane.xlu0 %2490
        %v2492 = vsel %vm318, %v2457, 0.0
        %2493 = vadd.xlane.f32.xlu0 %v2492
        %v2494 = vpop.xlane.xlu0 %2493
        %v2495 = vsel %vm318, %v2459, 0.0
        %2496 = vadd.xlane.f32.xlu0 %v2495
        %v2497 = vpop.xlane.xlu0 %2496
        %v2498 = vsel %vm318, %v2461, 0.0
        %2499 = vadd.xlane.f32.xlu0 %v2498
        %v2500 = vpop.xlane.xlu0 %2499
        %v2501 = vsel %vm318, %v2463, 0.0
        %2502 = vadd.xlane.f32.xlu0 %v2501
        %v2503 = vpop.xlane.xlu0 %2502
        %v2504 = vsel %vm318, %v2465, 0.0
        %2505 = vadd.xlane.f32.xlu0 %v2504
        %v2506 = vpop.xlane.xlu0 %2505
        %v2507 = vsel %vm318, %v2467, 0.0
        %2508 = vadd.xlane.f32.xlu0 %v2507
        %v2509 = vpop.xlane.xlu0 %2508
        %v2510 = vsel %vm318, %v2469, 0.0
        %2511 = vadd.xlane.f32.xlu0 %v2510
        %v2512 = vpop.xlane.xlu0 %2511
        %v2513 = vsel %vm318, %v2471, 0.0
        %2514 = vadd.xlane.f32.xlu0 %v2513
        %v2515 = vpop.xlane.xlu0 %2514
        %v2516 = vsel %vm318, %v2473, 0.0
        %2517 = vadd.xlane.f32.xlu0 %v2516
        %v2518 = vpop.xlane.xlu0 %2517
        %v2519 = vsel %vm318, %v2475, 0.0
        %2520 = vadd.xlane.f32.xlu0 %v2519
        %v2521 = vpop.xlane.xlu0 %2520
        %v2522 = vsel %vm318, %v2477, 0.0
        %2523 = vadd.xlane.f32.xlu0 %v2522
        %v2524 = vpop.xlane.xlu0 %2523
        %v2525 = vsel %vm318, %v2479, 0.0
        %2526 = vadd.xlane.f32.xlu0 %v2525
        %v2527 = vpop.xlane.xlu0 %2526
        %v2528 = vrcp.pop %v2482
        %v2529 = vrcp.pop %v2485
        %v2530 = vrcp.pop %v2488
        %v2531 = vrcp.pop %v2491
        %v2532 = vrcp.pop %v2494
        %v2533 = vrcp.pop %v2497
        %v2534 = vrcp.pop %v2500
        %v2535 = vrcp.pop %v2503
        %v2536 = vrcp.pop %v2506
        %v2537 = vrcp.pop %v2509
        %v2538 = vrcp.pop %v2512
        %v2539 = vrcp.pop %v2515
        %v2540 = vrcp.pop %v2518
        %v2541 = vrcp.pop %v2521
        %v2542 = vrcp.pop %v2524
        %v2543 = vrcp.pop %v2527
        %v2544 = vmul.f32 %v2482, %v2528
        %v2545 = vmul.f32 %v2485, %v2529
        %v2546 = vmul.f32 %v2488, %v2530
        %v2547 = vmul.f32 %v2491, %v2531
        %v2548 = vmul.f32 %v2494, %v2532
        %v2549 = vmul.f32 %v2497, %v2533
        %v2550 = vmul.f32 %v2500, %v2534
        %v2551 = vmul.f32 %v2503, %v2535
        %v2552 = vmul.f32 %v2506, %v2536
        %v2553 = vmul.f32 %v2509, %v2537
        %v2554 = vmul.f32 %v2512, %v2538
        %v2555 = vmul.f32 %v2515, %v2539
        %v2556 = vmul.f32 %v2518, %v2540
        %v2557 = vmul.f32 %v2521, %v2541
        %v2558 = vmul.f32 %v2524, %v2542
        %v2559 = vmul.f32 %v2527, %v2543
        %v2560 = vsub.f32 2.0, %v2544
        %v2561 = vsub.f32 2.0, %v2545
        %v2562 = vsub.f32 2.0, %v2546
        %v2563 = vsub.f32 2.0, %v2547
        %v2564 = vsub.f32 2.0, %v2548
        %v2565 = vsub.f32 2.0, %v2549
        %v2566 = vsub.f32 2.0, %v2550
        %v2567 = vsub.f32 2.0, %v2551
        %v2568 = vsub.f32 2.0, %v2552
        %v2569 = vsub.f32 2.0, %v2553
        %v2570 = vsub.f32 2.0, %v2554
        %v2571 = vsub.f32 2.0, %v2555
        %v2572 = vsub.f32 2.0, %v2556
        %v2573 = vsub.f32 2.0, %v2557
        %v2574 = vsub.f32 2.0, %v2558
        %v2575 = vsub.f32 2.0, %v2559
        %v2576 = vmul.f32 %v2528, %v2560
        %v2577 = vmul.f32 %v2529, %v2561
        %v2578 = vmul.f32 %v2530, %v2562
        %v2579 = vmul.f32 %v2531, %v2563
        %v2580 = vmul.f32 %v2532, %v2564
        %v2581 = vmul.f32 %v2533, %v2565
        %v2582 = vmul.f32 %v2534, %v2566
        %v2583 = vmul.f32 %v2535, %v2567
        %v2584 = vmul.f32 %v2536, %v2568
        %v2585 = vmul.f32 %v2537, %v2569
        %v2586 = vmul.f32 %v2538, %v2570
        %v2587 = vmul.f32 %v2539, %v2571
        %v2588 = vmul.f32 %v2540, %v2572
        %v2589 = vmul.f32 %v2541, %v2573
        %v2590 = vmul.f32 %v2542, %v2574
        %v2591 = vmul.f32 %v2543, %v2575
        %v2592 = vmul.f32 %v2449, %v2576
        %v2593 = vmul.f32 %v2451, %v2577
        %v2594 = vmul.f32 %v2453, %v2578
        %v2595 = vmul.f32 %v2455, %v2579
        %v2596 = vmul.f32 %v2457, %v2580
        %v2597 = vmul.f32 %v2459, %v2581
        %v2598 = vmul.f32 %v2461, %v2582
        %v2599 = vmul.f32 %v2463, %v2583
        %v2600 = vmul.f32 %v2465, %v2584
        %v2601 = vmul.f32 %v2467, %v2585
        %v2602 = vmul.f32 %v2469, %v2586
        %v2603 = vmul.f32 %v2471, %v2587
        %v2604 = vmul.f32 %v2473, %v2588
        %v2605 = vmul.f32 %v2475, %v2589
        %v2606 = vmul.f32 %v2477, %v2590
        %v2607 = vmul.f32 %v2479, %v2591
        %2608 = vrot.lane.b32.xlu0 %v693, 56
        %v2609 = vpop.permute.xlu0 %2608
        %2610 = vrot.lane.b32.xlu0 %v698, 56
        %v2611 = vpop.permute.xlu0 %2610
        %2612 = vrot.lane.b32.xlu0 %v703, 56
        %v2613 = vpop.permute.xlu0 %2612
        %2614 = vrot.lane.b32.xlu0 %v708, 56
        %v2615 = vpop.permute.xlu0 %2614
        %v2621 = vsel %vm318, %v2592, 0
        %v2624 = vsel %vm318, %v2593, 0
        %v2627 = vsel %vm318, %v2594, 0
        %v2630 = vsel %vm318, %v2595, 0
        %2632 = vmatprep.subr.mxu0 0.0
        %2633 = vmatpush1.msra.mxu0 %v2609
        %2634 = vmatprep.subr.mxu0 0.0
        %2635 = vmatpush1.msra.mxu0 %v2611
        %2636 = vmatprep.subr.mxu0 0.0
        %2637 = vmatpush1.msra.mxu0 %v2613
        %2638 = vmatprep.subr.mxu0 0.0
        %2639 = vmatpush1.msra.mxu0 %v2615
        %2640 = vmatprep.subr.mxu0 0.0
        %2641 = vmatpush1.msra.mxu0 0.0
        %2642 = vmatprep.subr.mxu0 0.0
        %2643 = vmatpush1.msra.mxu0 0.0
        %2644 = vmatprep.subr.mxu0 0.0
        %2645 = vmatpush1.msra.mxu0 0.0
        %2646 = vmatprep.subr.mxu0 0.0
        %2647 = vmatpush1.msra.mxu0 0.0
        %2648 = vmatprep.subr.mxu0 0.0
        %2649 = vmatpush1.msra.mxu0 0.0
        %2650 = vmatprep.subr.mxu0 0.0
        %2651 = vmatpush1.msra.mxu0 0.0
        %2652 = vmatprep.subr.mxu0 0.0
        %2653 = vmatpush1.msra.mxu0 0.0
        %2654 = vmatprep.subr.mxu0 0.0
        %2655 = vmatpush1.msra.mxu0 0.0
        %2656 = vmatprep.subr.mxu0 0.0
        %2657 = vmatpush1.msra.mxu0 0.0
        %2658 = vmatprep.subr.mxu0 0.0
        %2659 = vmatpush1.msra.mxu0 0.0
        %2660 = vmatprep.subr.mxu0 0.0
        %2661 = vmatpush1.msra.mxu0 0.0
        %2662 = vmatprep.subr.mxu0 0.0
        %2663 = vmatpush1.msra.mxu0 0.0
        %2664 = vmatprep.subr.mxu0 0.0
        %2665 = vmatpush1.msra.mxu0 0.0
        %2666 = vmatprep.subr.mxu0 0.0
        %2667 = vmatpush1.msra.mxu0 0.0
        %2668 = vmatprep.subr.mxu0 0.0
        %2669 = vmatpush1.msra.mxu0 0.0
        %2670 = vmatprep.subr.mxu0 0.0
        %2671 = vmatpush1.msra.mxu0 0.0
        %2672 = vmatprep.subr.mxu0 0.0
        %2673 = vmatpush1.msra.mxu0 0.0
        %2674 = vmatprep.subr.mxu0 0.0
        %2675 = vmatpush1.msra.mxu0 0.0
        %2676 = vmatprep.subr.mxu0 0.0
        %2677 = vmatpush1.msra.mxu0 0.0
        %2678 = vmatprep.subr.mxu0 0.0
        %2679 = vmatpush1.msra.mxu0 0.0
        %2680 = vmatprep.subr.mxu0 0.0
        %2681 = vmatpush1.msra.mxu0 0.0
        %2682 = vmatprep.subr.mxu0 0.0
        %2683 = vmatpush1.msra.mxu0 0.0
        %2684 = vmatprep.subr.mxu0 0.0
        %2685 = vmatpush1.msra.mxu0 0.0
        %2686 = vmatprep.subr.mxu0 0.0
        %2687 = vmatpush1.msra.mxu0 0.0
        %2688 = vmatprep.subr.mxu0 0.0
        %2689 = vmatpush1.msra.mxu0 0.0
        %2690 = vmatprep.subr.mxu0 0.0
        %2691 = vmatpush1.msra.mxu0 0.0
        %2692 = vmatprep.subr.mxu0 0.0
        %2693 = vmatpush1.msra.mxu0 0.0
        %2694 = vmatprep.subr.mxu0 0.0
        %2695 = vmatpush1.msra.mxu0 0.0
        %2696 = vmatprep.mubr.f32.mxu0 0.0
        %2697 = vmatmul.mubr.f32.gmra.mrb[0].mxu0 %v2621
        %v2698 = vpop.f32.mrb[0].mxu0
        %v2699 = vadd.f32 0.0, %v2698
        %v2700 = vpop.f32.mrb[0].mxu0
        %2701 = vmatprep.mubr.f32.mxu0 0.0
        %2702 = vmatmul.mubr.f32.gmra.mrb[0].mxu0 %v2624
        %v2703 = vpop.f32.mrb[0].mxu0
        %v2704 = vadd.f32 0.0, %v2703
        %v2705 = vpop.f32.mrb[0].mxu0
        %2706 = vmatprep.mubr.f32.mxu0 0.0
        %2707 = vmatmul.mubr.f32.gmra.mrb[0].mxu0 %v2627
        %v2708 = vpop.f32.mrb[0].mxu0
        %v2709 = vadd.f32 0.0, %v2708
        %v2710 = vpop.f32.mrb[0].mxu0
        %2711 = vmatprep.mubr.f32.mxu0 0.0
        %2712 = vmatmul.mubr.f32.gmra.mrb[0].mxu0 %v2630
        %v2713 = vpop.f32.mrb[0].mxu0
        %v2714 = vadd.f32 0.0, %v2713
        %v2715 = vpop.f32.mrb[0].mxu0
        %2716 = vdwg.mxu0
        %2717 = vrot.lane.b32.xlu0 %v713, 56
        %v2718 = vpop.permute.xlu0 %2717
        %2719 = vrot.lane.b32.xlu0 %v718, 56
        %v2720 = vpop.permute.xlu0 %2719
        %2721 = vrot.lane.b32.xlu0 %v723, 56
        %v2722 = vpop.permute.xlu0 %2721
        %2723 = vrot.lane.b32.xlu0 %v728, 56
        %v2724 = vpop.permute.xlu0 %2723
        %v2730 = vsel %vm318, %v2596, 0
        %v2733 = vsel %vm318, %v2597, 0
        %v2736 = vsel %vm318, %v2598, 0
        %v2739 = vsel %vm318, %v2599, 0
        %2741 = vmatprep.subr.mxu0 0.0
        %2742 = vmatpush1.msra.mxu0 %v2718
        %2743 = vmatprep.subr.mxu0 0.0
        %2744 = vmatpush1.msra.mxu0 %v2720
        %2745 = vmatprep.subr.mxu0 0.0
        %2746 = vmatpush1.msra.mxu0 %v2722
        %2747 = vmatprep.subr.mxu0 0.0
        %2748 = vmatpush1.msra.mxu0 %v2724
        %2749 = vmatprep.subr.mxu0 0.0
        %2750 = vmatpush1.msra.mxu0 0.0
        %2751 = vmatprep.subr.mxu0 0.0
        %2752 = vmatpush1.msra.mxu0 0.0
        %2753 = vmatprep.subr.mxu0 0.0
        %2754 = vmatpush1.msra.mxu0 0.0
        %2755 = vmatprep.subr.mxu0 0.0
        %2756 = vmatpush1.msra.mxu0 0.0
        %2757 = vmatprep.subr.mxu0 0.0
        %2758 = vmatpush1.msra.mxu0 0.0
        %2759 = vmatprep.subr.mxu0 0.0
        %2760 = vmatpush1.msra.mxu0 0.0
        %2761 = vmatprep.subr.mxu0 0.0
        %2762 = vmatpush1.msra.mxu0 0.0
        %2763 = vmatprep.subr.mxu0 0.0
        %2764 = vmatpush1.msra.mxu0 0.0
        %2765 = vmatprep.subr.mxu0 0.0
        %2766 = vmatpush1.msra.mxu0 0.0
        %2767 = vmatprep.subr.mxu0 0.0
        %2768 = vmatpush1.msra.mxu0 0.0
        %2769 = vmatprep.subr.mxu0 0.0
        %2770 = vmatpush1.msra.mxu0 0.0
        %2771 = vmatprep.subr.mxu0 0.0
        %2772 = vmatpush1.msra.mxu0 0.0
        %2773 = vmatprep.subr.mxu0 0.0
        %2774 = vmatpush1.msra.mxu0 0.0
        %2775 = vmatprep.subr.mxu0 0.0
        %2776 = vmatpush1.msra.mxu0 0.0
        %2777 = vmatprep.subr.mxu0 0.0
        %2778 = vmatpush1.msra.mxu0 0.0
        %2779 = vmatprep.subr.mxu0 0.0
        %2780 = vmatpush1.msra.mxu0 0.0
        %2781 = vmatprep.subr.mxu0 0.0
        %2782 = vmatpush1.msra.mxu0 0.0
        %2783 = vmatprep.subr.mxu0 0.0
        %2784 = vmatpush1.msra.mxu0 0.0
        %2785 = vmatprep.subr.mxu0 0.0
        %2786 = vmatpush1.msra.mxu0 0.0
        %2787 = vmatprep.subr.mxu0 0.0
        %2788 = vmatpush1.msra.mxu0 0.0
        %2789 = vmatprep.subr.mxu0 0.0
        %2790 = vmatpush1.msra.mxu0 0.0
        %2791 = vmatprep.subr.mxu0 0.0
        %2792 = vmatpush1.msra.mxu0 0.0
        %2793 = vmatprep.subr.mxu0 0.0
        %2794 = vmatpush1.msra.mxu0 0.0
        %2795 = vmatprep.subr.mxu0 0.0
        %2796 = vmatpush1.msra.mxu0 0.0
        %2797 = vmatprep.subr.mxu0 0.0
        %2798 = vmatpush1.msra.mxu0 0.0
        %2799 = vmatprep.subr.mxu0 0.0
        %2800 = vmatpush1.msra.mxu0 0.0
        %2801 = vmatprep.subr.mxu0 0.0
        %2802 = vmatpush1.msra.mxu0 0.0
        %2803 = vmatprep.subr.mxu0 0.0
        %2804 = vmatpush1.msra.mxu0 0.0
        %2805 = vmatprep.mubr.f32.mxu0 0.0
        %2806 = vmatmul.mubr.f32.gmra.mrb[0].mxu0 %v2730
        %v2807 = vpop.f32.mrb[0].mxu0
        %v2808 = vadd.f32 0.0, %v2807
        %v2809 = vpop.f32.mrb[0].mxu0
        %2810 = vmatprep.mubr.f32.mxu0 0.0
        %2811 = vmatmul.mubr.f32.gmra.mrb[0].mxu0 %v2733
        %v2812 = vpop.f32.mrb[0].mxu0
        %v2813 = vadd.f32 0.0, %v2812
        %v2814 = vpop.f32.mrb[0].mxu0
        %2815 = vmatprep.mubr.f32.mxu0 0.0
        %2816 = vmatmul.mubr.f32.gmra.mrb[0].mxu0 %v2736
        %v2817 = vpop.f32.mrb[0].mxu0
        %v2818 = vadd.f32 0.0, %v2817
        %v2819 = vpop.f32.mrb[0].mxu0
        %2820 = vmatprep.mubr.f32.mxu0 0.0
        %2821 = vmatmul.mubr.f32.gmra.mrb[0].mxu0 %v2739
        %v2822 = vpop.f32.mrb[0].mxu0
        %v2823 = vadd.f32 0.0, %v2822
        %v2824 = vpop.f32.mrb[0].mxu0
        %2825 = vdwg.mxu0
        %2826 = vrot.lane.b32.xlu0 %v733, 56
        %v2827 = vpop.permute.xlu0 %2826
        %2828 = vrot.lane.b32.xlu0 %v738, 56
        %v2829 = vpop.permute.xlu0 %2828
        %2830 = vrot.lane.b32.xlu0 %v743, 56
        %v2831 = vpop.permute.xlu0 %2830
        %2832 = vrot.lane.b32.xlu0 %v748, 56
        %v2833 = vpop.permute.xlu0 %2832
        %v2839 = vsel %vm318, %v2600, 0
        %v2842 = vsel %vm318, %v2601, 0
        %v2845 = vsel %vm318, %v2602, 0
        %v2848 = vsel %vm318, %v2603, 0
        %2850 = vmatprep.subr.mxu0 0.0
        %2851 = vmatpush1.msra.mxu0 %v2827
        %2852 = vmatprep.subr.mxu0 0.0
        %2853 = vmatpush1.msra.mxu0 %v2829
        %2854 = vmatprep.subr.mxu0 0.0
        %2855 = vmatpush1.msra.mxu0 %v2831
        %2856 = vmatprep.subr.mxu0 0.0
        %2857 = vmatpush1.msra.mxu0 %v2833
        %2858 = vmatprep.subr.mxu0 0.0
        %2859 = vmatpush1.msra.mxu0 0.0
        %2860 = vmatprep.subr.mxu0 0.0
        %2861 = vmatpush1.msra.mxu0 0.0
        %2862 = vmatprep.subr.mxu0 0.0
        %2863 = vmatpush1.msra.mxu0 0.0
        %2864 = vmatprep.subr.mxu0 0.0
        %2865 = vmatpush1.msra.mxu0 0.0
        %2866 = vmatprep.subr.mxu0 0.0
        %2867 = vmatpush1.msra.mxu0 0.0
        %2868 = vmatprep.subr.mxu0 0.0
        %2869 = vmatpush1.msra.mxu0 0.0
        %2870 = vmatprep.subr.mxu0 0.0
        %2871 = vmatpush1.msra.mxu0 0.0
        %2872 = vmatprep.subr.mxu0 0.0
        %2873 = vmatpush1.msra.mxu0 0.0
        %2874 = vmatprep.subr.mxu0 0.0
        %2875 = vmatpush1.msra.mxu0 0.0
        %2876 = vmatprep.subr.mxu0 0.0
        %2877 = vmatpush1.msra.mxu0 0.0
        %2878 = vmatprep.subr.mxu0 0.0
        %2879 = vmatpush1.msra.mxu0 0.0
        %2880 = vmatprep.subr.mxu0 0.0
        %2881 = vmatpush1.msra.mxu0 0.0
        %2882 = vmatprep.subr.mxu0 0.0
        %2883 = vmatpush1.msra.mxu0 0.0
        %2884 = vmatprep.subr.mxu0 0.0
        %2885 = vmatpush1.msra.mxu0 0.0
        %2886 = vmatprep.subr.mxu0 0.0
        %2887 = vmatpush1.msra.mxu0 0.0
        %2888 = vmatprep.subr.mxu0 0.0
        %2889 = vmatpush1.msra.mxu0 0.0
        %2890 = vmatprep.subr.mxu0 0.0
        %2891 = vmatpush1.msra.mxu0 0.0
        %2892 = vmatprep.subr.mxu0 0.0
        %2893 = vmatpush1.msra.mxu0 0.0
        %2894 = vmatprep.subr.mxu0 0.0
        %2895 = vmatpush1.msra.mxu0 0.0
        %2896 = vmatprep.subr.mxu0 0.0
        %2897 = vmatpush1.msra.mxu0 0.0
        %2898 = vmatprep.subr.mxu0 0.0
        %2899 = vmatpush1.msra.mxu0 0.0
        %2900 = vmatprep.subr.mxu0 0.0
        %2901 = vmatpush1.msra.mxu0 0.0
        %2902 = vmatprep.subr.mxu0 0.0
        %2903 = vmatpush1.msra.mxu0 0.0
        %2904 = vmatprep.subr.mxu0 0.0
        %2905 = vmatpush1.msra.mxu0 0.0
        %2906 = vmatprep.subr.mxu0 0.0
        %2907 = vmatpush1.msra.mxu0 0.0
        %2908 = vmatprep.subr.mxu0 0.0
        %2909 = vmatpush1.msra.mxu0 0.0
        %2910 = vmatprep.subr.mxu0 0.0
        %2911 = vmatpush1.msra.mxu0 0.0
        %2912 = vmatprep.subr.mxu0 0.0
        %2913 = vmatpush1.msra.mxu0 0.0
        %2914 = vmatprep.mubr.f32.mxu0 0.0
        %2915 = vmatmul.mubr.f32.gmra.mrb[0].mxu0 %v2839
        %v2916 = vpop.f32.mrb[0].mxu0
        %v2917 = vadd.f32 0.0, %v2916
        %v2918 = vpop.f32.mrb[0].mxu0
        %2919 = vmatprep.mubr.f32.mxu0 0.0
        %2920 = vmatmul.mubr.f32.gmra.mrb[0].mxu0 %v2842
        %v2921 = vpop.f32.mrb[0].mxu0
        %v2922 = vadd.f32 0.0, %v2921
        %v2923 = vpop.f32.mrb[0].mxu0
        %2924 = vmatprep.mubr.f32.mxu0 0.0
        %2925 = vmatmul.mubr.f32.gmra.mrb[0].mxu0 %v2845
        %v2926 = vpop.f32.mrb[0].mxu0
        %v2927 = vadd.f32 0.0, %v2926
        %v2928 = vpop.f32.mrb[0].mxu0
        %2929 = vmatprep.mubr.f32.mxu0 0.0
        %2930 = vmatmul.mubr.f32.gmra.mrb[0].mxu0 %v2848
        %v2931 = vpop.f32.mrb[0].mxu0
        %v2932 = vadd.f32 0.0, %v2931
        %v2933 = vpop.f32.mrb[0].mxu0
        %2934 = vdwg.mxu0
        %2935 = vrot.lane.b32.xlu0 %v753, 56
        %v2936 = vpop.permute.xlu0 %2935
        %2937 = vrot.lane.b32.xlu0 %v758, 56
        %v2938 = vpop.permute.xlu0 %2937
        %2939 = vrot.lane.b32.xlu0 %v763, 56
        %v2940 = vpop.permute.xlu0 %2939
        %2941 = vrot.lane.b32.xlu0 %v768, 56
        %v2942 = vpop.permute.xlu0 %2941
        %v2948 = vsel %vm318, %v2604, 0
        %v2951 = vsel %vm318, %v2605, 0
        %v2954 = vsel %vm318, %v2606, 0
        %v2957 = vsel %vm318, %v2607, 0
        %2959 = vmatprep.subr.mxu0 0.0
        %2960 = vmatpush1.msra.mxu0 %v2936
        %2961 = vmatprep.subr.mxu0 0.0
        %2962 = vmatpush1.msra.mxu0 %v2938
        %2963 = vmatprep.subr.mxu0 0.0
        %2964 = vmatpush1.msra.mxu0 %v2940
        %2965 = vmatprep.subr.mxu0 0.0
        %2966 = vmatpush1.msra.mxu0 %v2942
        %2967 = vmatprep.subr.mxu0 0.0
        %2968 = vmatpush1.msra.mxu0 0.0
        %2969 = vmatprep.subr.mxu0 0.0
        %2970 = vmatpush1.msra.mxu0 0.0
        %2971 = vmatprep.subr.mxu0 0.0
        %2972 = vmatpush1.msra.mxu0 0.0
        %2973 = vmatprep.subr.mxu0 0.0
        %2974 = vmatpush1.msra.mxu0 0.0
        %2975 = vmatprep.subr.mxu0 0.0
        %2976 = vmatpush1.msra.mxu0 0.0
        %2977 = vmatprep.subr.mxu0 0.0
        %2978 = vmatpush1.msra.mxu0 0.0
        %2979 = vmatprep.subr.mxu0 0.0
        %2980 = vmatpush1.msra.mxu0 0.0
        %2981 = vmatprep.subr.mxu0 0.0
        %2982 = vmatpush1.msra.mxu0 0.0
        %2983 = vmatprep.subr.mxu0 0.0
        %2984 = vmatpush1.msra.mxu0 0.0
        %2985 = vmatprep.subr.mxu0 0.0
        %2986 = vmatpush1.msra.mxu0 0.0
        %2987 = vmatprep.subr.mxu0 0.0
        %2988 = vmatpush1.msra.mxu0 0.0
        %2989 = vmatprep.subr.mxu0 0.0
        %2990 = vmatpush1.msra.mxu0 0.0
        %2991 = vmatprep.subr.mxu0 0.0
        %2992 = vmatpush1.msra.mxu0 0.0
        %2993 = vmatprep.subr.mxu0 0.0
        %2994 = vmatpush1.msra.mxu0 0.0
        %2995 = vmatprep.subr.mxu0 0.0
        %2996 = vmatpush1.msra.mxu0 0.0
        %2997 = vmatprep.subr.mxu0 0.0
        %2998 = vmatpush1.msra.mxu0 0.0
        %2999 = vmatprep.subr.mxu0 0.0
        %3000 = vmatpush1.msra.mxu0 0.0
        %3001 = vmatprep.subr.mxu0 0.0
        %3002 = vmatpush1.msra.mxu0 0.0
        %3003 = vmatprep.subr.mxu0 0.0
        %3004 = vmatpush1.msra.mxu0 0.0
        %3005 = vmatprep.subr.mxu0 0.0
        %3006 = vmatpush1.msra.mxu0 0.0
        %3007 = vmatprep.subr.mxu0 0.0
        %3008 = vmatpush1.msra.mxu0 0.0
        %3009 = vmatprep.subr.mxu0 0.0
        %3010 = vmatpush1.msra.mxu0 0.0
        %3011 = vmatprep.subr.mxu0 0.0
        %3012 = vmatpush1.msra.mxu0 0.0
        %3013 = vmatprep.subr.mxu0 0.0
        %3014 = vmatpush1.msra.mxu0 0.0
        %3015 = vmatprep.subr.mxu0 0.0
        %3016 = vmatpush1.msra.mxu0 0.0
        %3017 = vmatprep.subr.mxu0 0.0
        %3018 = vmatpush1.msra.mxu0 0.0
        %3019 = vmatprep.subr.mxu0 0.0
        %3020 = vmatpush1.msra.mxu0 0.0
        %3021 = vmatprep.subr.mxu0 0.0
        %3022 = vmatpush1.msra.mxu0 0.0
        %3023 = vmatprep.mubr.f32.mxu0 0.0
        %3024 = vmatmul.mubr.f32.gmra.mrb[0].mxu0 %v2948
        %v3025 = vpop.f32.mrb[0].mxu0
        %v3026 = vadd.f32 0.0, %v3025
        %v3027 = vpop.f32.mrb[0].mxu0
        %3028 = vmatprep.mubr.f32.mxu0 0.0
        %3029 = vmatmul.mubr.f32.gmra.mrb[0].mxu0 %v2951
        %v3030 = vpop.f32.mrb[0].mxu0
        %v3031 = vadd.f32 0.0, %v3030
        %v3032 = vpop.f32.mrb[0].mxu0
        %3033 = vmatprep.mubr.f32.mxu0 0.0
        %3034 = vmatmul.mubr.f32.gmra.mrb[0].mxu0 %v2954
        %v3035 = vpop.f32.mrb[0].mxu0
        %v3036 = vadd.f32 0.0, %v3035
        %v3037 = vpop.f32.mrb[0].mxu0
        %3038 = vmatprep.mubr.f32.mxu0 0.0
        %3039 = vmatmul.mubr.f32.gmra.mrb[0].mxu0 %v2957
        %v3040 = vpop.f32.mrb[0].mxu0
        %v3041 = vadd.f32 0.0, %v3040
        %v3042 = vpop.f32.mrb[0].mxu0
        %3043 = vdwg.mxu0
        %3044 = vrot.lane.b32.xlu0 %v693, 112
        %v3045 = vpop.permute.xlu0 %3044
        %3046 = vrot.lane.b32.xlu0 %v698, 112
        %v3047 = vpop.permute.xlu0 %3046
        %3048 = vrot.lane.b32.xlu0 %v703, 112
        %v3049 = vpop.permute.xlu0 %3048
        %3050 = vrot.lane.b32.xlu0 %v708, 112
        %v3051 = vpop.permute.xlu0 %3050
        %3052 = vrot.lane.b32.xlu0 %v693, 80
        %v3053 = vpop.permute.xlu0 %3052
        %3054 = vrot.lane.b32.xlu0 %v698, 80
        %v3055 = vpop.permute.xlu0 %3054
        %3056 = vrot.lane.b32.xlu0 %v703, 80
        %v3057 = vpop.permute.xlu0 %3056
        %3058 = vrot.lane.b32.xlu0 %v708, 80
        %v3059 = vpop.permute.xlu0 %3058
        %v3060 = vsel %vm783, %v3045, 0
        %v3062 = vsel %vm783, %v3047, 0
        %v3064 = vsel %vm783, %v3049, 0
        %v3066 = vsel %vm783, %v3051, 0
        %v3068 = vsel %vm783, %v3053, 0
        %v3070 = vsel %vm783, %v3055, 0
        %v3072 = vsel %vm783, %v3057, 0
        %v3074 = vsel %vm783, %v3059, 0
        %3076 = vmatprep.subr.mxu0 0.0
        %3077 = vmatpush1.xpose.msra.mxu0 %v3068
        %3078 = vmatprep.subr.mxu0 0.0
        %3079 = vmatpush1.xpose.msra.mxu0 %v3070
        %3080 = vmatprep.subr.mxu0 0.0
        %3081 = vmatpush1.xpose.msra.mxu0 %v3072
        %3082 = vmatprep.subr.mxu0 0.0
        %3083 = vmatpush1.xpose.msra.mxu0 %v3074
        %3084 = vmatprep.subr.mxu0 0.0
        %3085 = vmatpush1.xpose.msra.mxu0 0.0
        %3086 = vmatprep.subr.mxu0 0.0
        %3087 = vmatpush1.xpose.msra.mxu0 0.0
        %3088 = vmatprep.subr.mxu0 0.0
        %3089 = vmatpush1.xpose.msra.mxu0 0.0
        %3090 = vmatprep.subr.mxu0 0.0
        %3091 = vmatpush1.xpose.msra.mxu0 0.0
        %3092 = vmatprep.subr.mxu0 0.0
        %3093 = vmatpush1.xpose.msra.mxu0 0.0
        %3094 = vmatprep.subr.mxu0 0.0
        %3095 = vmatpush1.xpose.msra.mxu0 0.0
        %3096 = vmatprep.subr.mxu0 0.0
        %3097 = vmatpush1.xpose.msra.mxu0 0.0
        %3098 = vmatprep.subr.mxu0 0.0
        %3099 = vmatpush1.xpose.msra.mxu0 0.0
        %3100 = vmatprep.subr.mxu0 0.0
        %3101 = vmatpush1.xpose.msra.mxu0 0.0
        %3102 = vmatprep.subr.mxu0 0.0
        %3103 = vmatpush1.xpose.msra.mxu0 0.0
        %3104 = vmatprep.subr.mxu0 0.0
        %3105 = vmatpush1.xpose.msra.mxu0 0.0
        %3106 = vmatprep.subr.mxu0 0.0
        %3107 = vmatpush1.xpose.msra.mxu0 0.0
        %3108 = vmatprep.subr.mxu0 0.0
        %3109 = vmatpush1.xpose.msra.mxu0 0.0
        %3110 = vmatprep.subr.mxu0 0.0
        %3111 = vmatpush1.xpose.msra.mxu0 0.0
        %3112 = vmatprep.subr.mxu0 0.0
        %3113 = vmatpush1.xpose.msra.mxu0 0.0
        %3114 = vmatprep.subr.mxu0 0.0
        %3115 = vmatpush1.xpose.msra.mxu0 0.0
        %3116 = vmatprep.subr.mxu0 0.0
        %3117 = vmatpush1.xpose.msra.mxu0 0.0
        %3118 = vmatprep.subr.mxu0 0.0
        %3119 = vmatpush1.xpose.msra.mxu0 0.0
        %3120 = vmatprep.subr.mxu0 0.0
        %3121 = vmatpush1.xpose.msra.mxu0 0.0
        %3122 = vmatprep.subr.mxu0 0.0
        %3123 = vmatpush1.xpose.msra.mxu0 0.0
        %3124 = vmatprep.subr.mxu0 0.0
        %3125 = vmatpush1.xpose.msra.mxu0 0.0
        %3126 = vmatprep.subr.mxu0 0.0
        %3127 = vmatpush1.xpose.msra.mxu0 0.0
        %3128 = vmatprep.subr.mxu0 0.0
        %3129 = vmatpush1.xpose.msra.mxu0 0.0
        %3130 = vmatprep.subr.mxu0 0.0
        %3131 = vmatpush1.xpose.msra.mxu0 0.0
        %3132 = vmatprep.subr.mxu0 0.0
        %3133 = vmatpush1.xpose.msra.mxu0 0.0
        %3134 = vmatprep.subr.mxu0 0.0
        %3135 = vmatpush1.xpose.msra.mxu0 0.0
        %3136 = vmatprep.subr.mxu0 0.0
        %3137 = vmatpush1.xpose.msra.mxu0 0.0
        %3138 = vmatprep.subr.mxu0 0.0
        %3139 = vmatpush1.xpose.msra.mxu0 0.0
        %3140 = vmatprep.mubr.f32.mxu0 0.0
        %3141 = vmatmul.mubr.f32.gmra.mrb[0].mxu0 %v3060
        %v3142 = vpop.f32.mrb[0].mxu0
        %v3143 = vadd.f32 0.0, %v3142
        %v3144 = vpop.f32.mrb[0].mxu0
        %3145 = vmatprep.mubr.f32.mxu0 0.0
        %3146 = vmatmul.mubr.f32.gmra.mrb[0].mxu0 %v3062
        %v3147 = vpop.f32.mrb[0].mxu0
        %v3148 = vadd.f32 0.0, %v3147
        %v3149 = vpop.f32.mrb[0].mxu0
        %3150 = vmatprep.mubr.f32.mxu0 0.0
        %3151 = vmatmul.mubr.f32.gmra.mrb[0].mxu0 %v3064
        %v3152 = vpop.f32.mrb[0].mxu0
        %v3153 = vadd.f32 0.0, %v3152
        %v3154 = vpop.f32.mrb[0].mxu0
        %3155 = vmatprep.mubr.f32.mxu0 0.0
        %3156 = vmatmul.mubr.f32.gmra.mrb[0].mxu0 %v3066
        %v3157 = vpop.f32.mrb[0].mxu0
        %v3158 = vadd.f32 0.0, %v3157
        %v3159 = vpop.f32.mrb[0].mxu0
        %3160 = vdwg.mxu0
        %3161 = vrot.lane.b32.xlu0 %v713, 112
        %v3162 = vpop.permute.xlu0 %3161
        %3163 = vrot.lane.b32.xlu0 %v718, 112
        %v3164 = vpop.permute.xlu0 %3163
        %3165 = vrot.lane.b32.xlu0 %v723, 112
        %v3166 = vpop.permute.xlu0 %3165
        %3167 = vrot.lane.b32.xlu0 %v728, 112
        %v3168 = vpop.permute.xlu0 %3167
        %3169 = vrot.lane.b32.xlu0 %v713, 80
        %v3170 = vpop.permute.xlu0 %3169
        %3171 = vrot.lane.b32.xlu0 %v718, 80
        %v3172 = vpop.permute.xlu0 %3171
        %3173 = vrot.lane.b32.xlu0 %v723, 80
        %v3174 = vpop.permute.xlu0 %3173
        %3175 = vrot.lane.b32.xlu0 %v728, 80
        %v3176 = vpop.permute.xlu0 %3175
        %v3177 = vsel %vm783, %v3162, 0
        %v3179 = vsel %vm783, %v3164, 0
        %v3181 = vsel %vm783, %v3166, 0
        %v3183 = vsel %vm783, %v3168, 0
        %v3185 = vsel %vm783, %v3170, 0
        %v3187 = vsel %vm783, %v3172, 0
        %v3189 = vsel %vm783, %v3174, 0
        %v3191 = vsel %vm783, %v3176, 0
        %3193 = vmatprep.subr.mxu0 0.0
        %3194 = vmatpush1.xpose.msra.mxu0 %v3185
        %3195 = vmatprep.subr.mxu0 0.0
        %3196 = vmatpush1.xpose.msra.mxu0 %v3187
        %3197 = vmatprep.subr.mxu0 0.0
        %3198 = vmatpush1.xpose.msra.mxu0 %v3189
        %3199 = vmatprep.subr.mxu0 0.0
        %3200 = vmatpush1.xpose.msra.mxu0 %v3191
        %3201 = vmatprep.subr.mxu0 0.0
        %3202 = vmatpush1.xpose.msra.mxu0 0.0
        %3203 = vmatprep.subr.mxu0 0.0
        %3204 = vmatpush1.xpose.msra.mxu0 0.0
        %3205 = vmatprep.subr.mxu0 0.0
        %3206 = vmatpush1.xpose.msra.mxu0 0.0
        %3207 = vmatprep.subr.mxu0 0.0
        %3208 = vmatpush1.xpose.msra.mxu0 0.0
        %3209 = vmatprep.subr.mxu0 0.0
        %3210 = vmatpush1.xpose.msra.mxu0 0.0
        %3211 = vmatprep.subr.mxu0 0.0
        %3212 = vmatpush1.xpose.msra.mxu0 0.0
        %3213 = vmatprep.subr.mxu0 0.0
        %3214 = vmatpush1.xpose.msra.mxu0 0.0
        %3215 = vmatprep.subr.mxu0 0.0
        %3216 = vmatpush1.xpose.msra.mxu0 0.0
        %3217 = vmatprep.subr.mxu0 0.0
        %3218 = vmatpush1.xpose.msra.mxu0 0.0
        %3219 = vmatprep.subr.mxu0 0.0
        %3220 = vmatpush1.xpose.msra.mxu0 0.0
        %3221 = vmatprep.subr.mxu0 0.0
        %3222 = vmatpush1.xpose.msra.mxu0 0.0
        %3223 = vmatprep.subr.mxu0 0.0
        %3224 = vmatpush1.xpose.msra.mxu0 0.0
        %3225 = vmatprep.subr.mxu0 0.0
        %3226 = vmatpush1.xpose.msra.mxu0 0.0
        %3227 = vmatprep.subr.mxu0 0.0
        %3228 = vmatpush1.xpose.msra.mxu0 0.0
        %3229 = vmatprep.subr.mxu0 0.0
        %3230 = vmatpush1.xpose.msra.mxu0 0.0
        %3231 = vmatprep.subr.mxu0 0.0
        %3232 = vmatpush1.xpose.msra.mxu0 0.0
        %3233 = vmatprep.subr.mxu0 0.0
        %3234 = vmatpush1.xpose.msra.mxu0 0.0
        %3235 = vmatprep.subr.mxu0 0.0
        %3236 = vmatpush1.xpose.msra.mxu0 0.0
        %3237 = vmatprep.subr.mxu0 0.0
        %3238 = vmatpush1.xpose.msra.mxu0 0.0
        %3239 = vmatprep.subr.mxu0 0.0
        %3240 = vmatpush1.xpose.msra.mxu0 0.0
        %3241 = vmatprep.subr.mxu0 0.0
        %3242 = vmatpush1.xpose.msra.mxu0 0.0
        %3243 = vmatprep.subr.mxu0 0.0
        %3244 = vmatpush1.xpose.msra.mxu0 0.0
        %3245 = vmatprep.subr.mxu0 0.0
        %3246 = vmatpush1.xpose.msra.mxu0 0.0
        %3247 = vmatprep.subr.mxu0 0.0
        %3248 = vmatpush1.xpose.msra.mxu0 0.0
        %3249 = vmatprep.subr.mxu0 0.0
        %3250 = vmatpush1.xpose.msra.mxu0 0.0
        %3251 = vmatprep.subr.mxu0 0.0
        %3252 = vmatpush1.xpose.msra.mxu0 0.0
        %3253 = vmatprep.subr.mxu0 0.0
        %3254 = vmatpush1.xpose.msra.mxu0 0.0
        %3255 = vmatprep.subr.mxu0 0.0
        %3256 = vmatpush1.xpose.msra.mxu0 0.0
        %3257 = vmatprep.mubr.f32.mxu0 0.0
        %3258 = vmatmul.mubr.f32.gmra.mrb[0].mxu0 %v3177
        %v3259 = vpop.f32.mrb[0].mxu0
        %v3260 = vadd.f32 0.0, %v3259
        %v3261 = vpop.f32.mrb[0].mxu0
        %3262 = vmatprep.mubr.f32.mxu0 0.0
        %3263 = vmatmul.mubr.f32.gmra.mrb[0].mxu0 %v3179
        %v3264 = vpop.f32.mrb[0].mxu0
        %v3265 = vadd.f32 0.0, %v3264
        %v3266 = vpop.f32.mrb[0].mxu0
        %3267 = vmatprep.mubr.f32.mxu0 0.0
        %3268 = vmatmul.mubr.f32.gmra.mrb[0].mxu0 %v3181
        %v3269 = vpop.f32.mrb[0].mxu0
        %v3270 = vadd.f32 0.0, %v3269
        %v3271 = vpop.f32.mrb[0].mxu0
        %3272 = vmatprep.mubr.f32.mxu0 0.0
        %3273 = vmatmul.mubr.f32.gmra.mrb[0].mxu0 %v3183
        %v3274 = vpop.f32.mrb[0].mxu0
        %v3275 = vadd.f32 0.0, %v3274
        %v3276 = vpop.f32.mrb[0].mxu0
        %3277 = vdwg.mxu0
        %3278 = vrot.lane.b32.xlu0 %v733, 112
        %v3279 = vpop.permute.xlu0 %3278
        %3280 = vrot.lane.b32.xlu0 %v738, 112
        %v3281 = vpop.permute.xlu0 %3280
        %3282 = vrot.lane.b32.xlu0 %v743, 112
        %v3283 = vpop.permute.xlu0 %3282
        %3284 = vrot.lane.b32.xlu0 %v748, 112
        %v3285 = vpop.permute.xlu0 %3284
        %3286 = vrot.lane.b32.xlu0 %v733, 80
        %v3287 = vpop.permute.xlu0 %3286
        %3288 = vrot.lane.b32.xlu0 %v738, 80
        %v3289 = vpop.permute.xlu0 %3288
        %3290 = vrot.lane.b32.xlu0 %v743, 80
        %v3291 = vpop.permute.xlu0 %3290
        %3292 = vrot.lane.b32.xlu0 %v748, 80
        %v3293 = vpop.permute.xlu0 %3292
        %v3294 = vsel %vm783, %v3279, 0
        %v3296 = vsel %vm783, %v3281, 0
        %v3298 = vsel %vm783, %v3283, 0
        %v3300 = vsel %vm783, %v3285, 0
        %v3302 = vsel %vm783, %v3287, 0
        %v3304 = vsel %vm783, %v3289, 0
        %v3306 = vsel %vm783, %v3291, 0
        %v3308 = vsel %vm783, %v3293, 0
        %3310 = vmatprep.subr.mxu0 0.0
        %3311 = vmatpush1.xpose.msra.mxu0 %v3302
        %3312 = vmatprep.subr.mxu0 0.0
        %3313 = vmatpush1.xpose.msra.mxu0 %v3304
        %3314 = vmatprep.subr.mxu0 0.0
        %3315 = vmatpush1.xpose.msra.mxu0 %v3306
        %3316 = vmatprep.subr.mxu0 0.0
        %3317 = vmatpush1.xpose.msra.mxu0 %v3308
        %3318 = vmatprep.subr.mxu0 0.0
        %3319 = vmatpush1.xpose.msra.mxu0 0.0
        %3320 = vmatprep.subr.mxu0 0.0
        %3321 = vmatpush1.xpose.msra.mxu0 0.0
        %3322 = vmatprep.subr.mxu0 0.0
        %3323 = vmatpush1.xpose.msra.mxu0 0.0
        %3324 = vmatprep.subr.mxu0 0.0
        %3325 = vmatpush1.xpose.msra.mxu0 0.0
        %3326 = vmatprep.subr.mxu0 0.0
        %3327 = vmatpush1.xpose.msra.mxu0 0.0
        %3328 = vmatprep.subr.mxu0 0.0
        %3329 = vmatpush1.xpose.msra.mxu0 0.0
        %3330 = vmatprep.subr.mxu0 0.0
        %3331 = vmatpush1.xpose.msra.mxu0 0.0
        %3332 = vmatprep.subr.mxu0 0.0
        %3333 = vmatpush1.xpose.msra.mxu0 0.0
        %3334 = vmatprep.subr.mxu0 0.0
        %3335 = vmatpush1.xpose.msra.mxu0 0.0
        %3336 = vmatprep.subr.mxu0 0.0
        %3337 = vmatpush1.xpose.msra.mxu0 0.0
        %3338 = vmatprep.subr.mxu0 0.0
        %3339 = vmatpush1.xpose.msra.mxu0 0.0
        %3340 = vmatprep.subr.mxu0 0.0
        %3341 = vmatpush1.xpose.msra.mxu0 0.0
        %3342 = vmatprep.subr.mxu0 0.0
        %3343 = vmatpush1.xpose.msra.mxu0 0.0
        %3344 = vmatprep.subr.mxu0 0.0
        %3345 = vmatpush1.xpose.msra.mxu0 0.0
        %3346 = vmatprep.subr.mxu0 0.0
        %3347 = vmatpush1.xpose.msra.mxu0 0.0
        %3348 = vmatprep.subr.mxu0 0.0
        %3349 = vmatpush1.xpose.msra.mxu0 0.0
        %3350 = vmatprep.subr.mxu0 0.0
        %3351 = vmatpush1.xpose.msra.mxu0 0.0
        %3352 = vmatprep.subr.mxu0 0.0
        %3353 = vmatpush1.xpose.msra.mxu0 0.0
        %3354 = vmatprep.subr.mxu0 0.0
        %3355 = vmatpush1.xpose.msra.mxu0 0.0
        %3356 = vmatprep.subr.mxu0 0.0
        %3357 = vmatpush1.xpose.msra.mxu0 0.0
        %3358 = vmatprep.subr.mxu0 0.0
        %3359 = vmatpush1.xpose.msra.mxu0 0.0
        %3360 = vmatprep.subr.mxu0 0.0
        %3361 = vmatpush1.xpose.msra.mxu0 0.0
        %3362 = vmatprep.subr.mxu0 0.0
        %3363 = vmatpush1.xpose.msra.mxu0 0.0
        %3364 = vmatprep.subr.mxu0 0.0
        %3365 = vmatpush1.xpose.msra.mxu0 0.0
        %3366 = vmatprep.subr.mxu0 0.0
        %3367 = vmatpush1.xpose.msra.mxu0 0.0
        %3368 = vmatprep.subr.mxu0 0.0
        %3369 = vmatpush1.xpose.msra.mxu0 0.0
        %3370 = vmatprep.subr.mxu0 0.0
        %3371 = vmatpush1.xpose.msra.mxu0 0.0
        %3372 = vmatprep.subr.mxu0 0.0
        %3373 = vmatpush1.xpose.msra.mxu0 0.0
        %3374 = vmatprep.mubr.f32.mxu0 0.0
        %3375 = vmatmul.mubr.f32.gmra.mrb[0].mxu0 %v3294
        %v3376 = vpop.f32.mrb[0].mxu0
        %v3377 = vadd.f32 0.0, %v3376
        %v3378 = vpop.f32.mrb[0].mxu0
        %3379 = vmatprep.mubr.f32.mxu0 0.0
        %3380 = vmatmul.mubr.f32.gmra.mrb[0].mxu0 %v3296
        %v3381 = vpop.f32.mrb[0].mxu0
        %v3382 = vadd.f32 0.0, %v3381
        %v3383 = vpop.f32.mrb[0].mxu0
        %3384 = vmatprep.mubr.f32.mxu0 0.0
        %3385 = vmatmul.mubr.f32.gmra.mrb[0].mxu0 %v3298
        %v3386 = vpop.f32.mrb[0].mxu0
        %v3387 = vadd.f32 0.0, %v3386
        %v3388 = vpop.f32.mrb[0].mxu0
        %3389 = vmatprep.mubr.f32.mxu0 0.0
        %3390 = vmatmul.mubr.f32.gmra.mrb[0].mxu0 %v3300
        %v3391 = vpop.f32.mrb[0].mxu0
        %v3392 = vadd.f32 0.0, %v3391
        %v3393 = vpop.f32.mrb[0].mxu0
        %3394 = vdwg.mxu0
        %3395 = vrot.lane.b32.xlu0 %v753, 112
        %v3396 = vpop.permute.xlu0 %3395
        %3397 = vrot.lane.b32.xlu0 %v758, 112
        %v3398 = vpop.permute.xlu0 %3397
        %3399 = vrot.lane.b32.xlu0 %v763, 112
        %v3400 = vpop.permute.xlu0 %3399
        %3401 = vrot.lane.b32.xlu0 %v768, 112
        %v3402 = vpop.permute.xlu0 %3401
        %3403 = vrot.lane.b32.xlu0 %v753, 80
        %v3404 = vpop.permute.xlu0 %3403
        %3405 = vrot.lane.b32.xlu0 %v758, 80
        %v3406 = vpop.permute.xlu0 %3405
        %3407 = vrot.lane.b32.xlu0 %v763, 80
        %v3408 = vpop.permute.xlu0 %3407
        %3409 = vrot.lane.b32.xlu0 %v768, 80
        %v3410 = vpop.permute.xlu0 %3409
        %v3411 = vsel %vm783, %v3396, 0
        %v3413 = vsel %vm783, %v3398, 0
        %v3415 = vsel %vm783, %v3400, 0
        %v3417 = vsel %vm783, %v3402, 0
        %v3419 = vsel %vm783, %v3404, 0
        %v3421 = vsel %vm783, %v3406, 0
        %v3423 = vsel %vm783, %v3408, 0
        %v3425 = vsel %vm783, %v3410, 0
        %3427 = vmatprep.subr.mxu0 0.0
        %3428 = vmatpush1.xpose.msra.mxu0 %v3419
        %3429 = vmatprep.subr.mxu0 0.0
        %3430 = vmatpush1.xpose.msra.mxu0 %v3421
        %3431 = vmatprep.subr.mxu0 0.0
        %3432 = vmatpush1.xpose.msra.mxu0 %v3423
        %3433 = vmatprep.subr.mxu0 0.0
        %3434 = vmatpush1.xpose.msra.mxu0 %v3425
        %3435 = vmatprep.subr.mxu0 0.0
        %3436 = vmatpush1.xpose.msra.mxu0 0.0
        %3437 = vmatprep.subr.mxu0 0.0
        %3438 = vmatpush1.xpose.msra.mxu0 0.0
        %3439 = vmatprep.subr.mxu0 0.0
        %3440 = vmatpush1.xpose.msra.mxu0 0.0
        %3441 = vmatprep.subr.mxu0 0.0
        %3442 = vmatpush1.xpose.msra.mxu0 0.0
        %3443 = vmatprep.subr.mxu0 0.0
        %3444 = vmatpush1.xpose.msra.mxu0 0.0
        %3445 = vmatprep.subr.mxu0 0.0
        %3446 = vmatpush1.xpose.msra.mxu0 0.0
        %3447 = vmatprep.subr.mxu0 0.0
        %3448 = vmatpush1.xpose.msra.mxu0 0.0
        %3449 = vmatprep.subr.mxu0 0.0
        %3450 = vmatpush1.xpose.msra.mxu0 0.0
        %3451 = vmatprep.subr.mxu0 0.0
        %3452 = vmatpush1.xpose.msra.mxu0 0.0
        %3453 = vmatprep.subr.mxu0 0.0
        %3454 = vmatpush1.xpose.msra.mxu0 0.0
        %3455 = vmatprep.subr.mxu0 0.0
        %3456 = vmatpush1.xpose.msra.mxu0 0.0
        %3457 = vmatprep.subr.mxu0 0.0
        %3458 = vmatpush1.xpose.msra.mxu0 0.0
        %3459 = vmatprep.subr.mxu0 0.0
        %3460 = vmatpush1.xpose.msra.mxu0 0.0
        %3461 = vmatprep.subr.mxu0 0.0
        %3462 = vmatpush1.xpose.msra.mxu0 0.0
        %3463 = vmatprep.subr.mxu0 0.0
        %3464 = vmatpush1.xpose.msra.mxu0 0.0
        %3465 = vmatprep.subr.mxu0 0.0
        %3466 = vmatpush1.xpose.msra.mxu0 0.0
        %3467 = vmatprep.subr.mxu0 0.0
        %3468 = vmatpush1.xpose.msra.mxu0 0.0
        %3469 = vmatprep.subr.mxu0 0.0
        %3470 = vmatpush1.xpose.msra.mxu0 0.0
        %3471 = vmatprep.subr.mxu0 0.0
        %3472 = vmatpush1.xpose.msra.mxu0 0.0
        %3473 = vmatprep.subr.mxu0 0.0
        %3474 = vmatpush1.xpose.msra.mxu0 0.0
        %3475 = vmatprep.subr.mxu0 0.0
        %3476 = vmatpush1.xpose.msra.mxu0 0.0
        %3477 = vmatprep.subr.mxu0 0.0
        %3478 = vmatpush1.xpose.msra.mxu0 0.0
        %3479 = vmatprep.subr.mxu0 0.0
        %3480 = vmatpush1.xpose.msra.mxu0 0.0
        %3481 = vmatprep.subr.mxu0 0.0
        %3482 = vmatpush1.xpose.msra.mxu0 0.0
        %3483 = vmatprep.subr.mxu0 0.0
        %3484 = vmatpush1.xpose.msra.mxu0 0.0
        %3485 = vmatprep.subr.mxu0 0.0
        %3486 = vmatpush1.xpose.msra.mxu0 0.0
        %3487 = vmatprep.subr.mxu0 0.0
        %3488 = vmatpush1.xpose.msra.mxu0 0.0
        %3489 = vmatprep.subr.mxu0 0.0
        %3490 = vmatpush1.xpose.msra.mxu0 0.0
        %3491 = vmatprep.mubr.f32.mxu0 0.0
        %3492 = vmatmul.mubr.f32.gmra.mrb[0].mxu0 %v3411
        %v3493 = vpop.f32.mrb[0].mxu0
        %v3494 = vadd.f32 0.0, %v3493
        %v3495 = vpop.f32.mrb[0].mxu0
        %3496 = vmatprep.mubr.f32.mxu0 0.0
        %3497 = vmatmul.mubr.f32.gmra.mrb[0].mxu0 %v3413
        %v3498 = vpop.f32.mrb[0].mxu0
        %v3499 = vadd.f32 0.0, %v3498
        %v3500 = vpop.f32.mrb[0].mxu0
        %3501 = vmatprep.mubr.f32.mxu0 0.0
        %3502 = vmatmul.mubr.f32.gmra.mrb[0].mxu0 %v3415
        %v3503 = vpop.f32.mrb[0].mxu0
        %v3504 = vadd.f32 0.0, %v3503
        %v3505 = vpop.f32.mrb[0].mxu0
        %3506 = vmatprep.mubr.f32.mxu0 0.0
        %3507 = vmatmul.mubr.f32.gmra.mrb[0].mxu0 %v3417
        %v3508 = vpop.f32.mrb[0].mxu0
        %v3509 = vadd.f32 0.0, %v3508
        %v3510 = vpop.f32.mrb[0].mxu0
        %3511 = vdwg.mxu0
        %v3512 = vmul.f32 %v3143, 0.35355338
        %v3513 = vmul.f32 %v3148, 0.35355338
        %v3514 = vmul.f32 %v3153, 0.35355338
        %v3515 = vmul.f32 %v3158, 0.35355338
        %v3516 = vmul.f32 %v3260, 0.35355338
        %v3517 = vmul.f32 %v3265, 0.35355338
        %v3518 = vmul.f32 %v3270, 0.35355338
        %v3519 = vmul.f32 %v3275, 0.35355338
        %v3520 = vmul.f32 %v3377, 0.35355338
        %v3521 = vmul.f32 %v3382, 0.35355338
        %v3522 = vmul.f32 %v3387, 0.35355338
        %v3523 = vmul.f32 %v3392, 0.35355338
        %v3524 = vmul.f32 %v3494, 0.35355338
        %v3525 = vmul.f32 %v3499, 0.35355338
        %v3526 = vmul.f32 %v3504, 0.35355338
        %v3527 = vmul.f32 %v3509, 0.35355338
        %v3528 = vsel %vm318, %v3512, -inf
        %3529 = vmax.xlane.f32.xlu0 %v3528
        %v3530 = vpop.xlane.xlu0 %3529
        %v3531 = vsel %vm318, %v3513, -inf
        %3532 = vmax.xlane.f32.xlu0 %v3531
        %v3533 = vpop.xlane.xlu0 %3532
        %v3534 = vsel %vm318, %v3514, -inf
        %3535 = vmax.xlane.f32.xlu0 %v3534
        %v3536 = vpop.xlane.xlu0 %3535
        %v3537 = vsel %vm318, %v3515, -inf
        %3538 = vmax.xlane.f32.xlu0 %v3537
        %v3539 = vpop.xlane.xlu0 %3538
        %v3540 = vsel %vm318, %v3516, -inf
        %3541 = vmax.xlane.f32.xlu0 %v3540
        %v3542 = vpop.xlane.xlu0 %3541
        %v3543 = vsel %vm318, %v3517, -inf
        %3544 = vmax.xlane.f32.xlu0 %v3543
        %v3545 = vpop.xlane.xlu0 %3544
        %v3546 = vsel %vm318, %v3518, -inf
        %3547 = vmax.xlane.f32.xlu0 %v3546
        %v3548 = vpop.xlane.xlu0 %3547
        %v3549 = vsel %vm318, %v3519, -inf
        %3550 = vmax.xlane.f32.xlu0 %v3549
        %v3551 = vpop.xlane.xlu0 %3550
        %v3552 = vsel %vm318, %v3520, -inf
        %3553 = vmax.xlane.f32.xlu0 %v3552
        %v3554 = vpop.xlane.xlu0 %3553
        %v3555 = vsel %vm318, %v3521, -inf
        %3556 = vmax.xlane.f32.xlu0 %v3555
        %v3557 = vpop.xlane.xlu0 %3556
        %v3558 = vsel %vm318, %v3522, -inf
        %3559 = vmax.xlane.f32.xlu0 %v3558
        %v3560 = vpop.xlane.xlu0 %3559
        %v3561 = vsel %vm318, %v3523, -inf
        %3562 = vmax.xlane.f32.xlu0 %v3561
        %v3563 = vpop.xlane.xlu0 %3562
        %v3564 = vsel %vm318, %v3524, -inf
        %3565 = vmax.xlane.f32.xlu0 %v3564
        %v3566 = vpop.xlane.xlu0 %3565
        %v3567 = vsel %vm318, %v3525, -inf
        %3568 = vmax.xlane.f32.xlu0 %v3567
        %v3569 = vpop.xlane.xlu0 %3568
        %v3570 = vsel %vm318, %v3526, -inf
        %3571 = vmax.xlane.f32.xlu0 %v3570
        %v3572 = vpop.xlane.xlu0 %3571
        %v3573 = vsel %vm318, %v3527, -inf
        %3574 = vmax.xlane.f32.xlu0 %v3573
        %v3575 = vpop.xlane.xlu0 %3574
        %v3576 = vsub.f32 %v3512, %v3530
        %v3577 = vsub.f32 %v3513, %v3533
        %v3578 = vsub.f32 %v3514, %v3536
        %v3579 = vsub.f32 %v3515, %v3539
        %v3580 = vsub.f32 %v3516, %v3542
        %v3581 = vsub.f32 %v3517, %v3545
        %v3582 = vsub.f32 %v3518, %v3548
        %v3583 = vsub.f32 %v3519, %v3551
        %v3584 = vsub.f32 %v3520, %v3554
        %v3585 = vsub.f32 %v3521, %v3557
        %v3586 = vsub.f32 %v3522, %v3560
        %v3587 = vsub.f32 %v3523, %v3563
        %v3588 = vsub.f32 %v3524, %v3566
        %v3589 = vsub.f32 %v3525, %v3569
        %v3590 = vsub.f32 %v3526, %v3572
        %v3591 = vsub.f32 %v3527, %v3575
        %v3592 = vmul.f32 %v3576, 1.442695
        %v3593 = vpow.pop %v3592
        %v3594 = vmul.f32 %v3577, 1.442695
        %v3595 = vpow.pop %v3594
        %v3596 = vmul.f32 %v3578, 1.442695
        %v3597 = vpow.pop %v3596
        %v3598 = vmul.f32 %v3579, 1.442695
        %v3599 = vpow.pop %v3598
        %v3600 = vmul.f32 %v3580, 1.442695
        %v3601 = vpow.pop %v3600
        %v3602 = vmul.f32 %v3581, 1.442695
        %v3603 = vpow.pop %v3602
        %v3604 = vmul.f32 %v3582, 1.442695
        %v3605 = vpow.pop %v3604
        %v3606 = vmul.f32 %v3583, 1.442695
        %v3607 = vpow.pop %v3606
        %v3608 = vmul.f32 %v3584, 1.442695
        %v3609 = vpow.pop %v3608
        %v3610 = vmul.f32 %v3585, 1.442695
        %v3611 = vpow.pop %v3610
        %v3612 = vmul.f32 %v3586, 1.442695
        %v3613 = vpow.pop %v3612
        %v3614 = vmul.f32 %v3587, 1.442695
        %v3615 = vpow.pop %v3614
        %v3616 = vmul.f32 %v3588, 1.442695
        %v3617 = vpow.pop %v3616
        %v3618 = vmul.f32 %v3589, 1.442695
        %v3619 = vpow.pop %v3618
        %v3620 = vmul.f32 %v3590, 1.442695
        %v3621 = vpow.pop %v3620
        %v3622 = vmul.f32 %v3591, 1.442695
        %v3623 = vpow.pop %v3622
        %v3624 = vsel %vm318, %v3593, 0.0
        %3625 = vadd.xlane.f32.xlu0 %v3624
        %v3626 = vpop.xlane.xlu0 %3625
        %v3627 = vsel %vm318, %v3595, 0.0
        %3628 = vadd.xlane.f32.xlu0 %v3627
        %v3629 = vpop.xlane.xlu0 %3628
        %v3630 = vsel %vm318, %v3597, 0.0
        %3631 = vadd.xlane.f32.xlu0 %v3630
        %v3632 = vpop.xlane.xlu0 %3631
        %v3633 = vsel %vm318, %v3599, 0.0
        %3634 = vadd.xlane.f32.xlu0 %v3633
        %v3635 = vpop.xlane.xlu0 %3634
        %v3636 = vsel %vm318, %v3601, 0.0
        %3637 = vadd.xlane.f32.xlu0 %v3636
        %v3638 = vpop.xlane.xlu0 %3637
        %v3639 = vsel %vm318, %v3603, 0.0
        %3640 = vadd.xlane.f32.xlu0 %v3639
        %v3641 = vpop.xlane.xlu0 %3640
        %v3642 = vsel %vm318, %v3605, 0.0
        %3643 = vadd.xlane.f32.xlu0 %v3642
        %v3644 = vpop.xlane.xlu0 %3643
        %v3645 = vsel %vm318, %v3607, 0.0
        %3646 = vadd.xlane.f32.xlu0 %v3645
        %v3647 = vpop.xlane.xlu0 %3646
        %v3648 = vsel %vm318, %v3609, 0.0
        %3649 = vadd.xlane.f32.xlu0 %v3648
        %v3650 = vpop.xlane.xlu0 %3649
        %v3651 = vsel %vm318, %v3611, 0.0
        %3652 = vadd.xlane.f32.xlu0 %v3651
        %v3653 = vpop.xlane.xlu0 %3652
        %v3654 = vsel %vm318, %v3613, 0.0
        %3655 = vadd.xlane.f32.xlu0 %v3654
        %v3656 = vpop.xlane.xlu0 %3655
        %v3657 = vsel %vm318, %v3615, 0.0
        %3658 = vadd.xlane.f32.xlu0 %v3657
        %v3659 = vpop.xlane.xlu0 %3658
        %v3660 = vsel %vm318, %v3617, 0.0
        %3661 = vadd.xlane.f32.xlu0 %v3660
        %v3662 = vpop.xlane.xlu0 %3661
        %v3663 = vsel %vm318, %v3619, 0.0
        %3664 = vadd.xlane.f32.xlu0 %v3663
        %v3665 = vpop.xlane.xlu0 %3664
        %v3666 = vsel %vm318, %v3621, 0.0
        %3667 = vadd.xlane.f32.xlu0 %v3666
        %v3668 = vpop.xlane.xlu0 %3667
        %v3669 = vsel %vm318, %v3623, 0.0
        %3670 = vadd.xlane.f32.xlu0 %v3669
        %v3671 = vpop.xlane.xlu0 %3670
        %v3672 = vrcp.pop %v3626
        %v3673 = vrcp.pop %v3629
        %v3674 = vrcp.pop %v3632
        %v3675 = vrcp.pop %v3635
        %v3676 = vrcp.pop %v3638
        %v3677 = vrcp.pop %v3641
        %v3678 = vrcp.pop %v3644
        %v3679 = vrcp.pop %v3647
        %v3680 = vrcp.pop %v3650
        %v3681 = vrcp.pop %v3653
        %v3682 = vrcp.pop %v3656
        %v3683 = vrcp.pop %v3659
        %v3684 = vrcp.pop %v3662
        %v3685 = vrcp.pop %v3665
        %v3686 = vrcp.pop %v3668
        %v3687 = vrcp.pop %v3671
        %v3688 = vmul.f32 %v3626, %v3672
        %v3689 = vmul.f32 %v3629, %v3673
        %v3690 = vmul.f32 %v3632, %v3674
        %v3691 = vmul.f32 %v3635, %v3675
        %v3692 = vmul.f32 %v3638, %v3676
        %v3693 = vmul.f32 %v3641, %v3677
        %v3694 = vmul.f32 %v3644, %v3678
        %v3695 = vmul.f32 %v3647, %v3679
        %v3696 = vmul.f32 %v3650, %v3680
        %v3697 = vmul.f32 %v3653, %v3681
        %v3698 = vmul.f32 %v3656, %v3682
        %v3699 = vmul.f32 %v3659, %v3683
        %v3700 = vmul.f32 %v3662, %v3684
        %v3701 = vmul.f32 %v3665, %v3685
        %v3702 = vmul.f32 %v3668, %v3686
        %v3703 = vmul.f32 %v3671, %v3687
        %v3704 = vsub.f32 2.0, %v3688
        %v3705 = vsub.f32 2.0, %v3689
        %v3706 = vsub.f32 2.0, %v3690
        %v3707 = vsub.f32 2.0, %v3691
        %v3708 = vsub.f32 2.0, %v3692
        %v3709 = vsub.f32 2.0, %v3693
        %v3710 = vsub.f32 2.0, %v3694
        %v3711 = vsub.f32 2.0, %v3695
        %v3712 = vsub.f32 2.0, %v3696
        %v3713 = vsub.f32 2.0, %v3697
        %v3714 = vsub.f32 2.0, %v3698
        %v3715 = vsub.f32 2.0, %v3699
        %v3716 = vsub.f32 2.0, %v3700
        %v3717 = vsub.f32 2.0, %v3701
        %v3718 = vsub.f32 2.0, %v3702
        %v3719 = vsub.f32 2.0, %v3703
        %v3720 = vmul.f32 %v3672, %v3704
        %v3721 = vmul.f32 %v3673, %v3705
        %v3722 = vmul.f32 %v3674, %v3706
        %v3723 = vmul.f32 %v3675, %v3707
        %v3724 = vmul.f32 %v3676, %v3708
        %v3725 = vmul.f32 %v3677, %v3709
        %v3726 = vmul.f32 %v3678, %v3710
        %v3727 = vmul.f32 %v3679, %v3711
        %v3728 = vmul.f32 %v3680, %v3712
        %v3729 = vmul.f32 %v3681, %v3713
        %v3730 = vmul.f32 %v3682, %v3714
        %v3731 = vmul.f32 %v3683, %v3715
        %v3732 = vmul.f32 %v3684, %v3716
        %v3733 = vmul.f32 %v3685, %v3717
        %v3734 = vmul.f32 %v3686, %v3718
        %v3735 = vmul.f32 %v3687, %v3719
        %v3736 = vmul.f32 %v3593, %v3720
        %v3737 = vmul.f32 %v3595, %v3721
        %v3738 = vmul.f32 %v3597, %v3722
        %v3739 = vmul.f32 %v3599, %v3723
        %v3740 = vmul.f32 %v3601, %v3724
        %v3741 = vmul.f32 %v3603, %v3725
        %v3742 = vmul.f32 %v3605, %v3726
        %v3743 = vmul.f32 %v3607, %v3727
        %v3744 = vmul.f32 %v3609, %v3728
        %v3745 = vmul.f32 %v3611, %v3729
        %v3746 = vmul.f32 %v3613, %v3730
        %v3747 = vmul.f32 %v3615, %v3731
        %v3748 = vmul.f32 %v3617, %v3732
        %v3749 = vmul.f32 %v3619, %v3733
        %v3750 = vmul.f32 %v3621, %v3734
        %v3751 = vmul.f32 %v3623, %v3735
        %3752 = vrot.lane.b32.xlu0 %v693, 48
        %v3753 = vpop.permute.xlu0 %3752
        %3754 = vrot.lane.b32.xlu0 %v698, 48
        %v3755 = vpop.permute.xlu0 %3754
        %3756 = vrot.lane.b32.xlu0 %v703, 48
        %v3757 = vpop.permute.xlu0 %3756
        %3758 = vrot.lane.b32.xlu0 %v708, 48
        %v3759 = vpop.permute.xlu0 %3758
        %v3765 = vsel %vm318, %v3736, 0
        %v3768 = vsel %vm318, %v3737, 0
        %v3771 = vsel %vm318, %v3738, 0
        %v3774 = vsel %vm318, %v3739, 0
        %3776 = vmatprep.subr.mxu0 0.0
        %3777 = vmatpush1.msra.mxu0 %v3753
        %3778 = vmatprep.subr.mxu0 0.0
        %3779 = vmatpush1.msra.mxu0 %v3755
        %3780 = vmatprep.subr.mxu0 0.0
        %3781 = vmatpush1.msra.mxu0 %v3757
        %3782 = vmatprep.subr.mxu0 0.0
        %3783 = vmatpush1.msra.mxu0 %v3759
        %3784 = vmatprep.subr.mxu0 0.0
        %3785 = vmatpush1.msra.mxu0 0.0
        %3786 = vmatprep.subr.mxu0 0.0
        %3787 = vmatpush1.msra.mxu0 0.0
        %3788 = vmatprep.subr.mxu0 0.0
        %3789 = vmatpush1.msra.mxu0 0.0
        %3790 = vmatprep.subr.mxu0 0.0
        %3791 = vmatpush1.msra.mxu0 0.0
        %3792 = vmatprep.subr.mxu0 0.0
        %3793 = vmatpush1.msra.mxu0 0.0
        %3794 = vmatprep.subr.mxu0 0.0
        %3795 = vmatpush1.msra.mxu0 0.0
        %3796 = vmatprep.subr.mxu0 0.0
        %3797 = vmatpush1.msra.mxu0 0.0
        %3798 = vmatprep.subr.mxu0 0.0
        %3799 = vmatpush1.msra.mxu0 0.0
        %3800 = vmatprep.subr.mxu0 0.0
        %3801 = vmatpush1.msra.mxu0 0.0
        %3802 = vmatprep.subr.mxu0 0.0
        %3803 = vmatpush1.msra.mxu0 0.0
        %3804 = vmatprep.subr.mxu0 0.0
        %3805 = vmatpush1.msra.mxu0 0.0
        %3806 = vmatprep.subr.mxu0 0.0
        %3807 = vmatpush1.msra.mxu0 0.0
        %3808 = vmatprep.subr.mxu0 0.0
        %3809 = vmatpush1.msra.mxu0 0.0
        %3810 = vmatprep.subr.mxu0 0.0
        %3811 = vmatpush1.msra.mxu0 0.0
        %3812 = vmatprep.subr.mxu0 0.0
        %3813 = vmatpush1.msra.mxu0 0.0
        %3814 = vmatprep.subr.mxu0 0.0
        %3815 = vmatpush1.msra.mxu0 0.0
        %3816 = vmatprep.subr.mxu0 0.0
        %3817 = vmatpush1.msra.mxu0 0.0
        %3818 = vmatprep.subr.mxu0 0.0
        %3819 = vmatpush1.msra.mxu0 0.0
        %3820 = vmatprep.subr.mxu0 0.0
        %3821 = vmatpush1.msra.mxu0 0.0
        %3822 = vmatprep.subr.mxu0 0.0
        %3823 = vmatpush1.msra.mxu0 0.0
        %3824 = vmatprep.subr.mxu0 0.0
        %3825 = vmatpush1.msra.mxu0 0.0
        %3826 = vmatprep.subr.mxu0 0.0
        %3827 = vmatpush1.msra.mxu0 0.0
        %3828 = vmatprep.subr.mxu0 0.0
        %3829 = vmatpush1.msra.mxu0 0.0
        %3830 = vmatprep.subr.mxu0 0.0
        %3831 = vmatpush1.msra.mxu0 0.0
        %3832 = vmatprep.subr.mxu0 0.0
        %3833 = vmatpush1.msra.mxu0 0.0
        %3834 = vmatprep.subr.mxu0 0.0
        %3835 = vmatpush1.msra.mxu0 0.0
        %3836 = vmatprep.subr.mxu0 0.0
        %3837 = vmatpush1.msra.mxu0 0.0
        %3838 = vmatprep.subr.mxu0 0.0
        %3839 = vmatpush1.msra.mxu0 0.0
        %3840 = vmatprep.mubr.f32.mxu0 0.0
        %3841 = vmatmul.mubr.f32.gmra.mrb[0].mxu0 %v3765
        %v3842 = vpop.f32.mrb[0].mxu0
        %v3843 = vadd.f32 0.0, %v3842
        %v3844 = vpop.f32.mrb[0].mxu0
        %3845 = vmatprep.mubr.f32.mxu0 0.0
        %3846 = vmatmul.mubr.f32.gmra.mrb[0].mxu0 %v3768
        %v3847 = vpop.f32.mrb[0].mxu0
        %v3848 = vadd.f32 0.0, %v3847
        %v3849 = vpop.f32.mrb[0].mxu0
        %3850 = vmatprep.mubr.f32.mxu0 0.0
        %3851 = vmatmul.mubr.f32.gmra.mrb[0].mxu0 %v3771
        %v3852 = vpop.f32.mrb[0].mxu0
        %v3853 = vadd.f32 0.0, %v3852
        %v3854 = vpop.f32.mrb[0].mxu0
        %3855 = vmatprep.mubr.f32.mxu0 0.0
        %3856 = vmatmul.mubr.f32.gmra.mrb[0].mxu0 %v3774
        %v3857 = vpop.f32.mrb[0].mxu0
        %v3858 = vadd.f32 0.0, %v3857
        %v3859 = vpop.f32.mrb[0].mxu0
        %3860 = vdwg.mxu0
        %3861 = vrot.lane.b32.xlu0 %v713, 48
        %v3862 = vpop.permute.xlu0 %3861
        %3863 = vrot.lane.b32.xlu0 %v718, 48
        %v3864 = vpop.permute.xlu0 %3863
        %3865 = vrot.lane.b32.xlu0 %v723, 48
        %v3866 = vpop.permute.xlu0 %3865
        %3867 = vrot.lane.b32.xlu0 %v728, 48
        %v3868 = vpop.permute.xlu0 %3867
        %v3874 = vsel %vm318, %v3740, 0
        %v3877 = vsel %vm318, %v3741, 0
        %v3880 = vsel %vm318, %v3742, 0
        %v3883 = vsel %vm318, %v3743, 0
        %3885 = vmatprep.subr.mxu0 0.0
        %3886 = vmatpush1.msra.mxu0 %v3862
        %3887 = vmatprep.subr.mxu0 0.0
        %3888 = vmatpush1.msra.mxu0 %v3864
        %3889 = vmatprep.subr.mxu0 0.0
        %3890 = vmatpush1.msra.mxu0 %v3866
        %3891 = vmatprep.subr.mxu0 0.0
        %3892 = vmatpush1.msra.mxu0 %v3868
        %3893 = vmatprep.subr.mxu0 0.0
        %3894 = vmatpush1.msra.mxu0 0.0
        %3895 = vmatprep.subr.mxu0 0.0
        %3896 = vmatpush1.msra.mxu0 0.0
        %3897 = vmatprep.subr.mxu0 0.0
        %3898 = vmatpush1.msra.mxu0 0.0
        %3899 = vmatprep.subr.mxu0 0.0
        %3900 = vmatpush1.msra.mxu0 0.0
        %3901 = vmatprep.subr.mxu0 0.0
        %3902 = vmatpush1.msra.mxu0 0.0
        %3903 = vmatprep.subr.mxu0 0.0
        %3904 = vmatpush1.msra.mxu0 0.0
        %3905 = vmatprep.subr.mxu0 0.0
        %3906 = vmatpush1.msra.mxu0 0.0
        %3907 = vmatprep.subr.mxu0 0.0
        %3908 = vmatpush1.msra.mxu0 0.0
        %3909 = vmatprep.subr.mxu0 0.0
        %3910 = vmatpush1.msra.mxu0 0.0
        %3911 = vmatprep.subr.mxu0 0.0
        %3912 = vmatpush1.msra.mxu0 0.0
        %3913 = vmatprep.subr.mxu0 0.0
        %3914 = vmatpush1.msra.mxu0 0.0
        %3915 = vmatprep.subr.mxu0 0.0
        %3916 = vmatpush1.msra.mxu0 0.0
        %3917 = vmatprep.subr.mxu0 0.0
        %3918 = vmatpush1.msra.mxu0 0.0
        %3919 = vmatprep.subr.mxu0 0.0
        %3920 = vmatpush1.msra.mxu0 0.0
        %3921 = vmatprep.subr.mxu0 0.0
        %3922 = vmatpush1.msra.mxu0 0.0
        %3923 = vmatprep.subr.mxu0 0.0
        %3924 = vmatpush1.msra.mxu0 0.0
        %3925 = vmatprep.subr.mxu0 0.0
        %3926 = vmatpush1.msra.mxu0 0.0
        %3927 = vmatprep.subr.mxu0 0.0
        %3928 = vmatpush1.msra.mxu0 0.0
        %3929 = vmatprep.subr.mxu0 0.0
        %3930 = vmatpush1.msra.mxu0 0.0
        %3931 = vmatprep.subr.mxu0 0.0
        %3932 = vmatpush1.msra.mxu0 0.0
        %3933 = vmatprep.subr.mxu0 0.0
        %3934 = vmatpush1.msra.mxu0 0.0
        %3935 = vmatprep.subr.mxu0 0.0
        %3936 = vmatpush1.msra.mxu0 0.0
        %3937 = vmatprep.subr.mxu0 0.0
        %3938 = vmatpush1.msra.mxu0 0.0
        %3939 = vmatprep.subr.mxu0 0.0
        %3940 = vmatpush1.msra.mxu0 0.0
        %3941 = vmatprep.subr.mxu0 0.0
        %3942 = vmatpush1.msra.mxu0 0.0
        %3943 = vmatprep.subr.mxu0 0.0
        %3944 = vmatpush1.msra.mxu0 0.0
        %3945 = vmatprep.subr.mxu0 0.0
        %3946 = vmatpush1.msra.mxu0 0.0
        %3947 = vmatprep.subr.mxu0 0.0
        %3948 = vmatpush1.msra.mxu0 0.0
        %3949 = vmatprep.mubr.f32.mxu0 0.0
        %3950 = vmatmul.mubr.f32.gmra.mrb[0].mxu0 %v3874
        %v3951 = vpop.f32.mrb[0].mxu0
        %v3952 = vadd.f32 0.0, %v3951
        %v3953 = vpop.f32.mrb[0].mxu0
        %3954 = vmatprep.mubr.f32.mxu0 0.0
        %3955 = vmatmul.mubr.f32.gmra.mrb[0].mxu0 %v3877
        %v3956 = vpop.f32.mrb[0].mxu0
        %v3957 = vadd.f32 0.0, %v3956
        %v3958 = vpop.f32.mrb[0].mxu0
        %3959 = vmatprep.mubr.f32.mxu0 0.0
        %3960 = vmatmul.mubr.f32.gmra.mrb[0].mxu0 %v3880
        %v3961 = vpop.f32.mrb[0].mxu0
        %v3962 = vadd.f32 0.0, %v3961
        %v3963 = vpop.f32.mrb[0].mxu0
        %3964 = vmatprep.mubr.f32.mxu0 0.0
        %3965 = vmatmul.mubr.f32.gmra.mrb[0].mxu0 %v3883
        %v3966 = vpop.f32.mrb[0].mxu0
        %v3967 = vadd.f32 0.0, %v3966
        %v3968 = vpop.f32.mrb[0].mxu0
        %3969 = vdwg.mxu0
        %3970 = vrot.lane.b32.xlu0 %v733, 48
        %v3971 = vpop.permute.xlu0 %3970
        %3972 = vrot.lane.b32.xlu0 %v738, 48
        %v3973 = vpop.permute.xlu0 %3972
        %3974 = vrot.lane.b32.xlu0 %v743, 48
        %v3975 = vpop.permute.xlu0 %3974
        %3976 = vrot.lane.b32.xlu0 %v748, 48
        %v3977 = vpop.permute.xlu0 %3976
        %v3983 = vsel %vm318, %v3744, 0
        %v3986 = vsel %vm318, %v3745, 0
        %v3989 = vsel %vm318, %v3746, 0
        %v3992 = vsel %vm318, %v3747, 0
        %3994 = vmatprep.subr.mxu0 0.0
        %3995 = vmatpush1.msra.mxu0 %v3971
        %3996 = vmatprep.subr.mxu0 0.0
        %3997 = vmatpush1.msra.mxu0 %v3973
        %3998 = vmatprep.subr.mxu0 0.0
        %3999 = vmatpush1.msra.mxu0 %v3975
        %4000 = vmatprep.subr.mxu0 0.0
        %4001 = vmatpush1.msra.mxu0 %v3977
        %4002 = vmatprep.subr.mxu0 0.0
        %4003 = vmatpush1.msra.mxu0 0.0
        %4004 = vmatprep.subr.mxu0 0.0
        %4005 = vmatpush1.msra.mxu0 0.0
        %4006 = vmatprep.subr.mxu0 0.0
        %4007 = vmatpush1.msra.mxu0 0.0
        %4008 = vmatprep.subr.mxu0 0.0
        %4009 = vmatpush1.msra.mxu0 0.0
        %4010 = vmatprep.subr.mxu0 0.0
        %4011 = vmatpush1.msra.mxu0 0.0
        %4012 = vmatprep.subr.mxu0 0.0
        %4013 = vmatpush1.msra.mxu0 0.0
        %4014 = vmatprep.subr.mxu0 0.0
        %4015 = vmatpush1.msra.mxu0 0.0
        %4016 = vmatprep.subr.mxu0 0.0
        %4017 = vmatpush1.msra.mxu0 0.0
        %4018 = vmatprep.subr.mxu0 0.0
        %4019 = vmatpush1.msra.mxu0 0.0
        %4020 = vmatprep.subr.mxu0 0.0
        %4021 = vmatpush1.msra.mxu0 0.0
        %4022 = vmatprep.subr.mxu0 0.0
        %4023 = vmatpush1.msra.mxu0 0.0
        %4024 = vmatprep.subr.mxu0 0.0
        %4025 = vmatpush1.msra.mxu0 0.0
        %4026 = vmatprep.subr.mxu0 0.0
        %4027 = vmatpush1.msra.mxu0 0.0
        %4028 = vmatprep.subr.mxu0 0.0
        %4029 = vmatpush1.msra.mxu0 0.0
        %4030 = vmatprep.subr.mxu0 0.0
        %4031 = vmatpush1.msra.mxu0 0.0
        %4032 = vmatprep.subr.mxu0 0.0
        %4033 = vmatpush1.msra.mxu0 0.0
        %4034 = vmatprep.subr.mxu0 0.0
        %4035 = vmatpush1.msra.mxu0 0.0
        %4036 = vmatprep.subr.mxu0 0.0
        %4037 = vmatpush1.msra.mxu0 0.0
        %4038 = vmatprep.subr.mxu0 0.0
        %4039 = vmatpush1.msra.mxu0 0.0
        %4040 = vmatprep.subr.mxu0 0.0
        %4041 = vmatpush1.msra.mxu0 0.0
        %4042 = vmatprep.subr.mxu0 0.0
        %4043 = vmatpush1.msra.mxu0 0.0
        %4044 = vmatprep.subr.mxu0 0.0
        %4045 = vmatpush1.msra.mxu0 0.0
        %4046 = vmatprep.subr.mxu0 0.0
        %4047 = vmatpush1.msra.mxu0 0.0
        %4048 = vmatprep.subr.mxu0 0.0
        %4049 = vmatpush1.msra.mxu0 0.0
        %4050 = vmatprep.subr.mxu0 0.0
        %4051 = vmatpush1.msra.mxu0 0.0
        %4052 = vmatprep.subr.mxu0 0.0
        %4053 = vmatpush1.msra.mxu0 0.0
        %4054 = vmatprep.subr.mxu0 0.0
        %4055 = vmatpush1.msra.mxu0 0.0
        %4056 = vmatprep.subr.mxu0 0.0
        %4057 = vmatpush1.msra.mxu0 0.0
        %4058 = vmatprep.mubr.f32.mxu0 0.0
        %4059 = vmatmul.mubr.f32.gmra.mrb[0].mxu0 %v3983
        %v4060 = vpop.f32.mrb[0].mxu0
        %v4061 = vadd.f32 0.0, %v4060
        %v4062 = vpop.f32.mrb[0].mxu0
        %4063 = vmatprep.mubr.f32.mxu0 0.0
        %4064 = vmatmul.mubr.f32.gmra.mrb[0].mxu0 %v3986
        %v4065 = vpop.f32.mrb[0].mxu0
        %v4066 = vadd.f32 0.0, %v4065
        %v4067 = vpop.f32.mrb[0].mxu0
        %4068 = vmatprep.mubr.f32.mxu0 0.0
        %4069 = vmatmul.mubr.f32.gmra.mrb[0].mxu0 %v3989
        %v4070 = vpop.f32.mrb[0].mxu0
        %v4071 = vadd.f32 0.0, %v4070
        %v4072 = vpop.f32.mrb[0].mxu0
        %4073 = vmatprep.mubr.f32.mxu0 0.0
        %4074 = vmatmul.mubr.f32.gmra.mrb[0].mxu0 %v3992
        %v4075 = vpop.f32.mrb[0].mxu0
        %v4076 = vadd.f32 0.0, %v4075
        %v4077 = vpop.f32.mrb[0].mxu0
        %4078 = vdwg.mxu0
        %4079 = vrot.lane.b32.xlu0 %v753, 48
        %v4080 = vpop.permute.xlu0 %4079
        %4081 = vrot.lane.b32.xlu0 %v758, 48
        %v4082 = vpop.permute.xlu0 %4081
        %4083 = vrot.lane.b32.xlu0 %v763, 48
        %v4084 = vpop.permute.xlu0 %4083
        %4085 = vrot.lane.b32.xlu0 %v768, 48
        %v4086 = vpop.permute.xlu0 %4085
        %v4092 = vsel %vm318, %v3748, 0
        %v4095 = vsel %vm318, %v3749, 0
        %v4098 = vsel %vm318, %v3750, 0
        %v4101 = vsel %vm318, %v3751, 0
        %4103 = vmatprep.subr.mxu0 0.0
        %4104 = vmatpush1.msra.mxu0 %v4080
        %4105 = vmatprep.subr.mxu0 0.0
        %4106 = vmatpush1.msra.mxu0 %v4082
        %4107 = vmatprep.subr.mxu0 0.0
        %4108 = vmatpush1.msra.mxu0 %v4084
        %4109 = vmatprep.subr.mxu0 0.0
        %4110 = vmatpush1.msra.mxu0 %v4086
        %4111 = vmatprep.subr.mxu0 0.0
        %4112 = vmatpush1.msra.mxu0 0.0
        %4113 = vmatprep.subr.mxu0 0.0
        %4114 = vmatpush1.msra.mxu0 0.0
        %4115 = vmatprep.subr.mxu0 0.0
        %4116 = vmatpush1.msra.mxu0 0.0
        %4117 = vmatprep.subr.mxu0 0.0
        %4118 = vmatpush1.msra.mxu0 0.0
        %4119 = vmatprep.subr.mxu0 0.0
        %4120 = vmatpush1.msra.mxu0 0.0
        %4121 = vmatprep.subr.mxu0 0.0
        %4122 = vmatpush1.msra.mxu0 0.0
        %4123 = vmatprep.subr.mxu0 0.0
        %4124 = vmatpush1.msra.mxu0 0.0
        %4125 = vmatprep.subr.mxu0 0.0
        %4126 = vmatpush1.msra.mxu0 0.0
        %4127 = vmatprep.subr.mxu0 0.0
        %4128 = vmatpush1.msra.mxu0 0.0
        %4129 = vmatprep.subr.mxu0 0.0
        %4130 = vmatpush1.msra.mxu0 0.0
        %4131 = vmatprep.subr.mxu0 0.0
        %4132 = vmatpush1.msra.mxu0 0.0
        %4133 = vmatprep.subr.mxu0 0.0
        %4134 = vmatpush1.msra.mxu0 0.0
        %4135 = vmatprep.subr.mxu0 0.0
        %4136 = vmatpush1.msra.mxu0 0.0
        %4137 = vmatprep.subr.mxu0 0.0
        %4138 = vmatpush1.msra.mxu0 0.0
        %4139 = vmatprep.subr.mxu0 0.0
        %4140 = vmatpush1.msra.mxu0 0.0
        %4141 = vmatprep.subr.mxu0 0.0
        %4142 = vmatpush1.msra.mxu0 0.0
        %4143 = vmatprep.subr.mxu0 0.0
        %4144 = vmatpush1.msra.mxu0 0.0
        %4145 = vmatprep.subr.mxu0 0.0
        %4146 = vmatpush1.msra.mxu0 0.0
        %4147 = vmatprep.subr.mxu0 0.0
        %4148 = vmatpush1.msra.mxu0 0.0
        %4149 = vmatprep.subr.mxu0 0.0
        %4150 = vmatpush1.msra.mxu0 0.0
        %4151 = vmatprep.subr.mxu0 0.0
        %4152 = vmatpush1.msra.mxu0 0.0
        %4153 = vmatprep.subr.mxu0 0.0
        %4154 = vmatpush1.msra.mxu0 0.0
        %4155 = vmatprep.subr.mxu0 0.0
        %4156 = vmatpush1.msra.mxu0 0.0
        %4157 = vmatprep.subr.mxu0 0.0
        %4158 = vmatpush1.msra.mxu0 0.0
        %4159 = vmatprep.subr.mxu0 0.0
        %4160 = vmatpush1.msra.mxu0 0.0
        %4161 = vmatprep.subr.mxu0 0.0
        %4162 = vmatpush1.msra.mxu0 0.0
        %4163 = vmatprep.subr.mxu0 0.0
        %4164 = vmatpush1.msra.mxu0 0.0
        %4165 = vmatprep.subr.mxu0 0.0
        %4166 = vmatpush1.msra.mxu0 0.0
        %4167 = vmatprep.mubr.f32.mxu0 0.0
        %4168 = vmatmul.mubr.f32.gmra.mrb[0].mxu0 %v4092
        %v4169 = vpop.f32.mrb[0].mxu0
        %v4170 = vadd.f32 0.0, %v4169
        %v4171 = vpop.f32.mrb[0].mxu0
        %4172 = vmatprep.mubr.f32.mxu0 0.0
        %4173 = vmatmul.mubr.f32.gmra.mrb[0].mxu0 %v4095
        %v4174 = vpop.f32.mrb[0].mxu0
        %v4175 = vadd.f32 0.0, %v4174
        %v4176 = vpop.f32.mrb[0].mxu0
        %4177 = vmatprep.mubr.f32.mxu0 0.0
        %4178 = vmatmul.mubr.f32.gmra.mrb[0].mxu0 %v4098
        %v4179 = vpop.f32.mrb[0].mxu0
        %v4180 = vadd.f32 0.0, %v4179
        %v4181 = vpop.f32.mrb[0].mxu0
        %4182 = vmatprep.mubr.f32.mxu0 0.0
        %4183 = vmatmul.mubr.f32.gmra.mrb[0].mxu0 %v4101
        %v4184 = vpop.f32.mrb[0].mxu0
        %v4185 = vadd.f32 0.0, %v4184
        %v4186 = vpop.f32.mrb[0].mxu0
        %4187 = vdwg.mxu0
        %4188 = vrot.lane.b32.xlu0 %v693, 104
        %v4189 = vpop.permute.xlu0 %4188
        %4190 = vrot.lane.b32.xlu0 %v698, 104
        %v4191 = vpop.permute.xlu0 %4190
        %4192 = vrot.lane.b32.xlu0 %v703, 104
        %v4193 = vpop.permute.xlu0 %4192
        %4194 = vrot.lane.b32.xlu0 %v708, 104
        %v4195 = vpop.permute.xlu0 %4194
        %4196 = vrot.lane.b32.xlu0 %v693, 72
        %v4197 = vpop.permute.xlu0 %4196
        %4198 = vrot.lane.b32.xlu0 %v698, 72
        %v4199 = vpop.permute.xlu0 %4198
        %4200 = vrot.lane.b32.xlu0 %v703, 72
        %v4201 = vpop.permute.xlu0 %4200
        %4202 = vrot.lane.b32.xlu0 %v708, 72
        %v4203 = vpop.permute.xlu0 %4202
        %v4204 = vsel %vm783, %v4189, 0
        %v4206 = vsel %vm783, %v4191, 0
        %v4208 = vsel %vm783, %v4193, 0
        %v4210 = vsel %vm783, %v4195, 0
        %v4212 = vsel %vm783, %v4197, 0
        %v4214 = vsel %vm783, %v4199, 0
        %v4216 = vsel %vm783, %v4201, 0
        %v4218 = vsel %vm783, %v4203, 0
        %4220 = vmatprep.subr.mxu0 0.0
        %4221 = vmatpush1.xpose.msra.mxu0 %v4212
        %4222 = vmatprep.subr.mxu0 0.0
        %4223 = vmatpush1.xpose.msra.mxu0 %v4214
        %4224 = vmatprep.subr.mxu0 0.0
        %4225 = vmatpush1.xpose.msra.mxu0 %v4216
        %4226 = vmatprep.subr.mxu0 0.0
        %4227 = vmatpush1.xpose.msra.mxu0 %v4218
        %4228 = vmatprep.subr.mxu0 0.0
        %4229 = vmatpush1.xpose.msra.mxu0 0.0
        %4230 = vmatprep.subr.mxu0 0.0
        %4231 = vmatpush1.xpose.msra.mxu0 0.0
        %4232 = vmatprep.subr.mxu0 0.0
        %4233 = vmatpush1.xpose.msra.mxu0 0.0
        %4234 = vmatprep.subr.mxu0 0.0
        %4235 = vmatpush1.xpose.msra.mxu0 0.0
        %4236 = vmatprep.subr.mxu0 0.0
        %4237 = vmatpush1.xpose.msra.mxu0 0.0
        %4238 = vmatprep.subr.mxu0 0.0
        %4239 = vmatpush1.xpose.msra.mxu0 0.0
        %4240 = vmatprep.subr.mxu0 0.0
        %4241 = vmatpush1.xpose.msra.mxu0 0.0
        %4242 = vmatprep.subr.mxu0 0.0
        %4243 = vmatpush1.xpose.msra.mxu0 0.0
        %4244 = vmatprep.subr.mxu0 0.0
        %4245 = vmatpush1.xpose.msra.mxu0 0.0
        %4246 = vmatprep.subr.mxu0 0.0
        %4247 = vmatpush1.xpose.msra.mxu0 0.0
        %4248 = vmatprep.subr.mxu0 0.0
        %4249 = vmatpush1.xpose.msra.mxu0 0.0
        %4250 = vmatprep.subr.mxu0 0.0
        %4251 = vmatpush1.xpose.msra.mxu0 0.0
        %4252 = vmatprep.subr.mxu0 0.0
        %4253 = vmatpush1.xpose.msra.mxu0 0.0
        %4254 = vmatprep.subr.mxu0 0.0
        %4255 = vmatpush1.xpose.msra.mxu0 0.0
        %4256 = vmatprep.subr.mxu0 0.0
        %4257 = vmatpush1.xpose.msra.mxu0 0.0
        %4258 = vmatprep.subr.mxu0 0.0
        %4259 = vmatpush1.xpose.msra.mxu0 0.0
        %4260 = vmatprep.subr.mxu0 0.0
        %4261 = vmatpush1.xpose.msra.mxu0 0.0
        %4262 = vmatprep.subr.mxu0 0.0
        %4263 = vmatpush1.xpose.msra.mxu0 0.0
        %4264 = vmatprep.subr.mxu0 0.0
        %4265 = vmatpush1.xpose.msra.mxu0 0.0
        %4266 = vmatprep.subr.mxu0 0.0
        %4267 = vmatpush1.xpose.msra.mxu0 0.0
        %4268 = vmatprep.subr.mxu0 0.0
        %4269 = vmatpush1.xpose.msra.mxu0 0.0
        %4270 = vmatprep.subr.mxu0 0.0
        %4271 = vmatpush1.xpose.msra.mxu0 0.0
        %4272 = vmatprep.subr.mxu0 0.0
        %4273 = vmatpush1.xpose.msra.mxu0 0.0
        %4274 = vmatprep.subr.mxu0 0.0
        %4275 = vmatpush1.xpose.msra.mxu0 0.0
        %4276 = vmatprep.subr.mxu0 0.0
        %4277 = vmatpush1.xpose.msra.mxu0 0.0
        %4278 = vmatprep.subr.mxu0 0.0
        %4279 = vmatpush1.xpose.msra.mxu0 0.0
        %4280 = vmatprep.subr.mxu0 0.0
        %4281 = vmatpush1.xpose.msra.mxu0 0.0
        %4282 = vmatprep.subr.mxu0 0.0
        %4283 = vmatpush1.xpose.msra.mxu0 0.0
        %4284 = vmatprep.mubr.f32.mxu0 0.0
        %4285 = vmatmul.mubr.f32.gmra.mrb[0].mxu0 %v4204
        %v4286 = vpop.f32.mrb[0].mxu0
        %v4287 = vadd.f32 0.0, %v4286
        %v4288 = vpop.f32.mrb[0].mxu0
        %4289 = vmatprep.mubr.f32.mxu0 0.0
        %4290 = vmatmul.mubr.f32.gmra.mrb[0].mxu0 %v4206
        %v4291 = vpop.f32.mrb[0].mxu0
        %v4292 = vadd.f32 0.0, %v4291
        %v4293 = vpop.f32.mrb[0].mxu0
        %4294 = vmatprep.mubr.f32.mxu0 0.0
        %4295 = vmatmul.mubr.f32.gmra.mrb[0].mxu0 %v4208
        %v4296 = vpop.f32.mrb[0].mxu0
        %v4297 = vadd.f32 0.0, %v4296
        %v4298 = vpop.f32.mrb[0].mxu0
        %4299 = vmatprep.mubr.f32.mxu0 0.0
        %4300 = vmatmul.mubr.f32.gmra.mrb[0].mxu0 %v4210
        %v4301 = vpop.f32.mrb[0].mxu0
        %v4302 = vadd.f32 0.0, %v4301
        %v4303 = vpop.f32.mrb[0].mxu0
        %4304 = vdwg.mxu0
        %4305 = vrot.lane.b32.xlu0 %v713, 104
        %v4306 = vpop.permute.xlu0 %4305
        %4307 = vrot.lane.b32.xlu0 %v718, 104
        %v4308 = vpop.permute.xlu0 %4307
        %4309 = vrot.lane.b32.xlu0 %v723, 104
        %v4310 = vpop.permute.xlu0 %4309
        %4311 = vrot.lane.b32.xlu0 %v728, 104
        %v4312 = vpop.permute.xlu0 %4311
        %4313 = vrot.lane.b32.xlu0 %v713, 72
        %v4314 = vpop.permute.xlu0 %4313
        %4315 = vrot.lane.b32.xlu0 %v718, 72
        %v4316 = vpop.permute.xlu0 %4315
        %4317 = vrot.lane.b32.xlu0 %v723, 72
        %v4318 = vpop.permute.xlu0 %4317
        %4319 = vrot.lane.b32.xlu0 %v728, 72
        %v4320 = vpop.permute.xlu0 %4319
        %v4321 = vsel %vm783, %v4306, 0
        %v4323 = vsel %vm783, %v4308, 0
        %v4325 = vsel %vm783, %v4310, 0
        %v4327 = vsel %vm783, %v4312, 0
        %v4329 = vsel %vm783, %v4314, 0
        %v4331 = vsel %vm783, %v4316, 0
        %v4333 = vsel %vm783, %v4318, 0
        %v4335 = vsel %vm783, %v4320, 0
        %4337 = vmatprep.subr.mxu0 0.0
        %4338 = vmatpush1.xpose.msra.mxu0 %v4329
        %4339 = vmatprep.subr.mxu0 0.0
        %4340 = vmatpush1.xpose.msra.mxu0 %v4331
        %4341 = vmatprep.subr.mxu0 0.0
        %4342 = vmatpush1.xpose.msra.mxu0 %v4333
        %4343 = vmatprep.subr.mxu0 0.0
        %4344 = vmatpush1.xpose.msra.mxu0 %v4335
        %4345 = vmatprep.subr.mxu0 0.0
        %4346 = vmatpush1.xpose.msra.mxu0 0.0
        %4347 = vmatprep.subr.mxu0 0.0
        %4348 = vmatpush1.xpose.msra.mxu0 0.0
        %4349 = vmatprep.subr.mxu0 0.0
        %4350 = vmatpush1.xpose.msra.mxu0 0.0
        %4351 = vmatprep.subr.mxu0 0.0
        %4352 = vmatpush1.xpose.msra.mxu0 0.0
        %4353 = vmatprep.subr.mxu0 0.0
        %4354 = vmatpush1.xpose.msra.mxu0 0.0
        %4355 = vmatprep.subr.mxu0 0.0
        %4356 = vmatpush1.xpose.msra.mxu0 0.0
        %4357 = vmatprep.subr.mxu0 0.0
        %4358 = vmatpush1.xpose.msra.mxu0 0.0
        %4359 = vmatprep.subr.mxu0 0.0
        %4360 = vmatpush1.xpose.msra.mxu0 0.0
        %4361 = vmatprep.subr.mxu0 0.0
        %4362 = vmatpush1.xpose.msra.mxu0 0.0
        %4363 = vmatprep.subr.mxu0 0.0
        %4364 = vmatpush1.xpose.msra.mxu0 0.0
        %4365 = vmatprep.subr.mxu0 0.0
        %4366 = vmatpush1.xpose.msra.mxu0 0.0
        %4367 = vmatprep.subr.mxu0 0.0
        %4368 = vmatpush1.xpose.msra.mxu0 0.0
        %4369 = vmatprep.subr.mxu0 0.0
        %4370 = vmatpush1.xpose.msra.mxu0 0.0
        %4371 = vmatprep.subr.mxu0 0.0
        %4372 = vmatpush1.xpose.msra.mxu0 0.0
        %4373 = vmatprep.subr.mxu0 0.0
        %4374 = vmatpush1.xpose.msra.mxu0 0.0
        %4375 = vmatprep.subr.mxu0 0.0
        %4376 = vmatpush1.xpose.msra.mxu0 0.0
        %4377 = vmatprep.subr.mxu0 0.0
        %4378 = vmatpush1.xpose.msra.mxu0 0.0
        %4379 = vmatprep.subr.mxu0 0.0
        %4380 = vmatpush1.xpose.msra.mxu0 0.0
        %4381 = vmatprep.subr.mxu0 0.0
        %4382 = vmatpush1.xpose.msra.mxu0 0.0
        %4383 = vmatprep.subr.mxu0 0.0
        %4384 = vmatpush1.xpose.msra.mxu0 0.0
        %4385 = vmatprep.subr.mxu0 0.0
        %4386 = vmatpush1.xpose.msra.mxu0 0.0
        %4387 = vmatprep.subr.mxu0 0.0
        %4388 = vmatpush1.xpose.msra.mxu0 0.0
        %4389 = vmatprep.subr.mxu0 0.0
        %4390 = vmatpush1.xpose.msra.mxu0 0.0
        %4391 = vmatprep.subr.mxu0 0.0
        %4392 = vmatpush1.xpose.msra.mxu0 0.0
        %4393 = vmatprep.subr.mxu0 0.0
        %4394 = vmatpush1.xpose.msra.mxu0 0.0
        %4395 = vmatprep.subr.mxu0 0.0
        %4396 = vmatpush1.xpose.msra.mxu0 0.0
        %4397 = vmatprep.subr.mxu0 0.0
        %4398 = vmatpush1.xpose.msra.mxu0 0.0
        %4399 = vmatprep.subr.mxu0 0.0
        %4400 = vmatpush1.xpose.msra.mxu0 0.0
        %4401 = vmatprep.mubr.f32.mxu0 0.0
        %4402 = vmatmul.mubr.f32.gmra.mrb[0].mxu0 %v4321
        %v4403 = vpop.f32.mrb[0].mxu0
        %v4404 = vadd.f32 0.0, %v4403
        %v4405 = vpop.f32.mrb[0].mxu0
        %4406 = vmatprep.mubr.f32.mxu0 0.0
        %4407 = vmatmul.mubr.f32.gmra.mrb[0].mxu0 %v4323
        %v4408 = vpop.f32.mrb[0].mxu0
        %v4409 = vadd.f32 0.0, %v4408
        %v4410 = vpop.f32.mrb[0].mxu0
        %4411 = vmatprep.mubr.f32.mxu0 0.0
        %4412 = vmatmul.mubr.f32.gmra.mrb[0].mxu0 %v4325
        %v4413 = vpop.f32.mrb[0].mxu0
        %v4414 = vadd.f32 0.0, %v4413
        %v4415 = vpop.f32.mrb[0].mxu0
        %4416 = vmatprep.mubr.f32.mxu0 0.0
        %4417 = vmatmul.mubr.f32.gmra.mrb[0].mxu0 %v4327
        %v4418 = vpop.f32.mrb[0].mxu0
        %v4419 = vadd.f32 0.0, %v4418
        %v4420 = vpop.f32.mrb[0].mxu0
        %4421 = vdwg.mxu0
        %4422 = vrot.lane.b32.xlu0 %v733, 104
        %v4423 = vpop.permute.xlu0 %4422
        %4424 = vrot.lane.b32.xlu0 %v738, 104
        %v4425 = vpop.permute.xlu0 %4424
        %4426 = vrot.lane.b32.xlu0 %v743, 104
        %v4427 = vpop.permute.xlu0 %4426
        %4428 = vrot.lane.b32.xlu0 %v748, 104
        %v4429 = vpop.permute.xlu0 %4428
        %4430 = vrot.lane.b32.xlu0 %v733, 72
        %v4431 = vpop.permute.xlu0 %4430
        %4432 = vrot.lane.b32.xlu0 %v738, 72
        %v4433 = vpop.permute.xlu0 %4432
        %4434 = vrot.lane.b32.xlu0 %v743, 72
        %v4435 = vpop.permute.xlu0 %4434
        %4436 = vrot.lane.b32.xlu0 %v748, 72
        %v4437 = vpop.permute.xlu0 %4436
        %v4438 = vsel %vm783, %v4423, 0
        %v4440 = vsel %vm783, %v4425, 0
        %v4442 = vsel %vm783, %v4427, 0
        %v4444 = vsel %vm783, %v4429, 0
        %v4446 = vsel %vm783, %v4431, 0
        %v4448 = vsel %vm783, %v4433, 0
        %v4450 = vsel %vm783, %v4435, 0
        %v4452 = vsel %vm783, %v4437, 0
        %4454 = vmatprep.subr.mxu0 0.0
        %4455 = vmatpush1.xpose.msra.mxu0 %v4446
        %4456 = vmatprep.subr.mxu0 0.0
        %4457 = vmatpush1.xpose.msra.mxu0 %v4448
        %4458 = vmatprep.subr.mxu0 0.0
        %4459 = vmatpush1.xpose.msra.mxu0 %v4450
        %4460 = vmatprep.subr.mxu0 0.0
        %4461 = vmatpush1.xpose.msra.mxu0 %v4452
        %4462 = vmatprep.subr.mxu0 0.0
        %4463 = vmatpush1.xpose.msra.mxu0 0.0
        %4464 = vmatprep.subr.mxu0 0.0
        %4465 = vmatpush1.xpose.msra.mxu0 0.0
        %4466 = vmatprep.subr.mxu0 0.0
        %4467 = vmatpush1.xpose.msra.mxu0 0.0
        %4468 = vmatprep.subr.mxu0 0.0
        %4469 = vmatpush1.xpose.msra.mxu0 0.0
        %4470 = vmatprep.subr.mxu0 0.0
        %4471 = vmatpush1.xpose.msra.mxu0 0.0
        %4472 = vmatprep.subr.mxu0 0.0
        %4473 = vmatpush1.xpose.msra.mxu0 0.0
        %4474 = vmatprep.subr.mxu0 0.0
        %4475 = vmatpush1.xpose.msra.mxu0 0.0
        %4476 = vmatprep.subr.mxu0 0.0
        %4477 = vmatpush1.xpose.msra.mxu0 0.0
        %4478 = vmatprep.subr.mxu0 0.0
        %4479 = vmatpush1.xpose.msra.mxu0 0.0
        %4480 = vmatprep.subr.mxu0 0.0
        %4481 = vmatpush1.xpose.msra.mxu0 0.0
        %4482 = vmatprep.subr.mxu0 0.0
        %4483 = vmatpush1.xpose.msra.mxu0 0.0
        %4484 = vmatprep.subr.mxu0 0.0
        %4485 = vmatpush1.xpose.msra.mxu0 0.0
        %4486 = vmatprep.subr.mxu0 0.0
        %4487 = vmatpush1.xpose.msra.mxu0 0.0
        %4488 = vmatprep.subr.mxu0 0.0
        %4489 = vmatpush1.xpose.msra.mxu0 0.0
        %4490 = vmatprep.subr.mxu0 0.0
        %4491 = vmatpush1.xpose.msra.mxu0 0.0
        %4492 = vmatprep.subr.mxu0 0.0
        %4493 = vmatpush1.xpose.msra.mxu0 0.0
        %4494 = vmatprep.subr.mxu0 0.0
        %4495 = vmatpush1.xpose.msra.mxu0 0.0
        %4496 = vmatprep.subr.mxu0 0.0
        %4497 = vmatpush1.xpose.msra.mxu0 0.0
        %4498 = vmatprep.subr.mxu0 0.0
        %4499 = vmatpush1.xpose.msra.mxu0 0.0
        %4500 = vmatprep.subr.mxu0 0.0
        %4501 = vmatpush1.xpose.msra.mxu0 0.0
        %4502 = vmatprep.subr.mxu0 0.0
        %4503 = vmatpush1.xpose.msra.mxu0 0.0
        %4504 = vmatprep.subr.mxu0 0.0
        %4505 = vmatpush1.xpose.msra.mxu0 0.0
        %4506 = vmatprep.subr.mxu0 0.0
        %4507 = vmatpush1.xpose.msra.mxu0 0.0
        %4508 = vmatprep.subr.mxu0 0.0
        %4509 = vmatpush1.xpose.msra.mxu0 0.0
        %4510 = vmatprep.subr.mxu0 0.0
        %4511 = vmatpush1.xpose.msra.mxu0 0.0
        %4512 = vmatprep.subr.mxu0 0.0
        %4513 = vmatpush1.xpose.msra.mxu0 0.0
        %4514 = vmatprep.subr.mxu0 0.0
        %4515 = vmatpush1.xpose.msra.mxu0 0.0
        %4516 = vmatprep.subr.mxu0 0.0
        %4517 = vmatpush1.xpose.msra.mxu0 0.0
        %4518 = vmatprep.mubr.f32.mxu0 0.0
        %4519 = vmatmul.mubr.f32.gmra.mrb[0].mxu0 %v4438
        %v4520 = vpop.f32.mrb[0].mxu0
        %v4521 = vadd.f32 0.0, %v4520
        %v4522 = vpop.f32.mrb[0].mxu0
        %4523 = vmatprep.mubr.f32.mxu0 0.0
        %4524 = vmatmul.mubr.f32.gmra.mrb[0].mxu0 %v4440
        %v4525 = vpop.f32.mrb[0].mxu0
        %v4526 = vadd.f32 0.0, %v4525
        %v4527 = vpop.f32.mrb[0].mxu0
        %4528 = vmatprep.mubr.f32.mxu0 0.0
        %4529 = vmatmul.mubr.f32.gmra.mrb[0].mxu0 %v4442
        %v4530 = vpop.f32.mrb[0].mxu0
        %v4531 = vadd.f32 0.0, %v4530
        %v4532 = vpop.f32.mrb[0].mxu0
        %4533 = vmatprep.mubr.f32.mxu0 0.0
        %4534 = vmatmul.mubr.f32.gmra.mrb[0].mxu0 %v4444
        %v4535 = vpop.f32.mrb[0].mxu0
        %v4536 = vadd.f32 0.0, %v4535
        %v4537 = vpop.f32.mrb[0].mxu0
        %4538 = vdwg.mxu0
        %4539 = vrot.lane.b32.xlu0 %v753, 104
        %v4540 = vpop.permute.xlu0 %4539
        %4541 = vrot.lane.b32.xlu0 %v758, 104
        %v4542 = vpop.permute.xlu0 %4541
        %4543 = vrot.lane.b32.xlu0 %v763, 104
        %v4544 = vpop.permute.xlu0 %4543
        %4545 = vrot.lane.b32.xlu0 %v768, 104
        %v4546 = vpop.permute.xlu0 %4545
        %4547 = vrot.lane.b32.xlu0 %v753, 72
        %v4548 = vpop.permute.xlu0 %4547
        %4549 = vrot.lane.b32.xlu0 %v758, 72
        %v4550 = vpop.permute.xlu0 %4549
        %4551 = vrot.lane.b32.xlu0 %v763, 72
        %v4552 = vpop.permute.xlu0 %4551
        %4553 = vrot.lane.b32.xlu0 %v768, 72
        %v4554 = vpop.permute.xlu0 %4553
        %v4555 = vsel %vm783, %v4540, 0
        %v4557 = vsel %vm783, %v4542, 0
        %v4559 = vsel %vm783, %v4544, 0
        %v4561 = vsel %vm783, %v4546, 0
        %v4563 = vsel %vm783, %v4548, 0
        %v4565 = vsel %vm783, %v4550, 0
        %v4567 = vsel %vm783, %v4552, 0
        %v4569 = vsel %vm783, %v4554, 0
        %4571 = vmatprep.subr.mxu0 0.0
        %4572 = vmatpush1.xpose.msra.mxu0 %v4563
        %4573 = vmatprep.subr.mxu0 0.0
        %4574 = vmatpush1.xpose.msra.mxu0 %v4565
        %4575 = vmatprep.subr.mxu0 0.0
        %4576 = vmatpush1.xpose.msra.mxu0 %v4567
        %4577 = vmatprep.subr.mxu0 0.0
        %4578 = vmatpush1.xpose.msra.mxu0 %v4569
        %4579 = vmatprep.subr.mxu0 0.0
        %4580 = vmatpush1.xpose.msra.mxu0 0.0
        %4581 = vmatprep.subr.mxu0 0.0
        %4582 = vmatpush1.xpose.msra.mxu0 0.0
        %4583 = vmatprep.subr.mxu0 0.0
        %4584 = vmatpush1.xpose.msra.mxu0 0.0
        %4585 = vmatprep.subr.mxu0 0.0
        %4586 = vmatpush1.xpose.msra.mxu0 0.0
        %4587 = vmatprep.subr.mxu0 0.0
        %4588 = vmatpush1.xpose.msra.mxu0 0.0
        %4589 = vmatprep.subr.mxu0 0.0
        %4590 = vmatpush1.xpose.msra.mxu0 0.0
        %4591 = vmatprep.subr.mxu0 0.0
        %4592 = vmatpush1.xpose.msra.mxu0 0.0
        %4593 = vmatprep.subr.mxu0 0.0
        %4594 = vmatpush1.xpose.msra.mxu0 0.0
        %4595 = vmatprep.subr.mxu0 0.0
        %4596 = vmatpush1.xpose.msra.mxu0 0.0
        %4597 = vmatprep.subr.mxu0 0.0
        %4598 = vmatpush1.xpose.msra.mxu0 0.0
        %4599 = vmatprep.subr.mxu0 0.0
        %4600 = vmatpush1.xpose.msra.mxu0 0.0
        %4601 = vmatprep.subr.mxu0 0.0
        %4602 = vmatpush1.xpose.msra.mxu0 0.0
        %4603 = vmatprep.subr.mxu0 0.0
        %4604 = vmatpush1.xpose.msra.mxu0 0.0
        %4605 = vmatprep.subr.mxu0 0.0
        %4606 = vmatpush1.xpose.msra.mxu0 0.0
        %4607 = vmatprep.subr.mxu0 0.0
        %4608 = vmatpush1.xpose.msra.mxu0 0.0
        %4609 = vmatprep.subr.mxu0 0.0
        %4610 = vmatpush1.xpose.msra.mxu0 0.0
        %4611 = vmatprep.subr.mxu0 0.0
        %4612 = vmatpush1.xpose.msra.mxu0 0.0
        %4613 = vmatprep.subr.mxu0 0.0
        %4614 = vmatpush1.xpose.msra.mxu0 0.0
        %4615 = vmatprep.subr.mxu0 0.0
        %4616 = vmatpush1.xpose.msra.mxu0 0.0
        %4617 = vmatprep.subr.mxu0 0.0
        %4618 = vmatpush1.xpose.msra.mxu0 0.0
        %4619 = vmatprep.subr.mxu0 0.0
        %4620 = vmatpush1.xpose.msra.mxu0 0.0
        %4621 = vmatprep.subr.mxu0 0.0
        %4622 = vmatpush1.xpose.msra.mxu0 0.0
        %4623 = vmatprep.subr.mxu0 0.0
        %4624 = vmatpush1.xpose.msra.mxu0 0.0
        %4625 = vmatprep.subr.mxu0 0.0
        %4626 = vmatpush1.xpose.msra.mxu0 0.0
        %4627 = vmatprep.subr.mxu0 0.0
        %4628 = vmatpush1.xpose.msra.mxu0 0.0
        %4629 = vmatprep.subr.mxu0 0.0
        %4630 = vmatpush1.xpose.msra.mxu0 0.0
        %4631 = vmatprep.subr.mxu0 0.0
        %4632 = vmatpush1.xpose.msra.mxu0 0.0
        %4633 = vmatprep.subr.mxu0 0.0
        %4634 = vmatpush1.xpose.msra.mxu0 0.0
        %4635 = vmatprep.mubr.f32.mxu0 0.0
        %4636 = vmatmul.mubr.f32.gmra.mrb[0].mxu0 %v4555
        %v4637 = vpop.f32.mrb[0].mxu0
        %v4638 = vadd.f32 0.0, %v4637
        %v4639 = vpop.f32.mrb[0].mxu0
        %4640 = vmatprep.mubr.f32.mxu0 0.0
        %4641 = vmatmul.mubr.f32.gmra.mrb[0].mxu0 %v4557
        %v4642 = vpop.f32.mrb[0].mxu0
        %v4643 = vadd.f32 0.0, %v4642
        %v4644 = vpop.f32.mrb[0].mxu0
        %4645 = vmatprep.mubr.f32.mxu0 0.0
        %4646 = vmatmul.mubr.f32.gmra.mrb[0].mxu0 %v4559
        %v4647 = vpop.f32.mrb[0].mxu0
        %v4648 = vadd.f32 0.0, %v4647
        %v4649 = vpop.f32.mrb[0].mxu0
        %4650 = vmatprep.mubr.f32.mxu0 0.0
        %4651 = vmatmul.mubr.f32.gmra.mrb[0].mxu0 %v4561
        %v4652 = vpop.f32.mrb[0].mxu0
        %v4653 = vadd.f32 0.0, %v4652
        %v4654 = vpop.f32.mrb[0].mxu0
        %4655 = vdwg.mxu0
        %v4656 = vmul.f32 %v4287, 0.35355338
        %v4657 = vmul.f32 %v4292, 0.35355338
        %v4658 = vmul.f32 %v4297, 0.35355338
        %v4659 = vmul.f32 %v4302, 0.35355338
        %v4660 = vmul.f32 %v4404, 0.35355338
        %v4661 = vmul.f32 %v4409, 0.35355338
        %v4662 = vmul.f32 %v4414, 0.35355338
        %v4663 = vmul.f32 %v4419, 0.35355338
        %v4664 = vmul.f32 %v4521, 0.35355338
        %v4665 = vmul.f32 %v4526, 0.35355338
        %v4666 = vmul.f32 %v4531, 0.35355338
        %v4667 = vmul.f32 %v4536, 0.35355338
        %v4668 = vmul.f32 %v4638, 0.35355338
        %v4669 = vmul.f32 %v4643, 0.35355338
        %v4670 = vmul.f32 %v4648, 0.35355338
        %v4671 = vmul.f32 %v4653, 0.35355338
        %v4672 = vsel %vm318, %v4656, -inf
        %4673 = vmax.xlane.f32.xlu0 %v4672
        %v4674 = vpop.xlane.xlu0 %4673
        %v4675 = vsel %vm318, %v4657, -inf
        %4676 = vmax.xlane.f32.xlu0 %v4675
        %v4677 = vpop.xlane.xlu0 %4676
        %v4678 = vsel %vm318, %v4658, -inf
        %4679 = vmax.xlane.f32.xlu0 %v4678
        %v4680 = vpop.xlane.xlu0 %4679
        %v4681 = vsel %vm318, %v4659, -inf
        %4682 = vmax.xlane.f32.xlu0 %v4681
        %v4683 = vpop.xlane.xlu0 %4682
        %v4684 = vsel %vm318, %v4660, -inf
        %4685 = vmax.xlane.f32.xlu0 %v4684
        %v4686 = vpop.xlane.xlu0 %4685
        %v4687 = vsel %vm318, %v4661, -inf
        %4688 = vmax.xlane.f32.xlu0 %v4687
        %v4689 = vpop.xlane.xlu0 %4688
        %v4690 = vsel %vm318, %v4662, -inf
        %4691 = vmax.xlane.f32.xlu0 %v4690
        %v4692 = vpop.xlane.xlu0 %4691
        %v4693 = vsel %vm318, %v4663, -inf
        %4694 = vmax.xlane.f32.xlu0 %v4693
        %v4695 = vpop.xlane.xlu0 %4694
        %v4696 = vsel %vm318, %v4664, -inf
        %4697 = vmax.xlane.f32.xlu0 %v4696
        %v4698 = vpop.xlane.xlu0 %4697
        %v4699 = vsel %vm318, %v4665, -inf
        %4700 = vmax.xlane.f32.xlu0 %v4699
        %v4701 = vpop.xlane.xlu0 %4700
        %v4702 = vsel %vm318, %v4666, -inf
        %4703 = vmax.xlane.f32.xlu0 %v4702
        %v4704 = vpop.xlane.xlu0 %4703
        %v4705 = vsel %vm318, %v4667, -inf
        %4706 = vmax.xlane.f32.xlu0 %v4705
        %v4707 = vpop.xlane.xlu0 %4706
        %v4708 = vsel %vm318, %v4668, -inf
        %4709 = vmax.xlane.f32.xlu0 %v4708
        %v4710 = vpop.xlane.xlu0 %4709
        %v4711 = vsel %vm318, %v4669, -inf
        %4712 = vmax.xlane.f32.xlu0 %v4711
        %v4713 = vpop.xlane.xlu0 %4712
        %v4714 = vsel %vm318, %v4670, -inf
        %4715 = vmax.xlane.f32.xlu0 %v4714
        %v4716 = vpop.xlane.xlu0 %4715
        %v4717 = vsel %vm318, %v4671, -inf
        %4718 = vmax.xlane.f32.xlu0 %v4717
        %v4719 = vpop.xlane.xlu0 %4718
        %v4720 = vsub.f32 %v4656, %v4674
        %v4721 = vsub.f32 %v4657, %v4677
        %v4722 = vsub.f32 %v4658, %v4680
        %v4723 = vsub.f32 %v4659, %v4683
        %v4724 = vsub.f32 %v4660, %v4686
        %v4725 = vsub.f32 %v4661, %v4689
        %v4726 = vsub.f32 %v4662, %v4692
        %v4727 = vsub.f32 %v4663, %v4695
        %v4728 = vsub.f32 %v4664, %v4698
        %v4729 = vsub.f32 %v4665, %v4701
        %v4730 = vsub.f32 %v4666, %v4704
        %v4731 = vsub.f32 %v4667, %v4707
        %v4732 = vsub.f32 %v4668, %v4710
        %v4733 = vsub.f32 %v4669, %v4713
        %v4734 = vsub.f32 %v4670, %v4716
        %v4735 = vsub.f32 %v4671, %v4719
        %v4736 = vmul.f32 %v4720, 1.442695
        %v4737 = vpow.pop %v4736
        %v4738 = vmul.f32 %v4721, 1.442695
        %v4739 = vpow.pop %v4738
        %v4740 = vmul.f32 %v4722, 1.442695
        %v4741 = vpow.pop %v4740
        %v4742 = vmul.f32 %v4723, 1.442695
        %v4743 = vpow.pop %v4742
        %v4744 = vmul.f32 %v4724, 1.442695
        %v4745 = vpow.pop %v4744
        %v4746 = vmul.f32 %v4725, 1.442695
        %v4747 = vpow.pop %v4746
        %v4748 = vmul.f32 %v4726, 1.442695
        %v4749 = vpow.pop %v4748
        %v4750 = vmul.f32 %v4727, 1.442695
        %v4751 = vpow.pop %v4750
        %v4752 = vmul.f32 %v4728, 1.442695
        %v4753 = vpow.pop %v4752
        %v4754 = vmul.f32 %v4729, 1.442695
        %v4755 = vpow.pop %v4754
        %v4756 = vmul.f32 %v4730, 1.442695
        %v4757 = vpow.pop %v4756
        %v4758 = vmul.f32 %v4731, 1.442695
        %v4759 = vpow.pop %v4758
        %v4760 = vmul.f32 %v4732, 1.442695
        %v4761 = vpow.pop %v4760
        %v4762 = vmul.f32 %v4733, 1.442695
        %v4763 = vpow.pop %v4762
        %v4764 = vmul.f32 %v4734, 1.442695
        %v4765 = vpow.pop %v4764
        %v4766 = vmul.f32 %v4735, 1.442695
        %v4767 = vpow.pop %v4766
        %v4768 = vsel %vm318, %v4737, 0.0
        %4769 = vadd.xlane.f32.xlu0 %v4768
        %v4770 = vpop.xlane.xlu0 %4769
        %v4771 = vsel %vm318, %v4739, 0.0
        %4772 = vadd.xlane.f32.xlu0 %v4771
        %v4773 = vpop.xlane.xlu0 %4772
        %v4774 = vsel %vm318, %v4741, 0.0
        %4775 = vadd.xlane.f32.xlu0 %v4774
        %v4776 = vpop.xlane.xlu0 %4775
        %v4777 = vsel %vm318, %v4743, 0.0
        %4778 = vadd.xlane.f32.xlu0 %v4777
        %v4779 = vpop.xlane.xlu0 %4778
        %v4780 = vsel %vm318, %v4745, 0.0
        %4781 = vadd.xlane.f32.xlu0 %v4780
        %v4782 = vpop.xlane.xlu0 %4781
        %v4783 = vsel %vm318, %v4747, 0.0
        %4784 = vadd.xlane.f32.xlu0 %v4783
        %v4785 = vpop.xlane.xlu0 %4784
        %v4786 = vsel %vm318, %v4749, 0.0
        %4787 = vadd.xlane.f32.xlu0 %v4786
        %v4788 = vpop.xlane.xlu0 %4787
        %v4789 = vsel %vm318, %v4751, 0.0
        %4790 = vadd.xlane.f32.xlu0 %v4789
        %v4791 = vpop.xlane.xlu0 %4790
        %v4792 = vsel %vm318, %v4753, 0.0
        %4793 = vadd.xlane.f32.xlu0 %v4792
        %v4794 = vpop.xlane.xlu0 %4793
        %v4795 = vsel %vm318, %v4755, 0.0
        %4796 = vadd.xlane.f32.xlu0 %v4795
        %v4797 = vpop.xlane.xlu0 %4796
        %v4798 = vsel %vm318, %v4757, 0.0
        %4799 = vadd.xlane.f32.xlu0 %v4798
        %v4800 = vpop.xlane.xlu0 %4799
        %v4801 = vsel %vm318, %v4759, 0.0
        %4802 = vadd.xlane.f32.xlu0 %v4801
        %v4803 = vpop.xlane.xlu0 %4802
        %v4804 = vsel %vm318, %v4761, 0.0
        %4805 = vadd.xlane.f32.xlu0 %v4804
        %v4806 = vpop.xlane.xlu0 %4805
        %v4807 = vsel %vm318, %v4763, 0.0
        %4808 = vadd.xlane.f32.xlu0 %v4807
        %v4809 = vpop.xlane.xlu0 %4808
        %v4810 = vsel %vm318, %v4765, 0.0
        %4811 = vadd.xlane.f32.xlu0 %v4810
        %v4812 = vpop.xlane.xlu0 %4811
        %v4813 = vsel %vm318, %v4767, 0.0
        %4814 = vadd.xlane.f32.xlu0 %v4813
        %v4815 = vpop.xlane.xlu0 %4814
        %v4816 = vrcp.pop %v4770
        %v4817 = vrcp.pop %v4773
        %v4818 = vrcp.pop %v4776
        %v4819 = vrcp.pop %v4779
        %v4820 = vrcp.pop %v4782
        %v4821 = vrcp.pop %v4785
        %v4822 = vrcp.pop %v4788
        %v4823 = vrcp.pop %v4791
        %v4824 = vrcp.pop %v4794
        %v4825 = vrcp.pop %v4797
        %v4826 = vrcp.pop %v4800
        %v4827 = vrcp.pop %v4803
        %v4828 = vrcp.pop %v4806
        %v4829 = vrcp.pop %v4809
        %v4830 = vrcp.pop %v4812
        %v4831 = vrcp.pop %v4815
        %v4832 = vmul.f32 %v4770, %v4816
        %v4833 = vmul.f32 %v4773, %v4817
        %v4834 = vmul.f32 %v4776, %v4818
        %v4835 = vmul.f32 %v4779, %v4819
        %v4836 = vmul.f32 %v4782, %v4820
        %v4837 = vmul.f32 %v4785, %v4821
        %v4838 = vmul.f32 %v4788, %v4822
        %v4839 = vmul.f32 %v4791, %v4823
        %v4840 = vmul.f32 %v4794, %v4824
        %v4841 = vmul.f32 %v4797, %v4825
        %v4842 = vmul.f32 %v4800, %v4826
        %v4843 = vmul.f32 %v4803, %v4827
        %v4844 = vmul.f32 %v4806, %v4828
        %v4845 = vmul.f32 %v4809, %v4829
        %v4846 = vmul.f32 %v4812, %v4830
        %v4847 = vmul.f32 %v4815, %v4831
        %v4848 = vsub.f32 2.0, %v4832
        %v4849 = vsub.f32 2.0, %v4833
        %v4850 = vsub.f32 2.0, %v4834
        %v4851 = vsub.f32 2.0, %v4835
        %v4852 = vsub.f32 2.0, %v4836
        %v4853 = vsub.f32 2.0, %v4837
        %v4854 = vsub.f32 2.0, %v4838
        %v4855 = vsub.f32 2.0, %v4839
        %v4856 = vsub.f32 2.0, %v4840
        %v4857 = vsub.f32 2.0, %v4841
        %v4858 = vsub.f32 2.0, %v4842
        %v4859 = vsub.f32 2.0, %v4843
        %v4860 = vsub.f32 2.0, %v4844
        %v4861 = vsub.f32 2.0, %v4845
        %v4862 = vsub.f32 2.0, %v4846
        %v4863 = vsub.f32 2.0, %v4847
        %v4864 = vmul.f32 %v4816, %v4848
        %v4865 = vmul.f32 %v4817, %v4849
        %v4866 = vmul.f32 %v4818, %v4850
        %v4867 = vmul.f32 %v4819, %v4851
        %v4868 = vmul.f32 %v4820, %v4852
        %v4869 = vmul.f32 %v4821, %v4853
        %v4870 = vmul.f32 %v4822, %v4854
        %v4871 = vmul.f32 %v4823, %v4855
        %v4872 = vmul.f32 %v4824, %v4856
        %v4873 = vmul.f32 %v4825, %v4857
        %v4874 = vmul.f32 %v4826, %v4858
        %v4875 = vmul.f32 %v4827, %v4859
        %v4876 = vmul.f32 %v4828, %v4860
        %v4877 = vmul.f32 %v4829, %v4861
        %v4878 = vmul.f32 %v4830, %v4862
        %v4879 = vmul.f32 %v4831, %v4863
        %v4880 = vmul.f32 %v4737, %v4864
        %v4881 = vmul.f32 %v4739, %v4865
        %v4882 = vmul.f32 %v4741, %v4866
        %v4883 = vmul.f32 %v4743, %v4867
        %v4884 = vmul.f32 %v4745, %v4868
        %v4885 = vmul.f32 %v4747, %v4869
        %v4886 = vmul.f32 %v4749, %v4870
        %v4887 = vmul.f32 %v4751, %v4871
        %v4888 = vmul.f32 %v4753, %v4872
        %v4889 = vmul.f32 %v4755, %v4873
        %v4890 = vmul.f32 %v4757, %v4874
        %v4891 = vmul.f32 %v4759, %v4875
        %v4892 = vmul.f32 %v4761, %v4876
        %v4893 = vmul.f32 %v4763, %v4877
        %v4894 = vmul.f32 %v4765, %v4878
        %v4895 = vmul.f32 %v4767, %v4879
        %4896 = vrot.lane.b32.xlu0 %v693, 40
        %v4897 = vpop.permute.xlu0 %4896
        %4898 = vrot.lane.b32.xlu0 %v698, 40
        %v4899 = vpop.permute.xlu0 %4898
        %4900 = vrot.lane.b32.xlu0 %v703, 40
        %v4901 = vpop.permute.xlu0 %4900
        %4902 = vrot.lane.b32.xlu0 %v708, 40
        %v4903 = vpop.permute.xlu0 %4902
        %v4909 = vsel %vm318, %v4880, 0
        %v4912 = vsel %vm318, %v4881, 0
        %v4915 = vsel %vm318, %v4882, 0
        %v4918 = vsel %vm318, %v4883, 0
        %4920 = vmatprep.subr.mxu0 0.0
        %4921 = vmatpush1.msra.mxu0 %v4897
        %4922 = vmatprep.subr.mxu0 0.0
        %4923 = vmatpush1.msra.mxu0 %v4899
        %4924 = vmatprep.subr.mxu0 0.0
        %4925 = vmatpush1.msra.mxu0 %v4901
        %4926 = vmatprep.subr.mxu0 0.0
        %4927 = vmatpush1.msra.mxu0 %v4903
        %4928 = vmatprep.subr.mxu0 0.0
        %4929 = vmatpush1.msra.mxu0 0.0
        %4930 = vmatprep.subr.mxu0 0.0
        %4931 = vmatpush1.msra.mxu0 0.0
        %4932 = vmatprep.subr.mxu0 0.0
        %4933 = vmatpush1.msra.mxu0 0.0
        %4934 = vmatprep.subr.mxu0 0.0
        %4935 = vmatpush1.msra.mxu0 0.0
        %4936 = vmatprep.subr.mxu0 0.0
        %4937 = vmatpush1.msra.mxu0 0.0
        %4938 = vmatprep.subr.mxu0 0.0
        %4939 = vmatpush1.msra.mxu0 0.0
        %4940 = vmatprep.subr.mxu0 0.0
        %4941 = vmatpush1.msra.mxu0 0.0
        %4942 = vmatprep.subr.mxu0 0.0
        %4943 = vmatpush1.msra.mxu0 0.0
        %4944 = vmatprep.subr.mxu0 0.0
        %4945 = vmatpush1.msra.mxu0 0.0
        %4946 = vmatprep.subr.mxu0 0.0
        %4947 = vmatpush1.msra.mxu0 0.0
        %4948 = vmatprep.subr.mxu0 0.0
        %4949 = vmatpush1.msra.mxu0 0.0
        %4950 = vmatprep.subr.mxu0 0.0
        %4951 = vmatpush1.msra.mxu0 0.0
        %4952 = vmatprep.subr.mxu0 0.0
        %4953 = vmatpush1.msra.mxu0 0.0
        %4954 = vmatprep.subr.mxu0 0.0
        %4955 = vmatpush1.msra.mxu0 0.0
        %4956 = vmatprep.subr.mxu0 0.0
        %4957 = vmatpush1.msra.mxu0 0.0
        %4958 = vmatprep.subr.mxu0 0.0
        %4959 = vmatpush1.msra.mxu0 0.0
        %4960 = vmatprep.subr.mxu0 0.0
        %4961 = vmatpush1.msra.mxu0 0.0
        %4962 = vmatprep.subr.mxu0 0.0
        %4963 = vmatpush1.msra.mxu0 0.0
        %4964 = vmatprep.subr.mxu0 0.0
        %4965 = vmatpush1.msra.mxu0 0.0
        %4966 = vmatprep.subr.mxu0 0.0
        %4967 = vmatpush1.msra.mxu0 0.0
        %4968 = vmatprep.subr.mxu0 0.0
        %4969 = vmatpush1.msra.mxu0 0.0
        %4970 = vmatprep.subr.mxu0 0.0
        %4971 = vmatpush1.msra.mxu0 0.0
        %4972 = vmatprep.subr.mxu0 0.0
        %4973 = vmatpush1.msra.mxu0 0.0
        %4974 = vmatprep.subr.mxu0 0.0
        %4975 = vmatpush1.msra.mxu0 0.0
        %4976 = vmatprep.subr.mxu0 0.0
        %4977 = vmatpush1.msra.mxu0 0.0
        %4978 = vmatprep.subr.mxu0 0.0
        %4979 = vmatpush1.msra.mxu0 0.0
        %4980 = vmatprep.subr.mxu0 0.0
        %4981 = vmatpush1.msra.mxu0 0.0
        %4982 = vmatprep.subr.mxu0 0.0
        %4983 = vmatpush1.msra.mxu0 0.0
        %4984 = vmatprep.mubr.f32.mxu0 0.0
        %4985 = vmatmul.mubr.f32.gmra.mrb[0].mxu0 %v4909
        %v4986 = vpop.f32.mrb[0].mxu0
        %v4987 = vadd.f32 0.0, %v4986
        %v4988 = vpop.f32.mrb[0].mxu0
        %4989 = vmatprep.mubr.f32.mxu0 0.0
        %4990 = vmatmul.mubr.f32.gmra.mrb[0].mxu0 %v4912
        %v4991 = vpop.f32.mrb[0].mxu0
        %v4992 = vadd.f32 0.0, %v4991
        %v4993 = vpop.f32.mrb[0].mxu0
        %4994 = vmatprep.mubr.f32.mxu0 0.0
        %4995 = vmatmul.mubr.f32.gmra.mrb[0].mxu0 %v4915
        %v4996 = vpop.f32.mrb[0].mxu0
        %v4997 = vadd.f32 0.0, %v4996
        %v4998 = vpop.f32.mrb[0].mxu0
        %4999 = vmatprep.mubr.f32.mxu0 0.0
        %5000 = vmatmul.mubr.f32.gmra.mrb[0].mxu0 %v4918
        %v5001 = vpop.f32.mrb[0].mxu0
        %v5002 = vadd.f32 0.0, %v5001
        %v5003 = vpop.f32.mrb[0].mxu0
        %5004 = vdwg.mxu0
        %5005 = vrot.lane.b32.xlu0 %v713, 40
        %v5006 = vpop.permute.xlu0 %5005
        %5007 = vrot.lane.b32.xlu0 %v718, 40
        %v5008 = vpop.permute.xlu0 %5007
        %5009 = vrot.lane.b32.xlu0 %v723, 40
        %v5010 = vpop.permute.xlu0 %5009
        %5011 = vrot.lane.b32.xlu0 %v728, 40
        %v5012 = vpop.permute.xlu0 %5011
        %v5018 = vsel %vm318, %v4884, 0
        %v5021 = vsel %vm318, %v4885, 0
        %v5024 = vsel %vm318, %v4886, 0
        %v5027 = vsel %vm318, %v4887, 0
        %5029 = vmatprep.subr.mxu0 0.0
        %5030 = vmatpush1.msra.mxu0 %v5006
        %5031 = vmatprep.subr.mxu0 0.0
        %5032 = vmatpush1.msra.mxu0 %v5008
        %5033 = vmatprep.subr.mxu0 0.0
        %5034 = vmatpush1.msra.mxu0 %v5010
        %5035 = vmatprep.subr.mxu0 0.0
        %5036 = vmatpush1.msra.mxu0 %v5012
        %5037 = vmatprep.subr.mxu0 0.0
        %5038 = vmatpush1.msra.mxu0 0.0
        %5039 = vmatprep.subr.mxu0 0.0
        %5040 = vmatpush1.msra.mxu0 0.0
        %5041 = vmatprep.subr.mxu0 0.0
        %5042 = vmatpush1.msra.mxu0 0.0
        %5043 = vmatprep.subr.mxu0 0.0
        %5044 = vmatpush1.msra.mxu0 0.0
        %5045 = vmatprep.subr.mxu0 0.0
        %5046 = vmatpush1.msra.mxu0 0.0
        %5047 = vmatprep.subr.mxu0 0.0
        %5048 = vmatpush1.msra.mxu0 0.0
        %5049 = vmatprep.subr.mxu0 0.0
        %5050 = vmatpush1.msra.mxu0 0.0
        %5051 = vmatprep.subr.mxu0 0.0
        %5052 = vmatpush1.msra.mxu0 0.0
        %5053 = vmatprep.subr.mxu0 0.0
        %5054 = vmatpush1.msra.mxu0 0.0
        %5055 = vmatprep.subr.mxu0 0.0
        %5056 = vmatpush1.msra.mxu0 0.0
        %5057 = vmatprep.subr.mxu0 0.0
        %5058 = vmatpush1.msra.mxu0 0.0
        %5059 = vmatprep.subr.mxu0 0.0
        %5060 = vmatpush1.msra.mxu0 0.0
        %5061 = vmatprep.subr.mxu0 0.0
        %5062 = vmatpush1.msra.mxu0 0.0
        %5063 = vmatprep.subr.mxu0 0.0
        %5064 = vmatpush1.msra.mxu0 0.0
        %5065 = vmatprep.subr.mxu0 0.0
        %5066 = vmatpush1.msra.mxu0 0.0
        %5067 = vmatprep.subr.mxu0 0.0
        %5068 = vmatpush1.msra.mxu0 0.0
        %5069 = vmatprep.subr.mxu0 0.0
        %5070 = vmatpush1.msra.mxu0 0.0
        %5071 = vmatprep.subr.mxu0 0.0
        %5072 = vmatpush1.msra.mxu0 0.0
        %5073 = vmatprep.subr.mxu0 0.0
        %5074 = vmatpush1.msra.mxu0 0.0
        %5075 = vmatprep.subr.mxu0 0.0
        %5076 = vmatpush1.msra.mxu0 0.0
        %5077 = vmatprep.subr.mxu0 0.0
        %5078 = vmatpush1.msra.mxu0 0.0
        %5079 = vmatprep.subr.mxu0 0.0
        %5080 = vmatpush1.msra.mxu0 0.0
        %5081 = vmatprep.subr.mxu0 0.0
        %5082 = vmatpush1.msra.mxu0 0.0
        %5083 = vmatprep.subr.mxu0 0.0
        %5084 = vmatpush1.msra.mxu0 0.0
        %5085 = vmatprep.subr.mxu0 0.0
        %5086 = vmatpush1.msra.mxu0 0.0
        %5087 = vmatprep.subr.mxu0 0.0
        %5088 = vmatpush1.msra.mxu0 0.0
        %5089 = vmatprep.subr.mxu0 0.0
        %5090 = vmatpush1.msra.mxu0 0.0
        %5091 = vmatprep.subr.mxu0 0.0
        %5092 = vmatpush1.msra.mxu0 0.0
        %5093 = vmatprep.mubr.f32.mxu0 0.0
        %5094 = vmatmul.mubr.f32.gmra.mrb[0].mxu0 %v5018
        %v5095 = vpop.f32.mrb[0].mxu0
        %v5096 = vadd.f32 0.0, %v5095
        %v5097 = vpop.f32.mrb[0].mxu0
        %5098 = vmatprep.mubr.f32.mxu0 0.0
        %5099 = vmatmul.mubr.f32.gmra.mrb[0].mxu0 %v5021
        %v5100 = vpop.f32.mrb[0].mxu0
        %v5101 = vadd.f32 0.0, %v5100
        %v5102 = vpop.f32.mrb[0].mxu0
        %5103 = vmatprep.mubr.f32.mxu0 0.0
        %5104 = vmatmul.mubr.f32.gmra.mrb[0].mxu0 %v5024
        %v5105 = vpop.f32.mrb[0].mxu0
        %v5106 = vadd.f32 0.0, %v5105
        %v5107 = vpop.f32.mrb[0].mxu0
        %5108 = vmatprep.mubr.f32.mxu0 0.0
        %5109 = vmatmul.mubr.f32.gmra.mrb[0].mxu0 %v5027
        %v5110 = vpop.f32.mrb[0].mxu0
        %v5111 = vadd.f32 0.0, %v5110
        %v5112 = vpop.f32.mrb[0].mxu0
        %5113 = vdwg.mxu0
        %5114 = vrot.lane.b32.xlu0 %v733, 40
        %v5115 = vpop.permute.xlu0 %5114
        %5116 = vrot.lane.b32.xlu0 %v738, 40
        %v5117 = vpop.permute.xlu0 %5116
        %5118 = vrot.lane.b32.xlu0 %v743, 40
        %v5119 = vpop.permute.xlu0 %5118
        %5120 = vrot.lane.b32.xlu0 %v748, 40
        %v5121 = vpop.permute.xlu0 %5120
        %v5127 = vsel %vm318, %v4888, 0
        %v5130 = vsel %vm318, %v4889, 0
        %v5133 = vsel %vm318, %v4890, 0
        %v5136 = vsel %vm318, %v4891, 0
        %5138 = vmatprep.subr.mxu0 0.0
        %5139 = vmatpush1.msra.mxu0 %v5115
        %5140 = vmatprep.subr.mxu0 0.0
        %5141 = vmatpush1.msra.mxu0 %v5117
        %5142 = vmatprep.subr.mxu0 0.0
        %5143 = vmatpush1.msra.mxu0 %v5119
        %5144 = vmatprep.subr.mxu0 0.0
        %5145 = vmatpush1.msra.mxu0 %v5121
        %5146 = vmatprep.subr.mxu0 0.0
        %5147 = vmatpush1.msra.mxu0 0.0
        %5148 = vmatprep.subr.mxu0 0.0
        %5149 = vmatpush1.msra.mxu0 0.0
        %5150 = vmatprep.subr.mxu0 0.0
        %5151 = vmatpush1.msra.mxu0 0.0
        %5152 = vmatprep.subr.mxu0 0.0
        %5153 = vmatpush1.msra.mxu0 0.0
        %5154 = vmatprep.subr.mxu0 0.0
        %5155 = vmatpush1.msra.mxu0 0.0
        %5156 = vmatprep.subr.mxu0 0.0
        %5157 = vmatpush1.msra.mxu0 0.0
        %5158 = vmatprep.subr.mxu0 0.0
        %5159 = vmatpush1.msra.mxu0 0.0
        %5160 = vmatprep.subr.mxu0 0.0
        %5161 = vmatpush1.msra.mxu0 0.0
        %5162 = vmatprep.subr.mxu0 0.0
        %5163 = vmatpush1.msra.mxu0 0.0
        %5164 = vmatprep.subr.mxu0 0.0
        %5165 = vmatpush1.msra.mxu0 0.0
        %5166 = vmatprep.subr.mxu0 0.0
        %5167 = vmatpush1.msra.mxu0 0.0
        %5168 = vmatprep.subr.mxu0 0.0
        %5169 = vmatpush1.msra.mxu0 0.0
        %5170 = vmatprep.subr.mxu0 0.0
        %5171 = vmatpush1.msra.mxu0 0.0
        %5172 = vmatprep.subr.mxu0 0.0
        %5173 = vmatpush1.msra.mxu0 0.0
        %5174 = vmatprep.subr.mxu0 0.0
        %5175 = vmatpush1.msra.mxu0 0.0
        %5176 = vmatprep.subr.mxu0 0.0
        %5177 = vmatpush1.msra.mxu0 0.0
        %5178 = vmatprep.subr.mxu0 0.0
        %5179 = vmatpush1.msra.mxu0 0.0
        %5180 = vmatprep.subr.mxu0 0.0
        %5181 = vmatpush1.msra.mxu0 0.0
        %5182 = vmatprep.subr.mxu0 0.0
        %5183 = vmatpush1.msra.mxu0 0.0
        %5184 = vmatprep.subr.mxu0 0.0
        %5185 = vmatpush1.msra.mxu0 0.0
        %5186 = vmatprep.subr.mxu0 0.0
        %5187 = vmatpush1.msra.mxu0 0.0
        %5188 = vmatprep.subr.mxu0 0.0
        %5189 = vmatpush1.msra.mxu0 0.0
        %5190 = vmatprep.subr.mxu0 0.0
        %5191 = vmatpush1.msra.mxu0 0.0
        %5192 = vmatprep.subr.mxu0 0.0
        %5193 = vmatpush1.msra.mxu0 0.0
        %5194 = vmatprep.subr.mxu0 0.0
        %5195 = vmatpush1.msra.mxu0 0.0
        %5196 = vmatprep.subr.mxu0 0.0
        %5197 = vmatpush1.msra.mxu0 0.0
        %5198 = vmatprep.subr.mxu0 0.0
        %5199 = vmatpush1.msra.mxu0 0.0
        %5200 = vmatprep.subr.mxu0 0.0
        %5201 = vmatpush1.msra.mxu0 0.0
        %5202 = vmatprep.mubr.f32.mxu0 0.0
        %5203 = vmatmul.mubr.f32.gmra.mrb[0].mxu0 %v5127
        %v5204 = vpop.f32.mrb[0].mxu0
        %v5205 = vadd.f32 0.0, %v5204
        %v5206 = vpop.f32.mrb[0].mxu0
        %5207 = vmatprep.mubr.f32.mxu0 0.0
        %5208 = vmatmul.mubr.f32.gmra.mrb[0].mxu0 %v5130
        %v5209 = vpop.f32.mrb[0].mxu0
        %v5210 = vadd.f32 0.0, %v5209
        %v5211 = vpop.f32.mrb[0].mxu0
        %5212 = vmatprep.mubr.f32.mxu0 0.0
        %5213 = vmatmul.mubr.f32.gmra.mrb[0].mxu0 %v5133
        %v5214 = vpop.f32.mrb[0].mxu0
        %v5215 = vadd.f32 0.0, %v5214
        %v5216 = vpop.f32.mrb[0].mxu0
        %5217 = vmatprep.mubr.f32.mxu0 0.0
        %5218 = vmatmul.mubr.f32.gmra.mrb[0].mxu0 %v5136
        %v5219 = vpop.f32.mrb[0].mxu0
        %v5220 = vadd.f32 0.0, %v5219
        %v5221 = vpop.f32.mrb[0].mxu0
        %5222 = vdwg.mxu0
        %5223 = vrot.lane.b32.xlu0 %v753, 40
        %v5224 = vpop.permute.xlu0 %5223
        %5225 = vrot.lane.b32.xlu0 %v758, 40
        %v5226 = vpop.permute.xlu0 %5225
        %5227 = vrot.lane.b32.xlu0 %v763, 40
        %v5228 = vpop.permute.xlu0 %5227
        %5229 = vrot.lane.b32.xlu0 %v768, 40
        %v5230 = vpop.permute.xlu0 %5229
        %v5236 = vsel %vm318, %v4892, 0
        %v5239 = vsel %vm318, %v4893, 0
        %v5242 = vsel %vm318, %v4894, 0
        %v5245 = vsel %vm318, %v4895, 0
        %5247 = vmatprep.subr.mxu0 0.0
        %5248 = vmatpush1.msra.mxu0 %v5224
        %5249 = vmatprep.subr.mxu0 0.0
        %5250 = vmatpush1.msra.mxu0 %v5226
        %5251 = vmatprep.subr.mxu0 0.0
        %5252 = vmatpush1.msra.mxu0 %v5228
        %5253 = vmatprep.subr.mxu0 0.0
        %5254 = vmatpush1.msra.mxu0 %v5230
        %5255 = vmatprep.subr.mxu0 0.0
        %5256 = vmatpush1.msra.mxu0 0.0
        %5257 = vmatprep.subr.mxu0 0.0
        %5258 = vmatpush1.msra.mxu0 0.0
        %5259 = vmatprep.subr.mxu0 0.0
        %5260 = vmatpush1.msra.mxu0 0.0
        %5261 = vmatprep.subr.mxu0 0.0
        %5262 = vmatpush1.msra.mxu0 0.0
        %5263 = vmatprep.subr.mxu0 0.0
        %5264 = vmatpush1.msra.mxu0 0.0
        %5265 = vmatprep.subr.mxu0 0.0
        %5266 = vmatpush1.msra.mxu0 0.0
        %5267 = vmatprep.subr.mxu0 0.0
        %5268 = vmatpush1.msra.mxu0 0.0
        %5269 = vmatprep.subr.mxu0 0.0
        %5270 = vmatpush1.msra.mxu0 0.0
        %5271 = vmatprep.subr.mxu0 0.0
        %5272 = vmatpush1.msra.mxu0 0.0
        %5273 = vmatprep.subr.mxu0 0.0
        %5274 = vmatpush1.msra.mxu0 0.0
        %5275 = vmatprep.subr.mxu0 0.0
        %5276 = vmatpush1.msra.mxu0 0.0
        %5277 = vmatprep.subr.mxu0 0.0
        %5278 = vmatpush1.msra.mxu0 0.0
        %5279 = vmatprep.subr.mxu0 0.0
        %5280 = vmatpush1.msra.mxu0 0.0
        %5281 = vmatprep.subr.mxu0 0.0
        %5282 = vmatpush1.msra.mxu0 0.0
        %5283 = vmatprep.subr.mxu0 0.0
        %5284 = vmatpush1.msra.mxu0 0.0
        %5285 = vmatprep.subr.mxu0 0.0
        %5286 = vmatpush1.msra.mxu0 0.0
        %5287 = vmatprep.subr.mxu0 0.0
        %5288 = vmatpush1.msra.mxu0 0.0
        %5289 = vmatprep.subr.mxu0 0.0
        %5290 = vmatpush1.msra.mxu0 0.0
        %5291 = vmatprep.subr.mxu0 0.0
        %5292 = vmatpush1.msra.mxu0 0.0
        %5293 = vmatprep.subr.mxu0 0.0
        %5294 = vmatpush1.msra.mxu0 0.0
        %5295 = vmatprep.subr.mxu0 0.0
        %5296 = vmatpush1.msra.mxu0 0.0
        %5297 = vmatprep.subr.mxu0 0.0
        %5298 = vmatpush1.msra.mxu0 0.0
        %5299 = vmatprep.subr.mxu0 0.0
        %5300 = vmatpush1.msra.mxu0 0.0
        %5301 = vmatprep.subr.mxu0 0.0
        %5302 = vmatpush1.msra.mxu0 0.0
        %5303 = vmatprep.subr.mxu0 0.0
        %5304 = vmatpush1.msra.mxu0 0.0
        %5305 = vmatprep.subr.mxu0 0.0
        %5306 = vmatpush1.msra.mxu0 0.0
        %5307 = vmatprep.subr.mxu0 0.0
        %5308 = vmatpush1.msra.mxu0 0.0
        %5309 = vmatprep.subr.mxu0 0.0
        %5310 = vmatpush1.msra.mxu0 0.0
        %5311 = vmatprep.mubr.f32.mxu0 0.0
        %5312 = vmatmul.mubr.f32.gmra.mrb[0].mxu0 %v5236
        %v5313 = vpop.f32.mrb[0].mxu0
        %v5314 = vadd.f32 0.0, %v5313
        %v5315 = vpop.f32.mrb[0].mxu0
        %5316 = vmatprep.mubr.f32.mxu0 0.0
        %5317 = vmatmul.mubr.f32.gmra.mrb[0].mxu0 %v5239
        %v5318 = vpop.f32.mrb[0].mxu0
        %v5319 = vadd.f32 0.0, %v5318
        %v5320 = vpop.f32.mrb[0].mxu0
        %5321 = vmatprep.mubr.f32.mxu0 0.0
        %5322 = vmatmul.mubr.f32.gmra.mrb[0].mxu0 %v5242
        %v5323 = vpop.f32.mrb[0].mxu0
        %v5324 = vadd.f32 0.0, %v5323
        %v5325 = vpop.f32.mrb[0].mxu0
        %5326 = vmatprep.mubr.f32.mxu0 0.0
        %5327 = vmatmul.mubr.f32.gmra.mrb[0].mxu0 %v5245
        %v5328 = vpop.f32.mrb[0].mxu0
        %v5329 = vadd.f32 0.0, %v5328
        %v5330 = vpop.f32.mrb[0].mxu0
        %5331 = vdwg.mxu0
        %5348 = vrot.lane.b32.xlu0 %v2699, 8
        %v5349 = vpop.permute.xlu0 %5348
        %5350 = vrot.lane.b32.xlu0 %v2704, 8
        %v5351 = vpop.permute.xlu0 %5350
        %5352 = vrot.lane.b32.xlu0 %v2709, 8
        %v5353 = vpop.permute.xlu0 %5352
        %5354 = vrot.lane.b32.xlu0 %v2714, 8
        %v5355 = vpop.permute.xlu0 %5354
        %5356 = vrot.lane.b32.xlu0 %v2808, 8
        %v5357 = vpop.permute.xlu0 %5356
        %5358 = vrot.lane.b32.xlu0 %v2813, 8
        %v5359 = vpop.permute.xlu0 %5358
        %5360 = vrot.lane.b32.xlu0 %v2818, 8
        %v5361 = vpop.permute.xlu0 %5360
        %5362 = vrot.lane.b32.xlu0 %v2823, 8
        %v5363 = vpop.permute.xlu0 %5362
        %5364 = vrot.lane.b32.xlu0 %v2917, 8
        %v5365 = vpop.permute.xlu0 %5364
        %5366 = vrot.lane.b32.xlu0 %v2922, 8
        %v5367 = vpop.permute.xlu0 %5366
        %5368 = vrot.lane.b32.xlu0 %v2927, 8
        %v5369 = vpop.permute.xlu0 %5368
        %5370 = vrot.lane.b32.xlu0 %v2932, 8
        %v5371 = vpop.permute.xlu0 %5370
        %5372 = vrot.lane.b32.xlu0 %v3026, 8
        %v5373 = vpop.permute.xlu0 %5372
        %5374 = vrot.lane.b32.xlu0 %v3031, 8
        %v5375 = vpop.permute.xlu0 %5374
        %5376 = vrot.lane.b32.xlu0 %v3036, 8
        %v5377 = vpop.permute.xlu0 %5376
        %5378 = vrot.lane.b32.xlu0 %v3041, 8
        %v5379 = vpop.permute.xlu0 %5378
        %5412 = vrot.lane.b32.xlu0 %v3843, 16
        %v5413 = vpop.permute.xlu0 %5412
        %5414 = vrot.lane.b32.xlu0 %v3848, 16
        %v5415 = vpop.permute.xlu0 %5414
        %5416 = vrot.lane.b32.xlu0 %v3853, 16
        %v5417 = vpop.permute.xlu0 %5416
        %5418 = vrot.lane.b32.xlu0 %v3858, 16
        %v5419 = vpop.permute.xlu0 %5418
        %5420 = vrot.lane.b32.xlu0 %v3952, 16
        %v5421 = vpop.permute.xlu0 %5420
        %5422 = vrot.lane.b32.xlu0 %v3957, 16
        %v5423 = vpop.permute.xlu0 %5422
        %5424 = vrot.lane.b32.xlu0 %v3962, 16
        %v5425 = vpop.permute.xlu0 %5424
        %5426 = vrot.lane.b32.xlu0 %v3967, 16
        %v5427 = vpop.permute.xlu0 %5426
        %5428 = vrot.lane.b32.xlu0 %v4061, 16
        %v5429 = vpop.permute.xlu0 %5428
        %5430 = vrot.lane.b32.xlu0 %v4066, 16
        %v5431 = vpop.permute.xlu0 %5430
        %5432 = vrot.lane.b32.xlu0 %v4071, 16
        %v5433 = vpop.permute.xlu0 %5432
        %5434 = vrot.lane.b32.xlu0 %v4076, 16
        %v5435 = vpop.permute.xlu0 %5434
        %5436 = vrot.lane.b32.xlu0 %v4170, 16
        %v5437 = vpop.permute.xlu0 %5436
        %5438 = vrot.lane.b32.xlu0 %v4175, 16
        %v5439 = vpop.permute.xlu0 %5438
        %5440 = vrot.lane.b32.xlu0 %v4180, 16
        %v5441 = vpop.permute.xlu0 %5440
        %5442 = vrot.lane.b32.xlu0 %v4185, 16
        %v5443 = vpop.permute.xlu0 %5442
        %5476 = vrot.lane.b32.xlu0 %v4987, 24
        %v5477 = vpop.permute.xlu0 %5476
        %5478 = vrot.lane.b32.xlu0 %v4992, 24
        %v5479 = vpop.permute.xlu0 %5478
        %5480 = vrot.lane.b32.xlu0 %v4997, 24
        %v5481 = vpop.permute.xlu0 %5480
        %5482 = vrot.lane.b32.xlu0 %v5002, 24
        %v5483 = vpop.permute.xlu0 %5482
        %5484 = vrot.lane.b32.xlu0 %v5096, 24
        %v5485 = vpop.permute.xlu0 %5484
        %5486 = vrot.lane.b32.xlu0 %v5101, 24
        %v5487 = vpop.permute.xlu0 %5486
        %5488 = vrot.lane.b32.xlu0 %v5106, 24
        %v5489 = vpop.permute.xlu0 %5488
        %5490 = vrot.lane.b32.xlu0 %v5111, 24
        %v5491 = vpop.permute.xlu0 %5490
        %5492 = vrot.lane.b32.xlu0 %v5205, 24
        %v5493 = vpop.permute.xlu0 %5492
        %5494 = vrot.lane.b32.xlu0 %v5210, 24
        %v5495 = vpop.permute.xlu0 %5494
        %5496 = vrot.lane.b32.xlu0 %v5215, 24
        %v5497 = vpop.permute.xlu0 %5496
        %5498 = vrot.lane.b32.xlu0 %v5220, 24
        %v5499 = vpop.permute.xlu0 %5498
        %5500 = vrot.lane.b32.xlu0 %v5314, 24
        %v5501 = vpop.permute.xlu0 %5500
        %5502 = vrot.lane.b32.xlu0 %v5319, 24
        %v5503 = vpop.permute.xlu0 %5502
        %5504 = vrot.lane.b32.xlu0 %v5324, 24
        %v5505 = vpop.permute.xlu0 %5504
        %5506 = vrot.lane.b32.xlu0 %v5329, 24
        %v5507 = vpop.permute.xlu0 %5506
        %v5524 = vsel %vm783, %v1555, %v5349
        %v5525 = vsel %vm783, %v1560, %v5351
        %v5526 = vsel %vm783, %v1565, %v5353
        %v5527 = vsel %vm783, %v1570, %v5355
        %v5528 = vsel %vm783, %v1664, %v5357
        %v5529 = vsel %vm783, %v1669, %v5359
        %v5530 = vsel %vm783, %v1674, %v5361
        %v5531 = vsel %vm783, %v1679, %v5363
        %v5532 = vsel %vm783, %v1773, %v5365
        %v5533 = vsel %vm783, %v1778, %v5367
        %v5534 = vsel %vm783, %v1783, %v5369
        %v5535 = vsel %vm783, %v1788, %v5371
        %v5536 = vsel %vm783, %v1882, %v5373
        %v5537 = vsel %vm783, %v1887, %v5375
        %v5538 = vsel %vm783, %v1892, %v5377
        %v5539 = vsel %vm783, %v1897, %v5379
        %vm5540 = vcmask 130048
        %v5541 = vsel %vm5540, %v5524, %v5413
        %v5542 = vsel %vm5540, %v5525, %v5415
        %v5543 = vsel %vm5540, %v5526, %v5417
        %v5544 = vsel %vm5540, %v5527, %v5419
        %v5545 = vsel %vm5540, %v5528, %v5421
        %v5546 = vsel %vm5540, %v5529, %v5423
        %v5547 = vsel %vm5540, %v5530, %v5425
        %v5548 = vsel %vm5540, %v5531, %v5427
        %v5549 = vsel %vm5540, %v5532, %v5429
        %v5550 = vsel %vm5540, %v5533, %v5431
        %v5551 = vsel %vm5540, %v5534, %v5433
        %v5552 = vsel %vm5540, %v5535, %v5435
        %v5553 = vsel %vm5540, %v5536, %v5437
        %v5554 = vsel %vm5540, %v5537, %v5439
        %v5555 = vsel %vm5540, %v5538, %v5441
        %v5556 = vsel %vm5540, %v5539, %v5443
        %vm5557 = vcmask 195584
        %v5558 = vsel %vm5557, %v5541, %v5477
        %v5559 = vsel %vm5557, %v5542, %v5479
        %v5560 = vsel %vm5557, %v5543, %v5481
        %v5561 = vsel %vm5557, %v5544, %v5483
        %v5562 = vsel %vm5557, %v5545, %v5485
        %v5563 = vsel %vm5557, %v5546, %v5487
        %v5564 = vsel %vm5557, %v5547, %v5489
        %v5565 = vsel %vm5557, %v5548, %v5491
        %v5566 = vsel %vm5557, %v5549, %v5493
        %v5567 = vsel %vm5557, %v5550, %v5495
        %v5568 = vsel %vm5557, %v5551, %v5497
        %v5569 = vsel %vm5557, %v5552, %v5499
        %v5570 = vsel %vm5557, %v5553, %v5501
        %v5571 = vsel %vm5557, %v5554, %v5503
        %v5572 = vsel %vm5557, %v5555, %v5505
        %v5573 = vsel %vm5557, %v5556, %v5507
        %v5574 = vld [vmem:[#allocation7] sm:$0xff]
        %v5575 = vld [vmem:[#allocation7 + $0x8] sm:$0xff]
        %v5576 = vld [vmem:[#allocation7 + $0x10] sm:$0xff]
        %v5577 = vld [vmem:[#allocation7 + $0x18] sm:$0xff]
        %v5578 = vld [vmem:[%s5] sm:$0x1]
        %v5580 = vlaneseq
        %v5581 = vshrl.u32 %v5580, 7
        %v5582 = vsub.s32 0, %v5581
        %v5583 = vrot.slane %v5578, %v5582
        %v5586 = vsel %vm318, %v5558, 0
        %v5589 = vsel %vm318, %v5559, 0
        %v5592 = vsel %vm318, %v5560, 0
        %v5595 = vsel %vm318, %v5561, 0
        %v5598 = vsel %vm318, %v5562, 0
        %v5601 = vsel %vm318, %v5563, 0
        %v5604 = vsel %vm318, %v5564, 0
        %v5607 = vsel %vm318, %v5565, 0
        %v5610 = vsel %vm318, %v5566, 0
        %v5613 = vsel %vm318, %v5567, 0
        %v5616 = vsel %vm318, %v5568, 0
        %v5619 = vsel %vm318, %v5569, 0
        %v5622 = vsel %vm318, %v5570, 0
        %v5625 = vsel %vm318, %v5571, 0
        %v5628 = vsel %vm318, %v5572, 0
        %v5631 = vsel %vm318, %v5573, 0
        %5633 = vmatprep.subr.mxu0 0.0
        %5634 = vmatpush1.msra.mxu0 %v5574
        %5635 = vmatprep.subr.mxu0 0.0
        %5636 = vmatpush1.msra.mxu0 %v5575
        %5637 = vmatprep.subr.mxu0 0.0
        %5638 = vmatpush1.msra.mxu0 %v5576
        %5639 = vmatprep.subr.mxu0 0.0
        %5640 = vmatpush1.msra.mxu0 %v5577
        %5641 = vmatprep.subr.mxu0 0.0
        %5642 = vmatpush1.msra.mxu0 0.0
        %5643 = vmatprep.subr.mxu0 0.0
        %5644 = vmatpush1.msra.mxu0 0.0
        %5645 = vmatprep.subr.mxu0 0.0
        %5646 = vmatpush1.msra.mxu0 0.0
        %5647 = vmatprep.subr.mxu0 0.0
        %5648 = vmatpush1.msra.mxu0 0.0
        %5649 = vmatprep.subr.mxu0 0.0
        %5650 = vmatpush1.msra.mxu0 0.0
        %5651 = vmatprep.subr.mxu0 0.0
        %5652 = vmatpush1.msra.mxu0 0.0
        %5653 = vmatprep.subr.mxu0 0.0
        %5654 = vmatpush1.msra.mxu0 0.0
        %5655 = vmatprep.subr.mxu0 0.0
        %5656 = vmatpush1.msra.mxu0 0.0
        %5657 = vmatprep.subr.mxu0 0.0
        %5658 = vmatpush1.msra.mxu0 0.0
        %5659 = vmatprep.subr.mxu0 0.0
        %5660 = vmatpush1.msra.mxu0 0.0
        %5661 = vmatprep.subr.mxu0 0.0
        %5662 = vmatpush1.msra.mxu0 0.0
        %5663 = vmatprep.subr.mxu0 0.0
        %5664 = vmatpush1.msra.mxu0 0.0
        %5665 = vmatprep.subr.mxu0 0.0
        %5666 = vmatpush1.msra.mxu0 0.0
        %5667 = vmatprep.subr.mxu0 0.0
        %5668 = vmatpush1.msra.mxu0 0.0
        %5669 = vmatprep.subr.mxu0 0.0
        %5670 = vmatpush1.msra.mxu0 0.0
        %5671 = vmatprep.subr.mxu0 0.0
        %5672 = vmatpush1.msra.mxu0 0.0
        %5673 = vmatprep.subr.mxu0 0.0
        %5674 = vmatpush1.msra.mxu0 0.0
        %5675 = vmatprep.subr.mxu0 0.0
        %5676 = vmatpush1.msra.mxu0 0.0
        %5677 = vmatprep.subr.mxu0 0.0
        %5678 = vmatpush1.msra.mxu0 0.0
        %5679 = vmatprep.subr.mxu0 0.0
        %5680 = vmatpush1.msra.mxu0 0.0
        %5681 = vmatprep.subr.mxu0 0.0
        %5682 = vmatpush1.msra.mxu0 0.0
        %5683 = vmatprep.subr.mxu0 0.0
        %5684 = vmatpush1.msra.mxu0 0.0
        %5685 = vmatprep.subr.mxu0 0.0
        %5686 = vmatpush1.msra.mxu0 0.0
        %5687 = vmatprep.subr.mxu0 0.0
        %5688 = vmatpush1.msra.mxu0 0.0
        %5689 = vmatprep.subr.mxu0 0.0
        %5690 = vmatpush1.msra.mxu0 0.0
        %5691 = vmatprep.subr.mxu0 0.0
        %5692 = vmatpush1.msra.mxu0 0.0
        %5693 = vmatprep.subr.mxu0 0.0
        %5694 = vmatpush1.msra.mxu0 0.0
        %5695 = vmatprep.subr.mxu0 0.0
        %5696 = vmatpush1.msra.mxu0 0.0
        %5697 = vmatprep.mubr.f32.mxu0 0.0
        %5698 = vmatmul.mubr.f32.gmra.mrb[0].mxu0 %v5586
        %v5699 = vpop.f32.mrb[0].mxu0
        %v5700 = vadd.f32 %v5583, %v5699
        %v5701 = vpop.f32.mrb[0].mxu0
        %5702 = vmatprep.mubr.f32.mxu0 0.0
        %5703 = vmatmul.mubr.f32.gmra.mrb[0].mxu0 %v5589
        %v5704 = vpop.f32.mrb[0].mxu0
        %v5705 = vadd.f32 %v5583, %v5704
        %v5706 = vpop.f32.mrb[0].mxu0
        %5707 = vmatprep.mubr.f32.mxu0 0.0
        %5708 = vmatmul.mubr.f32.gmra.mrb[0].mxu0 %v5592
        %v5709 = vpop.f32.mrb[0].mxu0
        %v5710 = vadd.f32 %v5583, %v5709
        %v5711 = vpop.f32.mrb[0].mxu0
        %5712 = vmatprep.mubr.f32.mxu0 0.0
        %5713 = vmatmul.mubr.f32.gmra.mrb[0].mxu0 %v5595
        %v5714 = vpop.f32.mrb[0].mxu0
        %v5715 = vadd.f32 %v5583, %v5714
        %v5716 = vpop.f32.mrb[0].mxu0
        %5717 = vmatprep.mubr.f32.mxu0 0.0
        %5718 = vmatmul.mubr.f32.gmra.mrb[0].mxu0 %v5598
        %v5719 = vpop.f32.mrb[0].mxu0
        %v5720 = vadd.f32 %v5583, %v5719
        %v5721 = vpop.f32.mrb[0].mxu0
        %5722 = vmatprep.mubr.f32.mxu0 0.0
        %5723 = vmatmul.mubr.f32.gmra.mrb[0].mxu0 %v5601
        %v5724 = vpop.f32.mrb[0].mxu0
        %v5725 = vadd.f32 %v5583, %v5724
        %v5726 = vpop.f32.mrb[0].mxu0
        %5727 = vmatprep.mubr.f32.mxu0 0.0
        %5728 = vmatmul.mubr.f32.gmra.mrb[0].mxu0 %v5604
        %v5729 = vpop.f32.mrb[0].mxu0
        %v5730 = vadd.f32 %v5583, %v5729
        %v5731 = vpop.f32.mrb[0].mxu0
        %5732 = vmatprep.mubr.f32.mxu0 0.0
        %5733 = vmatmul.mubr.f32.gmra.mrb[0].mxu0 %v5607
        %v5734 = vpop.f32.mrb[0].mxu0
        %v5735 = vadd.f32 %v5583, %v5734
        %v5736 = vpop.f32.mrb[0].mxu0
        %5737 = vmatprep.mubr.f32.mxu0 0.0
        %5738 = vmatmul.mubr.f32.gmra.mrb[0].mxu0 %v5610
        %v5739 = vpop.f32.mrb[0].mxu0
        %v5740 = vadd.f32 %v5583, %v5739
        %v5741 = vpop.f32.mrb[0].mxu0
        %5742 = vmatprep.mubr.f32.mxu0 0.0
        %5743 = vmatmul.mubr.f32.gmra.mrb[0].mxu0 %v5613
        %v5744 = vpop.f32.mrb[0].mxu0
        %v5745 = vadd.f32 %v5583, %v5744
        %v5746 = vpop.f32.mrb[0].mxu0
        %5747 = vmatprep.mubr.f32.mxu0 0.0
        %5748 = vmatmul.mubr.f32.gmra.mrb[0].mxu0 %v5616
        %v5749 = vpop.f32.mrb[0].mxu0
        %v5750 = vadd.f32 %v5583, %v5749
        %v5751 = vpop.f32.mrb[0].mxu0
        %5752 = vmatprep.mubr.f32.mxu0 0.0
        %5753 = vmatmul.mubr.f32.gmra.mrb[0].mxu0 %v5619
        %v5754 = vpop.f32.mrb[0].mxu0
        %v5755 = vadd.f32 %v5583, %v5754
        %v5756 = vpop.f32.mrb[0].mxu0
        %5757 = vmatprep.mubr.f32.mxu0 0.0
        %5758 = vmatmul.mubr.f32.gmra.mrb[0].mxu0 %v5622
        %v5759 = vpop.f32.mrb[0].mxu0
        %v5760 = vadd.f32 %v5583, %v5759
        %v5761 = vpop.f32.mrb[0].mxu0
        %5762 = vmatprep.mubr.f32.mxu0 0.0
        %5763 = vmatmul.mubr.f32.gmra.mrb[0].mxu0 %v5625
        %v5764 = vpop.f32.mrb[0].mxu0
        %v5765 = vadd.f32 %v5583, %v5764
        %v5766 = vpop.f32.mrb[0].mxu0
        %5767 = vmatprep.mubr.f32.mxu0 0.0
        %5768 = vmatmul.mubr.f32.gmra.mrb[0].mxu0 %v5628
        %v5769 = vpop.f32.mrb[0].mxu0
        %v5770 = vadd.f32 %v5583, %v5769
        %v5771 = vpop.f32.mrb[0].mxu0
        %5772 = vmatprep.mubr.f32.mxu0 0.0
        %5773 = vmatmul.mubr.f32.gmra.mrb[0].mxu0 %v5631
        %v5774 = vpop.f32.mrb[0].mxu0
        %v5775 = vadd.f32 %v5583, %v5774
        %v5776 = vpop.f32.mrb[0].mxu0
        %5777 = vdwg.mxu0
        %5778 = vst.msk [vmem:[%s299] sm:$0xff] %vm318, %v5700
        %5779 = vst.msk [vmem:[%s299 + $0x8] sm:$0xff] %vm318, %v5705
        %5780 = vst.msk [vmem:[%s299 + $0x10] sm:$0xff] %vm318, %v5710
        %5781 = vst.msk [vmem:[%s299 + $0x18] sm:$0xff] %vm318, %v5715
        %5782 = vst.msk [vmem:[%s299 + $0x20] sm:$0xff] %vm318, %v5720
        %5783 = vst.msk [vmem:[%s299 + $0x28] sm:$0xff] %vm318, %v5725
        %5784 = vst.msk [vmem:[%s299 + $0x30] sm:$0xff] %vm318, %v5730
        %5785 = vst.msk [vmem:[%s299 + $0x38] sm:$0xff] %vm318, %v5735
        %5786 = vst.msk [vmem:[%s299 + $0x40] sm:$0xff] %vm318, %v5740
        %5787 = vst.msk [vmem:[%s299 + $0x48] sm:$0xff] %vm318, %v5745
        %5788 = vst.msk [vmem:[%s299 + $0x50] sm:$0xff] %vm318, %v5750
        %5789 = vst.msk [vmem:[%s299 + $0x58] sm:$0xff] %vm318, %v5755
        %5790 = vst.msk [vmem:[%s299 + $0x60] sm:$0xff] %vm318, %v5760
        %5791 = vst.msk [vmem:[%s299 + $0x68] sm:$0xff] %vm318, %v5765
        %5792 = vst.msk [vmem:[%s299 + $0x70] sm:$0xff] %vm318, %v5770
        %5793 = vst.msk [vmem:[%s299 + $0x78] sm:$0xff] %vm318, %v5775
        %s5794 = sand.u32 %s163, 1
        %s5795 = scalar_lea.sflag [#allocation4], %s5794
        %s5796 = sand.u32 %s163, 1
        %s5797 = smul.addr %s5796, 128
        %s5798 = scalar_lea.vmem [#allocation8], %s5797
        // Predicated region
        $region57: #{tpu_custom_call.1} parent=43 // pred_check
          %p5799 = pneg %p173
        $region58: #{tpu_custom_call.1} parent=43 // pred_check_branch
          %5801 = sbr.rel (%p5799) target = $region60
        $region59: #{tpu_custom_call.1} parent=43 // pred_region
          %s5802 = smul.u32 4, %s24
          %s5804 = ssub.s32 2048, 2048
          %5805 = vsyncadd %s5795, %s5804
          %s5806 = smul.addr %s5802, 4
          %s5807 = smul.addr %s5806, 128
          %s5808 = scalar_lea.hbm %s6, %s5807
          %s5809 = sshll.u32 %s5798, 4
          %s5810 = int_to_ptr.vmem [resolvable:$true] %s5809
          %5815 = dma.vmem_to_hbm [thread:$0]  %s5810, 2048, %s5808, %s5795, 128, 128, 8
        $region60: #{tpu_custom_call.1} parent=43 // pred_fallthru
          _
      $region44: #{tpu_custom_call.1} parent=5 // pred_fallthru
        _
      %p5816 = scmp.le.s32.totalorder 2, %s19
      // Predicated region
      $region61: #{tpu_custom_call.1} parent=5 // pred_check
        %p5817 = pneg %p5816
      $region62: #{tpu_custom_call.1} parent=5 // pred_check_branch
        %5819 = sbr.rel (%p5817) target = $region64
      $region63: #{tpu_custom_call.1} parent=5 // pred_region
        %s5820 = ssub.s32 %s19, 2
        // Predicated region
        $region65: #{tpu_custom_call.1} parent=63 // pred_check
          %p5821 = pneg %p179
        $region66: #{tpu_custom_call.1} parent=63 // pred_check_branch
          %5823 = sbr.rel (%p5821) target = $region68
        $region67: #{tpu_custom_call.1} parent=63 // pred_region
          %s5824 = sand.u32 %s164, 1
          %s5825 = scalar_lea.sflag [#allocation4], %s5824
          %s5826 = sand.u32 %s164, 1
          %s5827 = smul.addr %s5826, 128
          %s5828 = scalar_lea.vmem [#allocation8], %s5827
          %5829 = dma.done %s5825, 2048
        $region68: #{tpu_custom_call.1} parent=63 // pred_fallthru
          _
      $region64: #{tpu_custom_call.1} parent=5 // pred_fallthru
        _
    $region6: #{tpu_custom_call.1} parent=1 // loop_footer
      %s23 = sadd.s32 1, %s19
    $region7: #{tpu_custom_call.1} parent=1 // loop_footer_branch
      %18 = sbr.rel target = $region3
    $region8: #{tpu_custom_call.1} parent=1 // loop_exit
      _
    %5830 = vsyncpa [#allocation3], 1
    %s5831 = scalar_lea.sflag [#allocation3], 1
    %5832 = vsyncpa %s5831, 1
    %5833 = vsyncpa [#allocation6], 1
    %5834 = vsyncpa [#allocation4], 1
    %s5835 = scalar_lea.sflag [#allocation4], 1
    %5836 = vsyncpa %s5835, 1

</llo_original>
